<compile_context>
chip_gen: v7x
topology: tpu7x:2x2x1
jax: 0.10.0
libtpu: 0.0.40
codegen_flags: <defaults>
</compile_context>

<pallas_src>
import functools

import jax
import jax.numpy as jnp
from jax import lax
from jax.experimental import pallas as pl
from jax.experimental.pallas import tpu as pltpu

LANE = 128          # lane-dense width for fc hidden / output dims
C1_PAD = 8          # conv1 real out-channels (6) padded to 8
MXU_DTYPE = jnp.bfloat16   # bf16 MXU operands (f32 accumulation)


def _round_up(n, m):
    return ((n + m - 1) // m) * m


# ------------------------------ Pallas kernels ------------------------------

def _conv_tanh_pool_kernel(p_ref, w_ref, b_ref, o_ref):
    """Fused Conv2d -> Tanh -> AvgPool2d(2,2).

    p_ref: (4*M, Kp) bf16  im2col patches, 4 pool sub-positions stacked on rows
    w_ref: (Kp, C)   bf16  flattened conv weight (zero padded)
    b_ref: (1, C)    f32   bias
    o_ref: (M, C)    bf16  pooled activations: mean over the 4 row slabs
    """
    # One packed matmul over all 4 pool sub-positions (better MXU row util).
    y = jnp.dot(p_ref[...], w_ref[...], preferred_element_type=jnp.float32)
    a = jnp.tanh(y + b_ref[...])                 # single hoisted bias broadcast
    M = o_ref.shape[0]                           # multiple of 8 -> aligned slices
    pooled = (a[0:M] + a[M:2 * M] + a[2 * M:3 * M] + a[3 * M:4 * M]) * 0.25
    o_ref[...] = pooled.astype(o_ref.dtype)


def _conv2_fc_kernel(p_ref, w2_ref, b2_ref, wf1_ref, bf1_ref, wf2_ref, bf2_ref,
                     wf3_ref, bf3_ref, o_ref):
    """Fused Conv(6->16,5)+Tanh+AvgPool2 followed by the whole fc stack.

    p_ref : (4*S2*bp, K2p) bf16  conv2 im2col, rows = (pool-slot, spatial, batch)
    w2_ref: (K2p, 16)      bf16
    wf1_ref: (S2, 16, 128) bf16  fc1 weight split per spatial position
    wf2_ref/wf3_ref: (128, 128) bf16 ; biases f32
    o_ref : (B, 128)       f32   logits (lane-padded, sliced outside)
    """
    # conv2 + tanh + avgpool: one packed matmul + 3 VPU adds.
    y = jnp.dot(p_ref[...], w2_ref[...], preferred_element_type=jnp.float32)
    a = jnp.tanh(y + b2_ref[...])                # single hoisted bias broadcast
    M = p_ref.shape[0] // 4                      # S2 * bp, multiple of 8
    h2 = (a[0:M] + a[M:2 * M] + a[2 * M:3 * M] + a[3 * M:4 * M]) * 0.25
    h2 = h2.astype(wf1_ref.dtype)                # (S2*bp, 16) bf16, cast once

    # fc1 without any HBM / relayout flatten: rows of h2 are ordered
    # (spatial s, batch b) with bp a multiple of 8, so each spatial slice is a
    # tile-aligned (bp, 16) block contracted against its own (16, 128) weight.
    n_spatial = wf1_ref.shape[0]
    bp = M // n_spatial
    acc = jnp.zeros((bp, wf1_ref.shape[2]), jnp.float32)
    for s in range(n_spatial):                   # 25 tiny accumulated matmuls
        acc = acc + jnp.dot(h2[s * bp:(s + 1) * bp, :], wf1_ref[s],
                            preferred_element_type=jnp.float32)

    h = jnp.tanh(acc + bf1_ref[...]).astype(wf2_ref.dtype)
    h = jnp.tanh(jnp.dot(h, wf2_ref[...], preferred_element_type=jnp.float32)
                 + bf2_ref[...]).astype(wf3_ref.dtype)
    out = jnp.dot(h, wf3_ref[...], preferred_element_type=jnp.float32) + bf3_ref[...]
    o_ref[...] = out[:o_ref.shape[0], :]         # drop the batch padding rows


# ------------------------------ kernel wrappers ------------------------------

def conv_tanh_pool(patches, w, b):
    """patches (4*Mp, Kp) bf16, w (Kp, C) bf16, b (1, C) f32 -> (Mp, C) bf16."""
    R, Kp = patches.shape
    Mp = R // 4
    C = w.shape[1]
    return pl.pallas_call(
        _conv_tanh_pool_kernel,
        grid=(1,),
        out_shape=jax.ShapeDtypeStruct((Mp, C), jnp.bfloat16),
        in_specs=[
            pl.BlockSpec((R, Kp), lambda i: (0, 0)),
            pl.BlockSpec((Kp, C), lambda i: (0, 0)),
            pl.BlockSpec((1, C), lambda i: (0, 0)),
        ],
        out_specs=pl.BlockSpec((Mp, C), lambda i: (0, 0)),
        compiler_params=pltpu.CompilerParams(
            dimension_semantics=("arbitrary",)),
    )(patches, w, b)


def conv2_pool_fc(p2, w2, b2, wf1, bf1, wf2, bf2, wf3, bf3, *, batch):
    """Fused conv2+tanh+pool + Linear/Tanh/Linear/Tanh/Linear -> (batch, 128)."""
    R, K2p = p2.shape
    C2 = w2.shape[1]
    S2, Cf, Nf = wf1.shape
    return pl.pallas_call(
        _conv2_fc_kernel,
        grid=(1,),
        out_shape=jax.ShapeDtypeStruct((batch, Nf), jnp.float32),
        in_specs=[
            pl.BlockSpec((R, K2p), lambda i: (0, 0)),
            pl.BlockSpec((K2p, C2), lambda i: (0, 0)),
            pl.BlockSpec((1, C2), lambda i: (0, 0)),
            pl.BlockSpec((S2, Cf, Nf), lambda i: (0, 0, 0)),
            pl.BlockSpec((1, Nf), lambda i: (0, 0)),
            pl.BlockSpec((Nf, Nf), lambda i: (0, 0)),
            pl.BlockSpec((1, Nf), lambda i: (0, 0)),
            pl.BlockSpec((Nf, Nf), lambda i: (0, 0)),
            pl.BlockSpec((1, Nf), lambda i: (0, 0)),
        ],
        out_specs=pl.BlockSpec((batch, Nf), lambda i: (0, 0)),
        compiler_params=pltpu.CompilerParams(
            dimension_semantics=("arbitrary",)),
    )(p2, w2, b2, wf1, bf1, wf2, bf2, wf3, bf3)


# ------------------------- im2col / pool-window glue -------------------------
# Host-side XLA gather/reshape glue on the *inputs* of each kernel.  Patch
# column order is c*K*K + di*K + dj (torch Conv2d weight flatten order); the
# contraction dim is padded only up to the next multiple of 128.

def _pool_patches_bhw(x, K, k_pad):
    """x: (B,H,W,C) -> (4*Mp, k_pad) bf16; per-slot rows ordered (b, ph, pw)."""
    B, H, W, C = x.shape
    Ho, Wo = H - K + 1, W - K + 1
    Ph, Pw = Ho // 2, Wo // 2
    cols = [x[:, di:di + Ho, dj:dj + Wo, :]
            for di in range(K) for dj in range(K)]
    p = jnp.stack(cols, axis=-1).reshape(B, Ho, Wo, C * K * K)
    p = p.reshape(B, Ph, 2, Pw, 2, C * K * K).transpose(2, 4, 0, 1, 3, 5)
    p = p.reshape(4, B * Ph * Pw, C * K * K)
    M = B * Ph * Pw
    Mp = _round_up(M, 8)                                  # aligned slab slices
    p = jnp.pad(p, ((0, 0), (0, Mp - M), (0, k_pad - C * K * K)))
    return p.reshape(4 * Mp, k_pad).astype(jnp.bfloat16)


def _pool_patches_sb(x, K, k_pad, bp):
    """x: (B,H,W,C) -> (4*Ph*Pw*bp, k_pad) bf16; per-slot rows ordered
    (spatial, batch) with the batch dim zero-padded to bp (multiple of 8)."""
    B, H, W, C = x.shape
    Ho, Wo = H - K + 1, W - K + 1
    Ph, Pw = Ho // 2, Wo // 2
    cols = [x[:, di:di + Ho, dj:dj + Wo, :]
            for di in range(K) for dj in range(K)]
    p = jnp.stack(cols, axis=-1).reshape(B, Ho, Wo, C * K * K)
    p = p.reshape(B, Ph, 2, Pw, 2, C * K * K).transpose(2, 4, 1, 3, 0, 5)
    p = jnp.pad(p, ((0, 0), (0, 0), (0, 0), (0, 0),
                    (0, bp - B), (0, k_pad - C * K * K)))
    return p.reshape(4 * Ph * Pw * bp, k_pad).astype(jnp.bfloat16)


# ------------------------------ LeNet forward ------------------------------

def lenet_forward(x, kp, num_classes=10):
    """x: (B, C_in, H, W) float32 (torch NCHW convention)."""
    B, Cin, H, _ = x.shape
    x = x.astype(jnp.bfloat16).transpose(0, 2, 3, 1)          # NHWC, bf16, once

    # Conv(3->6,5) + Tanh + AvgPool2  (pallas_call #1)
    p1 = _pool_patches_bhw(x, 5, kp["conv1_w"].shape[0])      # (4*392, 128)
    h1 = conv_tanh_pool(p1, kp["conv1_w"], kp["conv1_b"])     # (392, 8) bf16

    # Trim to the 6 real channels before building conv2's patches (K = 150->256).
    H1 = (H - 4) // 2                                         # 14
    h1 = h1[:B * H1 * H1, :6].reshape(B, H1, H1, 6)

    # Conv(6->16,5) + Tanh + AvgPool2 + full fc stack  (pallas_call #2)
    BP = _round_up(B, 8)                                      # tile-aligned batch
    p2 = _pool_patches_sb(h1, 5, kp["conv2_w"].shape[0], BP)  # (4*25*BP, 256)
    logits = conv2_pool_fc(p2, kp["conv2_w"], kp["conv2_b"],
                           kp["fc1_w"], kp["fc1_b"],
                           kp["fc2_w"], kp["fc2_b"],
                           kp["fc3_w"], kp["fc3_b"], batch=B)  # (B, 128) f32
    return logits[:, :num_classes]                            # drop lane padding


# ------------------------------ parameters ------------------------------

def init_params(key, img_size=32, num_classes=10, in_channels=3):
    """Random parameters in the original torch layouts."""
    fc_inp = int((img_size - 12) / 4) ** 2 * 16
    ks = jax.random.split(key, 10)

    def winit(k, shape, fan_in):
        return jax.random.normal(k, shape, jnp.float32) / jnp.sqrt(float(fan_in))

    return {
        "conv1_w": winit(ks[0], (6, in_channels, 5, 5), in_channels * 25),
        "conv1_b": winit(ks[1], (6,), in_channels * 25),
        "conv2_w": winit(ks[2], (16, 6, 5, 5), 6 * 25),
        "conv2_b": winit(ks[3], (16,), 6 * 25),
        "fc1_w": winit(ks[4], (120, fc_inp), fc_inp),
        "fc1_b": winit(ks[5], (120,), fc_inp),
        "fc2_w": winit(ks[6], (84, 120), 120),
        "fc2_b": winit(ks[7], (84,), 120),
        "fc3_w": winit(ks[8], (num_classes, 84), 84),
        "fc3_b": winit(ks[9], (num_classes,), 84),
    }


def prepare_params(params, img_size=32, num_classes=10, in_channels=3):
    """One-time repack (outside the jitted forward) of torch-layout params into
    bf16, K-trimmed, pre-transposed kernel operands.  All padding is zeros, so
    padded channels/features stay exactly zero through bias+tanh and are
    sliced off only at the final logits."""
    S = (((img_size - 4) // 2) - 4) // 2                      # 5
    bf16, f32 = jnp.bfloat16, jnp.float32

    # conv1: (6, Cin, 5, 5) -> (Cin*25 padded to 128, 6 padded to 8)
    k1 = in_channels * 25
    K1P = _round_up(k1, LANE)
    w1 = params["conv1_w"].reshape(6, k1).T                   # (75, 6)
    w1 = jnp.pad(w1, ((0, K1P - k1), (0, C1_PAD - 6))).astype(bf16)
    b1 = jnp.pad(params["conv1_b"], (0, C1_PAD - 6)).reshape(1, C1_PAD).astype(f32)

    # conv2: (16, 6, 5, 5) -> (150 padded to 256, 16); no output-channel padding.
    k2 = 6 * 25
    K2P = _round_up(k2, LANE)
    w2 = params["conv2_w"].reshape(16, k2).T                  # (150, 16)
    w2 = jnp.pad(w2, ((0, K2P - k2), (0, 0))).astype(bf16)
    b2 = params["conv2_b"].reshape(1, 16).astype(f32)

    # fc1: (120, 400) split per conv2-output spatial position s = ph*5+pw
    # (torch flatten order is c*25 + s), each slice (16, 120) padded to (16,128).
    f1 = params["fc1_w"].reshape(120, 16, S * S)              # (120, 16, 25)
    f1 = f1.transpose(2, 1, 0)                                # (25, 16, 120)
    wf1 = jnp.pad(f1, ((0, 0), (0, 0), (0, LANE - 120))).astype(bf16)
    bf1 = jnp.pad(params["fc1_b"], (0, LANE - 120)).reshape(1, LANE).astype(f32)

    wf2 = jnp.pad(params["fc2_w"].T,
                  ((0, LANE - 120), (0, LANE - 84))).astype(bf16)
    bf2 = jnp.pad(params["fc2_b"], (0, LANE - 84)).reshape(1, LANE).astype(f32)
    wf3 = jnp.pad(params["fc3_w"].T,
                  ((0, LANE - 84), (0, LANE - num_classes))).astype(bf16)
    bf3 = jnp.pad(params["fc3_b"],
                  (0, LANE - num_classes)).reshape(1, LANE).astype(f32)

    return {
        "conv1_w": w1, "conv1_b": b1,
        "conv2_w": w2, "conv2_b": b2,
        "fc1_w": wf1, "fc1_b": bf1,
        "fc2_w": wf2, "fc2_b": bf2,
        "fc3_w": wf3, "fc3_b": bf3,
    }


# ------------------------- reference (pure XLA, f32) -------------------------

def lenet_reference(x, params):
    """Straightforward XLA implementation of the torch module (for checking)."""
    hp = lax.Precision.HIGHEST
    dn = ("NCHW", "OIHW", "NCHW")

    def block(h, w, b):
        h = lax.conv_general_dilated(h, w, (1, 1), "VALID",
                                     dimension_numbers=dn, precision=hp)
        h = jnp.tanh(h + b[None, :, None, None])
        return lax.reduce_window(h, 0.0, lax.add, (1, 1, 2, 2), (1, 1, 2, 2),
                                 "VALID") * 0.25

    h = block(x, params["conv1_w"], params["conv1_b"])
    h = block(h, params["conv2_w"], params["conv2_b"])
    h = h.reshape(h.shape[0], -1)
    h = jnp.tanh(jnp.dot(h, params["fc1_w"].T, precision=hp) + params["fc1_b"])
    h = jnp.tanh(jnp.dot(h, params["fc2_w"].T, precision=hp) + params["fc2_b"])
    return jnp.dot(h, params["fc3_w"].T, precision=hp) + params["fc3_b"]


if __name__ == "__main__":
    key = jax.random.PRNGKey(0)
    k_params, k_x = jax.random.split(key)

    batch, in_channels, img_size, num_classes = 2, 3, 32, 10
    params = init_params(k_params, img_size, num_classes, in_channels)
    kparams = prepare_params(params, img_size, num_classes, in_channels)
    x = jax.random.normal(k_x, (batch, in_channels, img_size, img_size),
                          jnp.float32)

    fwd = jax.jit(functools.partial(lenet_forward, num_classes=num_classes))
    out = jax.block_until_ready(fwd(x, kparams))

    assert out.shape == (batch, num_classes), out.shape
    assert out.dtype == jnp.float32

    ref = jax.block_until_ready(jax.jit(lenet_reference)(x, params))
    err = float(jnp.max(jnp.abs(out - ref)))
    # bf16 MXU operands / bf16 activations drift the logits by ~1e-2 vs the
    # all-f32 reference (review-endorsed); 5e-2 gives comfortable margin.
    assert err < 5e-2, f"max abs error vs reference: {err}"

    print("KERNEL_OK")
</pallas_src>

<mosaic_0001>
module attributes {stable_mosaic.version = 11 : i64} {
  func.func @_conv_tanh_pool_kernel(%arg0: i32, %arg1: memref<1568x128xbf16, #tpu.memory_space<vmem>>, %arg2: memref<128x8xbf16, #tpu.memory_space<vmem>>, %arg3: memref<1x8xf32, #tpu.memory_space<vmem>>, %arg4: memref<392x8xbf16, #tpu.memory_space<vmem>>) attributes {dimension_semantics = [#tpu.dimension_semantics<arbitrary>], iteration_bounds = array<i64: 1>, scalar_prefetch = 0 : i64, scratch_operands = 0 : i64, tpu.core_type = #tpu.core_type<tc>, window_params = [{pipeline_mode = #tpu.pipeline_mode<synchronous>, transform_indices = @transform_0, window_bounds = array<i64: 1568, 128>}, {pipeline_mode = #tpu.pipeline_mode<synchronous>, transform_indices = @transform_1, window_bounds = array<i64: 128, 8>}, {pipeline_mode = #tpu.pipeline_mode<synchronous>, transform_indices = @transform_2, window_bounds = array<i64: 1, 8>}, {pipeline_mode = #tpu.pipeline_mode<synchronous>, transform_indices = @transform_3, window_bounds = array<i64: 392, 8>}]} {
    %c0 = arith.constant 0 : index
    %c0_0 = arith.constant 0 : index
    %0 = vector.load %arg1[%c0, %c0_0] : memref<1568x128xbf16, #tpu.memory_space<vmem>>, vector<1568x128xbf16>
    %c0_1 = arith.constant 0 : index
    %c0_2 = arith.constant 0 : index
    %1 = vector.load %arg2[%c0_1, %c0_2] : memref<128x8xbf16, #tpu.memory_space<vmem>>, vector<128x8xbf16>
    %cst = arith.constant dense<0.000000e+00> : vector<1568x8xf32>
    %2 = tpu.matmul %0, %1, %cst {dimension_numbers = #tpu.dot_dimension_numbers<[1], [0], [0], [1], [0, 0, 1, 1], [], []>} : vector<1568x128xbf16>, vector<128x8xbf16>, vector<1568x8xf32> -> vector<1568x8xf32>
    %c0_3 = arith.constant 0 : index
    %c0_4 = arith.constant 0 : index
    %3 = vector.load %arg3[%c0_3, %c0_4] : memref<1x8xf32, #tpu.memory_space<vmem>>, vector<1x8xf32>
    %4 = vector.broadcast %3 : vector<1x8xf32> to vector<1568x8xf32>
    %5 = arith.addf %2, %4 : vector<1568x8xf32>
    %6 = math.tanh %5 : vector<1568x8xf32>
    %7 = vector.extract_strided_slice %6 {offsets = [0, 0], sizes = [392, 8], strides = [1, 1]} : vector<1568x8xf32> to vector<392x8xf32>
    %8 = vector.extract_strided_slice %6 {offsets = [392, 0], sizes = [392, 8], strides = [1, 1]} : vector<1568x8xf32> to vector<392x8xf32>
    %9 = arith.addf %7, %8 : vector<392x8xf32>
    %10 = vector.extract_strided_slice %6 {offsets = [784, 0], sizes = [392, 8], strides = [1, 1]} : vector<1568x8xf32> to vector<392x8xf32>
    %11 = arith.addf %9, %10 : vector<392x8xf32>
    %12 = vector.extract_strided_slice %6 {offsets = [1176, 0], sizes = [392, 8], strides = [1, 1]} : vector<1568x8xf32> to vector<392x8xf32>
    %13 = arith.addf %11, %12 : vector<392x8xf32>
    %cst_5 = arith.constant 2.500000e-01 : f32
    %14 = vector.broadcast %cst_5 : f32 to vector<392x8xf32>
    %15 = arith.mulf %13, %14 : vector<392x8xf32>
    %16 = arith.truncf %15 : vector<392x8xf32> to vector<392x8xbf16>
    %c0_6 = arith.constant 0 : index
    %c0_7 = arith.constant 0 : index
    %17 = vector.load %arg4[%c0_6, %c0_7] : memref<392x8xbf16, #tpu.memory_space<vmem>>, vector<392x8xbf16>
    tpu.vector_store %arg4[%c0_6, %c0_7], %16 {strides = array<i32>} : memref<392x8xbf16, #tpu.memory_space<vmem>>, vector<392x8xbf16>,
    return
  }
  func.func @transform_0(%arg0: i32) -> (i32, i32) {
    %c0_i32 = arith.constant 0 : i32
    %c0_i32_0 = arith.constant 0 : i32
    %c0_i32_1 = arith.constant 0 : i32
    return %c0_i32, %c0_i32_0 : i32, i32
  }
  func.func @transform_1(%arg0: i32) -> (i32, i32) {
    %c0_i32 = arith.constant 0 : i32
    %c0_i32_0 = arith.constant 0 : i32
    %c0_i32_1 = arith.constant 0 : i32
    return %c0_i32, %c0_i32_0 : i32, i32
  }
  func.func @transform_2(%arg0: i32) -> (i32, i32) {
    %c0_i32 = arith.constant 0 : i32
    %c0_i32_0 = arith.constant 0 : i32
    %c0_i32_1 = arith.constant 0 : i32
    return %c0_i32, %c0_i32_0 : i32, i32
  }
  func.func @transform_3(%arg0: i32) -> (i32, i32) {
    %c0_i32 = arith.constant 0 : i32
    %c0_i32_0 = arith.constant 0 : i32
    %c0_i32_1 = arith.constant 0 : i32
    return %c0_i32, %c0_i32_0 : i32, i32
  }
}

module attributes {stable_mosaic.version = 11 : i64} {
  func.func @_conv2_fc_kernel(%arg0: i32, %arg1: memref<800x256xbf16, #tpu.memory_space<vmem>>, %arg2: memref<256x16xbf16, #tpu.memory_space<vmem>>, %arg3: memref<1x16xf32, #tpu.memory_space<vmem>>, %arg4: memref<25x16x128xbf16, #tpu.memory_space<vmem>>, %arg5: memref<1x128xf32, #tpu.memory_space<vmem>>, %arg6: memref<128x128xbf16, #tpu.memory_space<vmem>>, %arg7: memref<1x128xf32, #tpu.memory_space<vmem>>, %arg8: memref<128x128xbf16, #tpu.memory_space<vmem>>, %arg9: memref<1x128xf32, #tpu.memory_space<vmem>>, %arg10: memref<2x128xf32, #tpu.memory_space<vmem>>) attributes {dimension_semantics = [#tpu.dimension_semantics<arbitrary>], iteration_bounds = array<i64: 1>, scalar_prefetch = 0 : i64, scratch_operands = 0 : i64, tpu.core_type = #tpu.core_type<tc>, window_params = [{pipeline_mode = #tpu.pipeline_mode<synchronous>, transform_indices = @transform_0, window_bounds = array<i64: 800, 256>}, {pipeline_mode = #tpu.pipeline_mode<synchronous>, transform_indices = @transform_1, window_bounds = array<i64: 256, 16>}, {pipeline_mode = #tpu.pipeline_mode<synchronous>, transform_indices = @transform_2, window_bounds = array<i64: 1, 16>}, {pipeline_mode = #tpu.pipeline_mode<synchronous>, transform_indices = @transform_3, window_bounds = array<i64: 25, 16, 128>}, {pipeline_mode = #tpu.pipeline_mode<synchronous>, transform_indices = @transform_4, window_bounds = array<i64: 1, 128>}, {pipeline_mode = #tpu.pipeline_mode<synchronous>, transform_indices = @transform_5, window_bounds = array<i64: 128, 128>}, {pipeline_mode = #tpu.pipeline_mode<synchronous>, transform_indices = @transform_6, window_bounds = array<i64: 1, 128>}, {pipeline_mode = #tpu.pipeline_mode<synchronous>, transform_indices = @transform_7, window_bounds = array<i64: 128, 128>}, {pipeline_mode = #tpu.pipeline_mode<synchronous>, transform_indices = @transform_8, window_bounds = array<i64: 1, 128>}, {pipeline_mode = #tpu.pipeline_mode<synchronous>, transform_indices = @transform_9, window_bounds = array<i64: 2, 128>}]} {
    %c0 = arith.constant 0 : index
    %c0_0 = arith.constant 0 : index
    %0 = vector.load %arg1[%c0, %c0_0] : memref<800x256xbf16, #tpu.memory_space<vmem>>, vector<800x256xbf16>
    %c0_1 = arith.constant 0 : index
    %c0_2 = arith.constant 0 : index
    %1 = vector.load %arg2[%c0_1, %c0_2] : memref<256x16xbf16, #tpu.memory_space<vmem>>, vector<256x16xbf16>
    %cst = arith.constant dense<0.000000e+00> : vector<800x16xf32>
    %2 = tpu.matmul %0, %1, %cst {dimension_numbers = #tpu.dot_dimension_numbers<[1], [0], [0], [1], [0, 0, 1, 1], [], []>} : vector<800x256xbf16>, vector<256x16xbf16>, vector<800x16xf32> -> vector<800x16xf32>
    %c0_3 = arith.constant 0 : index
    %c0_4 = arith.constant 0 : index
    %3 = vector.load %arg3[%c0_3, %c0_4] : memref<1x16xf32, #tpu.memory_space<vmem>>, vector<1x16xf32>
    %4 = vector.broadcast %3 : vector<1x16xf32> to vector<800x16xf32>
    %5 = arith.addf %2, %4 : vector<800x16xf32>
    %6 = math.tanh %5 : vector<800x16xf32>
    %7 = vector.extract_strided_slice %6 {offsets = [0, 0], sizes = [200, 16], strides = [1, 1]} : vector<800x16xf32> to vector<200x16xf32>
    %8 = vector.extract_strided_slice %6 {offsets = [200, 0], sizes = [200, 16], strides = [1, 1]} : vector<800x16xf32> to vector<200x16xf32>
    %9 = arith.addf %7, %8 : vector<200x16xf32>
    %10 = vector.extract_strided_slice %6 {offsets = [400, 0], sizes = [200, 16], strides = [1, 1]} : vector<800x16xf32> to vector<200x16xf32>
    %11 = arith.addf %9, %10 : vector<200x16xf32>
    %12 = vector.extract_strided_slice %6 {offsets = [600, 0], sizes = [200, 16], strides = [1, 1]} : vector<800x16xf32> to vector<200x16xf32>
    %13 = arith.addf %11, %12 : vector<200x16xf32>
    %cst_5 = arith.constant 2.500000e-01 : f32
    %14 = vector.broadcast %cst_5 : f32 to vector<200x16xf32>
    %15 = arith.mulf %13, %14 : vector<200x16xf32>
    %16 = arith.truncf %15 : vector<200x16xf32> to vector<200x16xbf16>
    %cst_6 = arith.constant 0.000000e+00 : f32
    %17 = vector.broadcast %cst_6 : f32 to vector<8x128xf32>
    %18 = vector.extract_strided_slice %16 {offsets = [0, 0], sizes = [8, 16], strides = [1, 1]} : vector<200x16xbf16> to vector<8x16xbf16>
    %c0_7 = arith.constant 0 : index
    %c0_8 = arith.constant 0 : index
    %c0_9 = arith.constant 0 : index
    %19 = vector.load %arg4[%c0_7, %c0_8, %c0_9] : memref<25x16x128xbf16, #tpu.memory_space<vmem>>, vector<1x16x128xbf16>
    %20 = vector.shape_cast %19 : vector<1x16x128xbf16> to vector<16x128xbf16>
    %cst_10 = arith.constant dense<0.000000e+00> : vector<8x128xf32>
    %21 = tpu.matmul %18, %20, %cst_10 {dimension_numbers = #tpu.dot_dimension_numbers<[1], [0], [0], [1], [0, 0, 1, 1], [], []>} : vector<8x16xbf16>, vector<16x128xbf16>, vector<8x128xf32> -> vector<8x128xf32>
    %22 = arith.addf %17, %21 : vector<8x128xf32>
    %23 = vector.extract_strided_slice %16 {offsets = [8, 0], sizes = [8, 16], strides = [1, 1]} : vector<200x16xbf16> to vector<8x16xbf16>
    %c1 = arith.constant 1 : index
    %c0_11 = arith.constant 0 : index
    %c0_12 = arith.constant 0 : index
    %24 = vector.load %arg4[%c1, %c0_11, %c0_12] : memref<25x16x128xbf16, #tpu.memory_space<vmem>>, vector<1x16x128xbf16>
    %25 = vector.shape_cast %24 : vector<1x16x128xbf16> to vector<16x128xbf16>
    %cst_13 = arith.constant dense<0.000000e+00> : vector<8x128xf32>
    %26 = tpu.matmul %23, %25, %cst_13 {dimension_numbers = #tpu.dot_dimension_numbers<[1], [0], [0], [1], [0, 0, 1, 1], [], []>} : vector<8x16xbf16>, vector<16x128xbf16>, vector<8x128xf32> -> vector<8x128xf32>
    %27 = arith.addf %22, %26 : vector<8x128xf32>
    %28 = vector.extract_strided_slice %16 {offsets = [16, 0], sizes = [8, 16], strides = [1, 1]} : vector<200x16xbf16> to vector<8x16xbf16>
    %c2 = arith.constant 2 : index
    %c0_14 = arith.constant 0 : index
    %c0_15 = arith.constant 0 : index
    %29 = vector.load %arg4[%c2, %c0_14, %c0_15] : memref<25x16x128xbf16, #tpu.memory_space<vmem>>, vector<1x16x128xbf16>
    %30 = vector.shape_cast %29 : vector<1x16x128xbf16> to vector<16x128xbf16>
    %cst_16 = arith.constant dense<0.000000e+00> : vector<8x128xf32>
    %31 = tpu.matmul %28, %30, %cst_16 {dimension_numbers = #tpu.dot_dimension_numbers<[1], [0], [0], [1], [0, 0, 1, 1], [], []>} : vector<8x16xbf16>, vector<16x128xbf16>, vector<8x128xf32> -> vector<8x128xf32>
    %32 = arith.addf %27, %31 : vector<8x128xf32>
    %33 = vector.extract_strided_slice %16 {offsets = [24, 0], sizes = [8, 16], strides = [1, 1]} : vector<200x16xbf16> to vector<8x16xbf16>
    %c3 = arith.constant 3 : index
    %c0_17 = arith.constant 0 : index
    %c0_18 = arith.constant 0 : index
    %34 = vector.load %arg4[%c3, %c0_17, %c0_18] : memref<25x16x128xbf16, #tpu.memory_space<vmem>>, vector<1x16x128xbf16>
    %35 = vector.shape_cast %34 : vector<1x16x128xbf16> to vector<16x128xbf16>
    %cst_19 = arith.constant dense<0.000000e+00> : vector<8x128xf32>
    %36 = tpu.matmul %33, %35, %cst_19 {dimension_numbers = #tpu.dot_dimension_numbers<[1], [0], [0], [1], [0, 0, 1, 1], [], []>} : vector<8x16xbf16>, vector<16x128xbf16>, vector<8x128xf32> -> vector<8x128xf32>
    %37 = arith.addf %32, %36 : vector<8x128xf32>
    %38 = vector.extract_strided_slice %16 {offsets = [32, 0], sizes = [8, 16], strides = [1, 1]} : vector<200x16xbf16> to vector<8x16xbf16>
    %c4 = arith.constant 4 : index
    %c0_20 = arith.constant 0 : index
    %c0_21 = arith.constant 0 : index
    %39 = vector.load %arg4[%c4, %c0_20, %c0_21] : memref<25x16x128xbf16, #tpu.memory_space<vmem>>, vector<1x16x128xbf16>
    %40 = vector.shape_cast %39 : vector<1x16x128xbf16> to vector<16x128xbf16>
    %cst_22 = arith.constant dense<0.000000e+00> : vector<8x128xf32>
    %41 = tpu.matmul %38, %40, %cst_22 {dimension_numbers = #tpu.dot_dimension_numbers<[1], [0], [0], [1], [0, 0, 1, 1], [], []>} : vector<8x16xbf16>, vector<16x128xbf16>, vector<8x128xf32> -> vector<8x128xf32>
    %42 = arith.addf %37, %41 : vector<8x128xf32>
    %43 = vector.extract_strided_slice %16 {offsets = [40, 0], sizes = [8, 16], strides = [1, 1]} : vector<200x16xbf16> to vector<8x16xbf16>
    %c5 = arith.constant 5 : index
    %c0_23 = arith.constant 0 : index
    %c0_24 = arith.constant 0 : index
    %44 = vector.load %arg4[%c5, %c0_23, %c0_24] : memref<25x16x128xbf16, #tpu.memory_space<vmem>>, vector<1x16x128xbf16>
    %45 = vector.shape_cast %44 : vector<1x16x128xbf16> to vector<16x128xbf16>
    %cst_25 = arith.constant dense<0.000000e+00> : vector<8x128xf32>
    %46 = tpu.matmul %43, %45, %cst_25 {dimension_numbers = #tpu.dot_dimension_numbers<[1], [0], [0], [1], [0, 0, 1, 1], [], []>} : vector<8x16xbf16>, vector<16x128xbf16>, vector<8x128xf32> -> vector<8x128xf32>
    %47 = arith.addf %42, %46 : vector<8x128xf32>
    %48 = vector.extract_strided_slice %16 {offsets = [48, 0], sizes = [8, 16], strides = [1, 1]} : vector<200x16xbf16> to vector<8x16xbf16>
    %c6 = arith.constant 6 : index
    %c0_26 = arith.constant 0 : index
    %c0_27 = arith.constant 0 : index
    %49 = vector.load %arg4[%c6, %c0_26, %c0_27] : memref<25x16x128xbf16, #tpu.memory_space<vmem>>, vector<1x16x128xbf16>
    %50 = vector.shape_cast %49 : vector<1x16x128xbf16> to vector<16x128xbf16>
    %cst_28 = arith.constant dense<0.000000e+00> : vector<8x128xf32>
    %51 = tpu.matmul %48, %50, %cst_28 {dimension_numbers = #tpu.dot_dimension_numbers<[1], [0], [0], [1], [0, 0, 1, 1], [], []>} : vector<8x16xbf16>, vector<16x128xbf16>, vector<8x128xf32> -> vector<8x128xf32>
    %52 = arith.addf %47, %51 : vector<8x128xf32>
    %53 = vector.extract_strided_slice %16 {offsets = [56, 0], sizes = [8, 16], strides = [1, 1]} : vector<200x16xbf16> to vector<8x16xbf16>
    %c7 = arith.constant 7 : index
    %c0_29 = arith.constant 0 : index
    %c0_30 = arith.constant 0 : index
    %54 = vector.load %arg4[%c7, %c0_29, %c0_30] : memref<25x16x128xbf16, #tpu.memory_space<vmem>>, vector<1x16x128xbf16>
    %55 = vector.shape_cast %54 : vector<1x16x128xbf16> to vector<16x128xbf16>
    %cst_31 = arith.constant dense<0.000000e+00> : vector<8x128xf32>
    %56 = tpu.matmul %53, %55, %cst_31 {dimension_numbers = #tpu.dot_dimension_numbers<[1], [0], [0], [1], [0, 0, 1, 1], [], []>} : vector<8x16xbf16>, vector<16x128xbf16>, vector<8x128xf32> -> vector<8x128xf32>
    %57 = arith.addf %52, %56 : vector<8x128xf32>
    %58 = vector.extract_strided_slice %16 {offsets = [64, 0], sizes = [8, 16], strides = [1, 1]} : vector<200x16xbf16> to vector<8x16xbf16>
    %c8 = arith.constant 8 : index
    %c0_32 = arith.constant 0 : index
    %c0_33 = arith.constant 0 : index
    %59 = vector.load %arg4[%c8, %c0_32, %c0_33] : memref<25x16x128xbf16, #tpu.memory_space<vmem>>, vector<1x16x128xbf16>
    %60 = vector.shape_cast %59 : vector<1x16x128xbf16> to vector<16x128xbf16>
    %cst_34 = arith.constant dense<0.000000e+00> : vector<8x128xf32>
    %61 = tpu.matmul %58, %60, %cst_34 {dimension_numbers = #tpu.dot_dimension_numbers<[1], [0], [0], [1], [0, 0, 1, 1], [], []>} : vector<8x16xbf16>, vector<16x128xbf16>, vector<8x128xf32> -> vector<8x128xf32>
    %62 = arith.addf %57, %61 : vector<8x128xf32>
    %63 = vector.extract_strided_slice %16 {offsets = [72, 0], sizes = [8, 16], strides = [1, 1]} : vector<200x16xbf16> to vector<8x16xbf16>
    %c9 = arith.constant 9 : index
    %c0_35 = arith.constant 0 : index
    %c0_36 = arith.constant 0 : index
    %64 = vector.load %arg4[%c9, %c0_35, %c0_36] : memref<25x16x128xbf16, #tpu.memory_space<vmem>>, vector<1x16x128xbf16>
    %65 = vector.shape_cast %64 : vector<1x16x128xbf16> to vector<16x128xbf16>
    %cst_37 = arith.constant dense<0.000000e+00> : vector<8x128xf32>
    %66 = tpu.matmul %63, %65, %cst_37 {dimension_numbers = #tpu.dot_dimension_numbers<[1], [0], [0], [1], [0, 0, 1, 1], [], []>} : vector<8x16xbf16>, vector<16x128xbf16>, vector<8x128xf32> -> vector<8x128xf32>
    %67 = arith.addf %62, %66 : vector<8x128xf32>
    %68 = vector.extract_strided_slice %16 {offsets = [80, 0], sizes = [8, 16], strides = [1, 1]} : vector<200x16xbf16> to vector<8x16xbf16>
    %c10 = arith.constant 10 : index
    %c0_38 = arith.constant 0 : index
    %c0_39 = arith.constant 0 : index
    %69 = vector.load %arg4[%c10, %c0_38, %c0_39] : memref<25x16x128xbf16, #tpu.memory_space<vmem>>, vector<1x16x128xbf16>
    %70 = vector.shape_cast %69 : vector<1x16x128xbf16> to vector<16x128xbf16>
    %cst_40 = arith.constant dense<0.000000e+00> : vector<8x128xf32>
    %71 = tpu.matmul %68, %70, %cst_40 {dimension_numbers = #tpu.dot_dimension_numbers<[1], [0], [0], [1], [0, 0, 1, 1], [], []>} : vector<8x16xbf16>, vector<16x128xbf16>, vector<8x128xf32> -> vector<8x128xf32>
    %72 = arith.addf %67, %71 : vector<8x128xf32>
    %73 = vector.extract_strided_slice %16 {offsets = [88, 0], sizes = [8, 16], strides = [1, 1]} : vector<200x16xbf16> to vector<8x16xbf16>
    %c11 = arith.constant 11 : index
    %c0_41 = arith.constant 0 : index
    %c0_42 = arith.constant 0 : index
    %74 = vector.load %arg4[%c11, %c0_41, %c0_42] : memref<25x16x128xbf16, #tpu.memory_space<vmem>>, vector<1x16x128xbf16>
    %75 = vector.shape_cast %74 : vector<1x16x128xbf16> to vector<16x128xbf16>
    %cst_43 = arith.constant dense<0.000000e+00> : vector<8x128xf32>
    %76 = tpu.matmul %73, %75, %cst_43 {dimension_numbers = #tpu.dot_dimension_numbers<[1], [0], [0], [1], [0, 0, 1, 1], [], []>} : vector<8x16xbf16>, vector<16x128xbf16>, vector<8x128xf32> -> vector<8x128xf32>
    %77 = arith.addf %72, %76 : vector<8x128xf32>
    %78 = vector.extract_strided_slice %16 {offsets = [96, 0], sizes = [8, 16], strides = [1, 1]} : vector<200x16xbf16> to vector<8x16xbf16>
    %c12 = arith.constant 12 : index
    %c0_44 = arith.constant 0 : index
    %c0_45 = arith.constant 0 : index
    %79 = vector.load %arg4[%c12, %c0_44, %c0_45] : memref<25x16x128xbf16, #tpu.memory_space<vmem>>, vector<1x16x128xbf16>
    %80 = vector.shape_cast %79 : vector<1x16x128xbf16> to vector<16x128xbf16>
    %cst_46 = arith.constant dense<0.000000e+00> : vector<8x128xf32>
    %81 = tpu.matmul %78, %80, %cst_46 {dimension_numbers = #tpu.dot_dimension_numbers<[1], [0], [0], [1], [0, 0, 1, 1], [], []>} : vector<8x16xbf16>, vector<16x128xbf16>, vector<8x128xf32> -> vector<8x128xf32>
    %82 = arith.addf %77, %81 : vector<8x128xf32>
    %83 = vector.extract_strided_slice %16 {offsets = [104, 0], sizes = [8, 16], strides = [1, 1]} : vector<200x16xbf16> to vector<8x16xbf16>
    %c13 = arith.constant 13 : index
    %c0_47 = arith.constant 0 : index
    %c0_48 = arith.constant 0 : index
    %84 = vector.load %arg4[%c13, %c0_47, %c0_48] : memref<25x16x128xbf16, #tpu.memory_space<vmem>>, vector<1x16x128xbf16>
    %85 = vector.shape_cast %84 : vector<1x16x128xbf16> to vector<16x128xbf16>
    %cst_49 = arith.constant dense<0.000000e+00> : vector<8x128xf32>
    %86 = tpu.matmul %83, %85, %cst_49 {dimension_numbers = #tpu.dot_dimension_numbers<[1], [0], [0], [1], [0, 0, 1, 1], [], []>} : vector<8x16xbf16>, vector<16x128xbf16>, vector<8x128xf32> -> vector<8x128xf32>
    %87 = arith.addf %82, %86 : vector<8x128xf32>
    %88 = vector.extract_strided_slice %16 {offsets = [112, 0], sizes = [8, 16], strides = [1, 1]} : vector<200x16xbf16> to vector<8x16xbf16>
    %c14 = arith.constant 14 : index
    %c0_50 = arith.constant 0 : index
    %c0_51 = arith.constant 0 : index
    %89 = vector.load %arg4[%c14, %c0_50, %c0_51] : memref<25x16x128xbf16, #tpu.memory_space<vmem>>, vector<1x16x128xbf16>
    %90 = vector.shape_cast %89 : vector<1x16x128xbf16> to vector<16x128xbf16>
    %cst_52 = arith.constant dense<0.000000e+00> : vector<8x128xf32>
    %91 = tpu.matmul %88, %90, %cst_52 {dimension_numbers = #tpu.dot_dimension_numbers<[1], [0], [0], [1], [0, 0, 1, 1], [], []>} : vector<8x16xbf16>, vector<16x128xbf16>, vector<8x128xf32> -> vector<8x128xf32>
    %92 = arith.addf %87, %91 : vector<8x128xf32>
    %93 = vector.extract_strided_slice %16 {offsets = [120, 0], sizes = [8, 16], strides = [1, 1]} : vector<200x16xbf16> to vector<8x16xbf16>
    %c15 = arith.constant 15 : index
    %c0_53 = arith.constant 0 : index
    %c0_54 = arith.constant 0 : index
    %94 = vector.load %arg4[%c15, %c0_53, %c0_54] : memref<25x16x128xbf16, #tpu.memory_space<vmem>>, vector<1x16x128xbf16>
    %95 = vector.shape_cast %94 : vector<1x16x128xbf16> to vector<16x128xbf16>
    %cst_55 = arith.constant dense<0.000000e+00> : vector<8x128xf32>
    %96 = tpu.matmul %93, %95, %cst_55 {dimension_numbers = #tpu.dot_dimension_numbers<[1], [0], [0], [1], [0, 0, 1, 1], [], []>} : vector<8x16xbf16>, vector<16x128xbf16>, vector<8x128xf32> -> vector<8x128xf32>
    %97 = arith.addf %92, %96 : vector<8x128xf32>
    %98 = vector.extract_strided_slice %16 {offsets = [128, 0], sizes = [8, 16], strides = [1, 1]} : vector<200x16xbf16> to vector<8x16xbf16>
    %c16 = arith.constant 16 : index
    %c0_56 = arith.constant 0 : index
    %c0_57 = arith.constant 0 : index
    %99 = vector.load %arg4[%c16, %c0_56, %c0_57] : memref<25x16x128xbf16, #tpu.memory_space<vmem>>, vector<1x16x128xbf16>
    %100 = vector.shape_cast %99 : vector<1x16x128xbf16> to vector<16x128xbf16>
    %cst_58 = arith.constant dense<0.000000e+00> : vector<8x128xf32>
    %101 = tpu.matmul %98, %100, %cst_58 {dimension_numbers = #tpu.dot_dimension_numbers<[1], [0], [0], [1], [0, 0, 1, 1], [], []>} : vector<8x16xbf16>, vector<16x128xbf16>, vector<8x128xf32> -> vector<8x128xf32>
    %102 = arith.addf %97, %101 : vector<8x128xf32>
    %103 = vector.extract_strided_slice %16 {offsets = [136, 0], sizes = [8, 16], strides = [1, 1]} : vector<200x16xbf16> to vector<8x16xbf16>
    %c17 = arith.constant 17 : index
    %c0_59 = arith.constant 0 : index
    %c0_60 = arith.constant 0 : index
    %104 = vector.load %arg4[%c17, %c0_59, %c0_60] : memref<25x16x128xbf16, #tpu.memory_space<vmem>>, vector<1x16x128xbf16>
    %105 = vector.shape_cast %104 : vector<1x16x128xbf16> to vector<16x128xbf16>
    %cst_61 = arith.constant dense<0.000000e+00> : vector<8x128xf32>
    %106 = tpu.matmul %103, %105, %cst_61 {dimension_numbers = #tpu.dot_dimension_numbers<[1], [0], [0], [1], [0, 0, 1, 1], [], []>} : vector<8x16xbf16>, vector<16x128xbf16>, vector<8x128xf32> -> vector<8x128xf32>
    %107 = arith.addf %102, %106 : vector<8x128xf32>
    %108 = vector.extract_strided_slice %16 {offsets = [144, 0], sizes = [8, 16], strides = [1, 1]} : vector<200x16xbf16> to vector<8x16xbf16>
    %c18 = arith.constant 18 : index
    %c0_62 = arith.constant 0 : index
    %c0_63 = arith.constant 0 : index
    %109 = vector.load %arg4[%c18, %c0_62, %c0_63] : memref<25x16x128xbf16, #tpu.memory_space<vmem>>, vector<1x16x128xbf16>
    %110 = vector.shape_cast %109 : vector<1x16x128xbf16> to vector<16x128xbf16>
    %cst_64 = arith.constant dense<0.000000e+00> : vector<8x128xf32>
    %111 = tpu.matmul %108, %110, %cst_64 {dimension_numbers = #tpu.dot_dimension_numbers<[1], [0], [0], [1], [0, 0, 1, 1], [], []>} : vector<8x16xbf16>, vector<16x128xbf16>, vector<8x128xf32> -> vector<8x128xf32>
    %112 = arith.addf %107, %111 : vector<8x128xf32>
    %113 = vector.extract_strided_slice %16 {offsets = [152, 0], sizes = [8, 16], strides = [1, 1]} : vector<200x16xbf16> to vector<8x16xbf16>
    %c19 = arith.constant 19 : index
    %c0_65 = arith.constant 0 : index
    %c0_66 = arith.constant 0 : index
    %114 = vector.load %arg4[%c19, %c0_65, %c0_66] : memref<25x16x128xbf16, #tpu.memory_space<vmem>>, vector<1x16x128xbf16>
    %115 = vector.shape_cast %114 : vector<1x16x128xbf16> to vector<16x128xbf16>
    %cst_67 = arith.constant dense<0.000000e+00> : vector<8x128xf32>
    %116 = tpu.matmul %113, %115, %cst_67 {dimension_numbers = #tpu.dot_dimension_numbers<[1], [0], [0], [1], [0, 0, 1, 1], [], []>} : vector<8x16xbf16>, vector<16x128xbf16>, vector<8x128xf32> -> vector<8x128xf32>
    %117 = arith.addf %112, %116 : vector<8x128xf32>
    %118 = vector.extract_strided_slice %16 {offsets = [160, 0], sizes = [8, 16], strides = [1, 1]} : vector<200x16xbf16> to vector<8x16xbf16>
    %c20 = arith.constant 20 : index
    %c0_68 = arith.constant 0 : index
    %c0_69 = arith.constant 0 : index
    %119 = vector.load %arg4[%c20, %c0_68, %c0_69] : memref<25x16x128xbf16, #tpu.memory_space<vmem>>, vector<1x16x128xbf16>
    %120 = vector.shape_cast %119 : vector<1x16x128xbf16> to vector<16x128xbf16>
    %cst_70 = arith.constant dense<0.000000e+00> : vector<8x128xf32>
    %121 = tpu.matmul %118, %120, %cst_70 {dimension_numbers = #tpu.dot_dimension_numbers<[1], [0], [0], [1], [0, 0, 1, 1], [], []>} : vector<8x16xbf16>, vector<16x128xbf16>, vector<8x128xf32> -> vector<8x128xf32>
    %122 = arith.addf %117, %121 : vector<8x128xf32>
    %123 = vector.extract_strided_slice %16 {offsets = [168, 0], sizes = [8, 16], strides = [1, 1]} : vector<200x16xbf16> to vector<8x16xbf16>
    %c21 = arith.constant 21 : index
    %c0_71 = arith.constant 0 : index
    %c0_72 = arith.constant 0 : index
    %124 = vector.load %arg4[%c21, %c0_71, %c0_72] : memref<25x16x128xbf16, #tpu.memory_space<vmem>>, vector<1x16x128xbf16>
    %125 = vector.shape_cast %124 : vector<1x16x128xbf16> to vector<16x128xbf16>
    %cst_73 = arith.constant dense<0.000000e+00> : vector<8x128xf32>
    %126 = tpu.matmul %123, %125, %cst_73 {dimension_numbers = #tpu.dot_dimension_numbers<[1], [0], [0], [1], [0, 0, 1, 1], [], []>} : vector<8x16xbf16>, vector<16x128xbf16>, vector<8x128xf32> -> vector<8x128xf32>
    %127 = arith.addf %122, %126 : vector<8x128xf32>
    %128 = vector.extract_strided_slice %16 {offsets = [176, 0], sizes = [8, 16], strides = [1, 1]} : vector<200x16xbf16> to vector<8x16xbf16>
    %c22 = arith.constant 22 : index
    %c0_74 = arith.constant 0 : index
    %c0_75 = arith.constant 0 : index
    %129 = vector.load %arg4[%c22, %c0_74, %c0_75] : memref<25x16x128xbf16, #tpu.memory_space<vmem>>, vector<1x16x128xbf16>
    %130 = vector.shape_cast %129 : vector<1x16x128xbf16> to vector<16x128xbf16>
    %cst_76 = arith.constant dense<0.000000e+00> : vector<8x128xf32>
    %131 = tpu.matmul %128, %130, %cst_76 {dimension_numbers = #tpu.dot_dimension_numbers<[1], [0], [0], [1], [0, 0, 1, 1], [], []>} : vector<8x16xbf16>, vector<16x128xbf16>, vector<8x128xf32> -> vector<8x128xf32>
    %132 = arith.addf %127, %131 : vector<8x128xf32>
    %133 = vector.extract_strided_slice %16 {offsets = [184, 0], sizes = [8, 16], strides = [1, 1]} : vector<200x16xbf16> to vector<8x16xbf16>
    %c23 = arith.constant 23 : index
    %c0_77 = arith.constant 0 : index
    %c0_78 = arith.constant 0 : index
    %134 = vector.load %arg4[%c23, %c0_77, %c0_78] : memref<25x16x128xbf16, #tpu.memory_space<vmem>>, vector<1x16x128xbf16>
    %135 = vector.shape_cast %134 : vector<1x16x128xbf16> to vector<16x128xbf16>
    %cst_79 = arith.constant dense<0.000000e+00> : vector<8x128xf32>
    %136 = tpu.matmul %133, %135, %cst_79 {dimension_numbers = #tpu.dot_dimension_numbers<[1], [0], [0], [1], [0, 0, 1, 1], [], []>} : vector<8x16xbf16>, vector<16x128xbf16>, vector<8x128xf32> -> vector<8x128xf32>
    %137 = arith.addf %132, %136 : vector<8x128xf32>
    %138 = vector.extract_strided_slice %16 {offsets = [192, 0], sizes = [8, 16], strides = [1, 1]} : vector<200x16xbf16> to vector<8x16xbf16>
    %c24 = arith.constant 24 : index
    %c0_80 = arith.constant 0 : index
    %c0_81 = arith.constant 0 : index
    %139 = vector.load %arg4[%c24, %c0_80, %c0_81] : memref<25x16x128xbf16, #tpu.memory_space<vmem>>, vector<1x16x128xbf16>
    %140 = vector.shape_cast %139 : vector<1x16x128xbf16> to vector<16x128xbf16>
    %cst_82 = arith.constant dense<0.000000e+00> : vector<8x128xf32>
    %141 = tpu.matmul %138, %140, %cst_82 {dimension_numbers = #tpu.dot_dimension_numbers<[1], [0], [0], [1], [0, 0, 1, 1], [], []>} : vector<8x16xbf16>, vector<16x128xbf16>, vector<8x128xf32> -> vector<8x128xf32>
    %142 = arith.addf %137, %141 : vector<8x128xf32>
    %c0_83 = arith.constant 0 : index
    %c0_84 = arith.constant 0 : index
    %143 = vector.load %arg5[%c0_83, %c0_84] : memref<1x128xf32, #tpu.memory_space<vmem>>, vector<1x128xf32>
    %144 = vector.broadcast %143 : vector<1x128xf32> to vector<8x128xf32>
    %145 = arith.addf %142, %144 : vector<8x128xf32>
    %146 = math.tanh %145 : vector<8x128xf32>
    %147 = arith.truncf %146 : vector<8x128xf32> to vector<8x128xbf16>
    %c0_85 = arith.constant 0 : index
    %c0_86 = arith.constant 0 : index
    %148 = vector.load %arg6[%c0_85, %c0_86] : memref<128x128xbf16, #tpu.memory_space<vmem>>, vector<128x128xbf16>
    %cst_87 = arith.constant dense<0.000000e+00> : vector<8x128xf32>
    %149 = tpu.matmul %147, %148, %cst_87 {dimension_numbers = #tpu.dot_dimension_numbers<[1], [0], [0], [1], [0, 0, 1, 1], [], []>} : vector<8x128xbf16>, vector<128x128xbf16>, vector<8x128xf32> -> vector<8x128xf32>
    %c0_88 = arith.constant 0 : index
    %c0_89 = arith.constant 0 : index
    %150 = vector.load %arg7[%c0_88, %c0_89] : memref<1x128xf32, #tpu.memory_space<vmem>>, vector<1x128xf32>
    %151 = vector.broadcast %150 : vector<1x128xf32> to vector<8x128xf32>
    %152 = arith.addf %149, %151 : vector<8x128xf32>
    %153 = math.tanh %152 : vector<8x128xf32>
    %154 = arith.truncf %153 : vector<8x128xf32> to vector<8x128xbf16>
    %c0_90 = arith.constant 0 : index
    %c0_91 = arith.constant 0 : index
    %155 = vector.load %arg8[%c0_90, %c0_91] : memref<128x128xbf16, #tpu.memory_space<vmem>>, vector<128x128xbf16>
    %cst_92 = arith.constant dense<0.000000e+00> : vector<8x128xf32>
    %156 = tpu.matmul %154, %155, %cst_92 {dimension_numbers = #tpu.dot_dimension_numbers<[1], [0], [0], [1], [0, 0, 1, 1], [], []>} : vector<8x128xbf16>, vector<128x128xbf16>, vector<8x128xf32> -> vector<8x128xf32>
    %c0_93 = arith.constant 0 : index
    %c0_94 = arith.constant 0 : index
    %157 = vector.load %arg9[%c0_93, %c0_94] : memref<1x128xf32, #tpu.memory_space<vmem>>, vector<1x128xf32>
    %158 = vector.broadcast %157 : vector<1x128xf32> to vector<8x128xf32>
    %159 = arith.addf %156, %158 : vector<8x128xf32>
    %160 = vector.extract_strided_slice %159 {offsets = [0, 0], sizes = [2, 128], strides = [1, 1]} : vector<8x128xf32> to vector<2x128xf32>
    %c0_95 = arith.constant 0 : index
    %c0_96 = arith.constant 0 : index
    %161 = vector.load %arg10[%c0_95, %c0_96] : memref<2x128xf32, #tpu.memory_space<vmem>>, vector<2x128xf32>
    tpu.vector_store %arg10[%c0_95, %c0_96], %160 {strides = array<i32>} : memref<2x128xf32, #tpu.memory_space<vmem>>, vector<2x128xf32>,
    return
  }
  func.func @transform_0(%arg0: i32) -> (i32, i32) {
    %c0_i32 = arith.constant 0 : i32
    %c0_i32_0 = arith.constant 0 : i32
    %c0_i32_1 = arith.constant 0 : i32
    return %c0_i32, %c0_i32_0 : i32, i32
  }
  func.func @transform_1(%arg0: i32) -> (i32, i32) {
    %c0_i32 = arith.constant 0 : i32
    %c0_i32_0 = arith.constant 0 : i32
    %c0_i32_1 = arith.constant 0 : i32
    return %c0_i32, %c0_i32_0 : i32, i32
  }
  func.func @transform_2(%arg0: i32) -> (i32, i32) {
    %c0_i32 = arith.constant 0 : i32
    %c0_i32_0 = arith.constant 0 : i32
    %c0_i32_1 = arith.constant 0 : i32
    return %c0_i32, %c0_i32_0 : i32, i32
  }
  func.func @transform_3(%arg0: i32) -> (i32, i32, i32) {
    %c0_i32 = arith.constant 0 : i32
    %c0_i32_0 = arith.constant 0 : i32
    %c0_i32_1 = arith.constant 0 : i32
    %c0_i32_2 = arith.constant 0 : i32
    return %c0_i32, %c0_i32_0, %c0_i32_1 : i32, i32, i32
  }
  func.func @transform_4(%arg0: i32) -> (i32, i32) {
    %c0_i32 = arith.constant 0 : i32
    %c0_i32_0 = arith.constant 0 : i32
    %c0_i32_1 = arith.constant 0 : i32
    return %c0_i32, %c0_i32_0 : i32, i32
  }
  func.func @transform_5(%arg0: i32) -> (i32, i32) {
    %c0_i32 = arith.constant 0 : i32
    %c0_i32_0 = arith.constant 0 : i32
    %c0_i32_1 = arith.constant 0 : i32
    return %c0_i32, %c0_i32_0 : i32, i32
  }
  func.func @transform_6(%arg0: i32) -> (i32, i32) {
    %c0_i32 = arith.constant 0 : i32
    %c0_i32_0 = arith.constant 0 : i32
    %c0_i32_1 = arith.constant 0 : i32
    return %c0_i32, %c0_i32_0 : i32, i32
  }
  func.func @transform_7(%arg0: i32) -> (i32, i32) {
    %c0_i32 = arith.constant 0 : i32
    %c0_i32_0 = arith.constant 0 : i32
    %c0_i32_1 = arith.constant 0 : i32
    return %c0_i32, %c0_i32_0 : i32, i32
  }
  func.func @transform_8(%arg0: i32) -> (i32, i32) {
    %c0_i32 = arith.constant 0 : i32
    %c0_i32_0 = arith.constant 0 : i32
    %c0_i32_1 = arith.constant 0 : i32
    return %c0_i32, %c0_i32_0 : i32, i32
  }
  func.func @transform_9(%arg0: i32) -> (i32, i32) {
    %c0_i32 = arith.constant 0 : i32
    %c0_i32_0 = arith.constant 0 : i32
    %c0_i32_1 = arith.constant 0 : i32
    return %c0_i32, %c0_i32_0 : i32, i32
  }
}

</mosaic_0001>

<llo_original>
// kernel: lenet_forward.2
$region0: #{lenet_forward.2}
  #allocation0 [shape = 'u32[]', space=smem, size = 0x4, offset = 0x4, fixed_abs, tag = 'smem constant byte address 0x4 - core index']
  #allocation1 [shape = 'u32[144,128]{1,0:T(1,128)}', space=vmem, size = 0x12000, scoped, tag = 'internal scratch']
  %s0 = inlined_call_operand.vmem [shape: bf16[1568,128], index: 0, kind: input, shape index: {}]
  %s1 = inlined_call_operand.vmem [shape: bf16[128,8], index: 1, kind: input, shape index: {}]
  %s2 = inlined_call_operand.vmem [shape: f32[1,8], index: 2, kind: input, shape index: {}]
  %s3 = inlined_call_operand.vmem [shape: bf16[392,8], index: 3, kind: output, shape index: {}]
  %s4 = sld [smem:[#allocation0]]
  $region22: #{lenet_forward.2} parent=0
    _
  %s6 = ssub.s32 1, %s4
  %s7 = scalar_select 0, %s6, %s4
  // Predicated region
  $region2: #{lenet_forward.2} parent=0 // pred_check
    _
  $region3: #{lenet_forward.2} parent=0 // pred_check_branch
    %9 = sbr.rel (0) target = $region5
  $region4: #{lenet_forward.2} parent=0 // pred_region
    _
  $region5: #{lenet_forward.2} parent=0 // pred_fallthru
    _
  // Predicated region
  $region6: #{lenet_forward.2} parent=0 // pred_check
    _
  $region7: #{lenet_forward.2} parent=0 // pred_check_branch
    %11 = sbr.rel (0) target = $region9
  $region8: #{lenet_forward.2} parent=0 // pred_region
    _
  $region9: #{lenet_forward.2} parent=0 // pred_fallthru
    _
  // Predicated region
  $region10: #{lenet_forward.2} parent=0 // pred_check
    _
  $region11: #{lenet_forward.2} parent=0 // pred_check_branch
    %13 = sbr.rel (0) target = $region13
  $region12: #{lenet_forward.2} parent=0 // pred_region
    _
  $region13: #{lenet_forward.2} parent=0 // pred_fallthru
    _
  %v15 = vld [vmem:[%s0] sm:$0xf]
  %v16 = vld [vmem:[%s0 + $0x4] sm:$0xf]
  %v17 = vld [vmem:[%s0 + $0x8] sm:$0xf]
  %v18 = vld [vmem:[%s0 + $0xc] sm:$0xf]
  %v19 = vld [vmem:[%s0 + $0x10] sm:$0xf]
  %v20 = vld [vmem:[%s0 + $0x14] sm:$0xf]
  %v21 = vld [vmem:[%s0 + $0x18] sm:$0xf]
  %v22 = vld [vmem:[%s0 + $0x1c] sm:$0xf]
  %v23 = vld [vmem:[%s0 + $0x20] sm:$0xf]
  %v24 = vld [vmem:[%s0 + $0x24] sm:$0xf]
  %v25 = vld [vmem:[%s0 + $0x28] sm:$0xf]
  %v26 = vld [vmem:[%s0 + $0x2c] sm:$0xf]
  %v27 = vld [vmem:[%s0 + $0x30] sm:$0xf]
  %v28 = vld [vmem:[%s0 + $0x34] sm:$0xf]
  %v29 = vld [vmem:[%s0 + $0x38] sm:$0xf]
  %v30 = vld [vmem:[%s0 + $0x3c] sm:$0xf]
  %v31 = vld [vmem:[%s0 + $0x40] sm:$0xf]
  %v32 = vld [vmem:[%s0 + $0x44] sm:$0xf]
  %v33 = vld [vmem:[%s0 + $0x48] sm:$0xf]
  %v34 = vld [vmem:[%s0 + $0x4c] sm:$0xf]
  %v35 = vld [vmem:[%s0 + $0x50] sm:$0xf]
  %v36 = vld [vmem:[%s0 + $0x54] sm:$0xf]
  %v37 = vld [vmem:[%s0 + $0x58] sm:$0xf]
  %v38 = vld [vmem:[%s0 + $0x5c] sm:$0xf]
  %v39 = vld [vmem:[%s0 + $0x60] sm:$0xf]
  %v40 = vld [vmem:[%s0 + $0x64] sm:$0xf]
  %v41 = vld [vmem:[%s0 + $0x68] sm:$0xf]
  %v42 = vld [vmem:[%s0 + $0x6c] sm:$0xf]
  %v43 = vld [vmem:[%s0 + $0x70] sm:$0xf]
  %v44 = vld [vmem:[%s0 + $0x74] sm:$0xf]
  %v45 = vld [vmem:[%s0 + $0x78] sm:$0xf]
  %v46 = vld [vmem:[%s0 + $0x7c] sm:$0xf]
  %v47 = vld [vmem:[%s0 + $0x80] sm:$0xf]
  %v48 = vld [vmem:[%s0 + $0x84] sm:$0xf]
  %v49 = vld [vmem:[%s0 + $0x88] sm:$0xf]
  %v50 = vld [vmem:[%s0 + $0x8c] sm:$0xf]
  %v51 = vld [vmem:[%s0 + $0x90] sm:$0xf]
  %v52 = vld [vmem:[%s0 + $0x94] sm:$0xf]
  %v53 = vld [vmem:[%s0 + $0x98] sm:$0xf]
  %v54 = vld [vmem:[%s0 + $0x9c] sm:$0xf]
  %v55 = vld [vmem:[%s0 + $0xa0] sm:$0xf]
  %v56 = vld [vmem:[%s0 + $0xa4] sm:$0xf]
  %v57 = vld [vmem:[%s0 + $0xa8] sm:$0xf]
  %v58 = vld [vmem:[%s0 + $0xac] sm:$0xf]
  %v59 = vld [vmem:[%s0 + $0xb0] sm:$0xf]
  %v60 = vld [vmem:[%s0 + $0xb4] sm:$0xf]
  %v61 = vld [vmem:[%s0 + $0xb8] sm:$0xf]
  %v62 = vld [vmem:[%s0 + $0xbc] sm:$0xf]
  %v63 = vld [vmem:[%s0 + $0xc0] sm:$0xf]
  %v64 = vld [vmem:[%s0 + $0xc4] sm:$0xf]
  %v65 = vld [vmem:[%s0 + $0xc8] sm:$0xf]
  %v66 = vld [vmem:[%s0 + $0xcc] sm:$0xf]
  %v67 = vld [vmem:[%s0 + $0xd0] sm:$0xf]
  %v68 = vld [vmem:[%s0 + $0xd4] sm:$0xf]
  %v69 = vld [vmem:[%s0 + $0xd8] sm:$0xf]
  %v70 = vld [vmem:[%s0 + $0xdc] sm:$0xf]
  %v71 = vld [vmem:[%s0 + $0xe0] sm:$0xf]
  %v72 = vld [vmem:[%s0 + $0xe4] sm:$0xf]
  %v73 = vld [vmem:[%s0 + $0xe8] sm:$0xf]
  %v74 = vld [vmem:[%s0 + $0xec] sm:$0xf]
  %v75 = vld [vmem:[%s0 + $0xf0] sm:$0xf]
  %v76 = vld [vmem:[%s0 + $0xf4] sm:$0xf]
  %v77 = vld [vmem:[%s0 + $0xf8] sm:$0xf]
  %v78 = vld [vmem:[%s0 + $0xfc] sm:$0xf]
  %v79 = vld [vmem:[%s0 + $0x100] sm:$0xf]
  %v80 = vld [vmem:[%s0 + $0x104] sm:$0xf]
  %v81 = vld [vmem:[%s0 + $0x108] sm:$0xf]
  %v82 = vld [vmem:[%s0 + $0x10c] sm:$0xf]
  %v83 = vld [vmem:[%s0 + $0x110] sm:$0xf]
  %v84 = vld [vmem:[%s0 + $0x114] sm:$0xf]
  %v85 = vld [vmem:[%s0 + $0x118] sm:$0xf]
  %v86 = vld [vmem:[%s0 + $0x11c] sm:$0xf]
  %v87 = vld [vmem:[%s0 + $0x120] sm:$0xf]
  %v88 = vld [vmem:[%s0 + $0x124] sm:$0xf]
  %v89 = vld [vmem:[%s0 + $0x128] sm:$0xf]
  %v90 = vld [vmem:[%s0 + $0x12c] sm:$0xf]
  %v91 = vld [vmem:[%s0 + $0x130] sm:$0xf]
  %v92 = vld [vmem:[%s0 + $0x134] sm:$0xf]
  %v93 = vld [vmem:[%s0 + $0x138] sm:$0xf]
  %v94 = vld [vmem:[%s0 + $0x13c] sm:$0xf]
  %v95 = vld [vmem:[%s0 + $0x140] sm:$0xf]
  %v96 = vld [vmem:[%s0 + $0x144] sm:$0xf]
  %v97 = vld [vmem:[%s0 + $0x148] sm:$0xf]
  %v98 = vld [vmem:[%s0 + $0x14c] sm:$0xf]
  %v99 = vld [vmem:[%s0 + $0x150] sm:$0xf]
  %v100 = vld [vmem:[%s0 + $0x154] sm:$0xf]
  %v101 = vld [vmem:[%s0 + $0x158] sm:$0xf]
  %v102 = vld [vmem:[%s0 + $0x15c] sm:$0xf]
  %v103 = vld [vmem:[%s0 + $0x160] sm:$0xf]
  %v104 = vld [vmem:[%s0 + $0x164] sm:$0xf]
  %v105 = vld [vmem:[%s0 + $0x168] sm:$0xf]
  %v106 = vld [vmem:[%s0 + $0x16c] sm:$0xf]
  %v107 = vld [vmem:[%s0 + $0x170] sm:$0xf]
  %v108 = vld [vmem:[%s0 + $0x174] sm:$0xf]
  %v109 = vld [vmem:[%s0 + $0x178] sm:$0xf]
  %v110 = vld [vmem:[%s0 + $0x17c] sm:$0xf]
  %v111 = vld [vmem:[%s0 + $0x180] sm:$0xf]
  %v112 = vld [vmem:[%s0 + $0x184] sm:$0xf]
  %v113 = vld [vmem:[%s0 + $0x188] sm:$0xf]
  %v114 = vld [vmem:[%s0 + $0x18c] sm:$0xf]
  %v115 = vld [vmem:[%s0 + $0x190] sm:$0xf]
  %v116 = vld [vmem:[%s0 + $0x194] sm:$0xf]
  %v117 = vld [vmem:[%s0 + $0x198] sm:$0xf]
  %v118 = vld [vmem:[%s0 + $0x19c] sm:$0xf]
  %v119 = vld [vmem:[%s0 + $0x1a0] sm:$0xf]
  %v120 = vld [vmem:[%s0 + $0x1a4] sm:$0xf]
  %v121 = vld [vmem:[%s0 + $0x1a8] sm:$0xf]
  %v122 = vld [vmem:[%s0 + $0x1ac] sm:$0xf]
  %v123 = vld [vmem:[%s0 + $0x1b0] sm:$0xf]
  %v124 = vld [vmem:[%s0 + $0x1b4] sm:$0xf]
  %v125 = vld [vmem:[%s0 + $0x1b8] sm:$0xf]
  %v126 = vld [vmem:[%s0 + $0x1bc] sm:$0xf]
  %v127 = vld [vmem:[%s0 + $0x1c0] sm:$0xf]
  %v128 = vld [vmem:[%s0 + $0x1c4] sm:$0xf]
  %v129 = vld [vmem:[%s0 + $0x1c8] sm:$0xf]
  %v130 = vld [vmem:[%s0 + $0x1cc] sm:$0xf]
  %v131 = vld [vmem:[%s0 + $0x1d0] sm:$0xf]
  %v132 = vld [vmem:[%s0 + $0x1d4] sm:$0xf]
  %v133 = vld [vmem:[%s0 + $0x1d8] sm:$0xf]
  %v134 = vld [vmem:[%s0 + $0x1dc] sm:$0xf]
  %v135 = vld [vmem:[%s0 + $0x1e0] sm:$0xf]
  %v136 = vld [vmem:[%s0 + $0x1e4] sm:$0xf]
  %v137 = vld [vmem:[%s0 + $0x1e8] sm:$0xf]
  %v138 = vld [vmem:[%s0 + $0x1ec] sm:$0xf]
  %v139 = vld [vmem:[%s0 + $0x1f0] sm:$0xf]
  %v140 = vld [vmem:[%s0 + $0x1f4] sm:$0xf]
  %v141 = vld [vmem:[%s0 + $0x1f8] sm:$0xf]
  %v142 = vld [vmem:[%s0 + $0x1fc] sm:$0xf]
  %v143 = vld [vmem:[%s0 + $0x200] sm:$0xf]
  %v144 = vld [vmem:[%s0 + $0x204] sm:$0xf]
  %v145 = vld [vmem:[%s0 + $0x208] sm:$0xf]
  %v146 = vld [vmem:[%s0 + $0x20c] sm:$0xf]
  %v147 = vld [vmem:[%s0 + $0x210] sm:$0xf]
  %v148 = vld [vmem:[%s0 + $0x214] sm:$0xf]
  %v149 = vld [vmem:[%s0 + $0x218] sm:$0xf]
  %v150 = vld [vmem:[%s0 + $0x21c] sm:$0xf]
  %v151 = vld [vmem:[%s0 + $0x220] sm:$0xf]
  %v152 = vld [vmem:[%s0 + $0x224] sm:$0xf]
  %v153 = vld [vmem:[%s0 + $0x228] sm:$0xf]
  %v154 = vld [vmem:[%s0 + $0x22c] sm:$0xf]
  %v155 = vld [vmem:[%s0 + $0x230] sm:$0xf]
  %v156 = vld [vmem:[%s0 + $0x234] sm:$0xf]
  %v157 = vld [vmem:[%s0 + $0x238] sm:$0xf]
  %v158 = vld [vmem:[%s0 + $0x23c] sm:$0xf]
  %v159 = vld [vmem:[%s0 + $0x240] sm:$0xf]
  %v160 = vld [vmem:[%s0 + $0x244] sm:$0xf]
  %v161 = vld [vmem:[%s0 + $0x248] sm:$0xf]
  %v162 = vld [vmem:[%s0 + $0x24c] sm:$0xf]
  %v163 = vld [vmem:[%s0 + $0x250] sm:$0xf]
  %v164 = vld [vmem:[%s0 + $0x254] sm:$0xf]
  %v165 = vld [vmem:[%s0 + $0x258] sm:$0xf]
  %v166 = vld [vmem:[%s0 + $0x25c] sm:$0xf]
  %v167 = vld [vmem:[%s0 + $0x260] sm:$0xf]
  %v168 = vld [vmem:[%s0 + $0x264] sm:$0xf]
  %v169 = vld [vmem:[%s0 + $0x268] sm:$0xf]
  %v170 = vld [vmem:[%s0 + $0x26c] sm:$0xf]
  %v171 = vld [vmem:[%s0 + $0x270] sm:$0xf]
  %v172 = vld [vmem:[%s0 + $0x274] sm:$0xf]
  %v173 = vld [vmem:[%s0 + $0x278] sm:$0xf]
  %v174 = vld [vmem:[%s0 + $0x27c] sm:$0xf]
  %v175 = vld [vmem:[%s0 + $0x280] sm:$0xf]
  %v176 = vld [vmem:[%s0 + $0x284] sm:$0xf]
  %v177 = vld [vmem:[%s0 + $0x288] sm:$0xf]
  %v178 = vld [vmem:[%s0 + $0x28c] sm:$0xf]
  %v179 = vld [vmem:[%s0 + $0x290] sm:$0xf]
  %v180 = vld [vmem:[%s0 + $0x294] sm:$0xf]
  %v181 = vld [vmem:[%s0 + $0x298] sm:$0xf]
  %v182 = vld [vmem:[%s0 + $0x29c] sm:$0xf]
  %v183 = vld [vmem:[%s0 + $0x2a0] sm:$0xf]
  %v184 = vld [vmem:[%s0 + $0x2a4] sm:$0xf]
  %v185 = vld [vmem:[%s0 + $0x2a8] sm:$0xf]
  %v186 = vld [vmem:[%s0 + $0x2ac] sm:$0xf]
  %v187 = vld [vmem:[%s0 + $0x2b0] sm:$0xf]
  %v188 = vld [vmem:[%s0 + $0x2b4] sm:$0xf]
  %v189 = vld [vmem:[%s0 + $0x2b8] sm:$0xf]
  %v190 = vld [vmem:[%s0 + $0x2bc] sm:$0xf]
  %v191 = vld [vmem:[%s0 + $0x2c0] sm:$0xf]
  %v192 = vld [vmem:[%s0 + $0x2c4] sm:$0xf]
  %v193 = vld [vmem:[%s0 + $0x2c8] sm:$0xf]
  %v194 = vld [vmem:[%s0 + $0x2cc] sm:$0xf]
  %v195 = vld [vmem:[%s0 + $0x2d0] sm:$0xf]
  %v196 = vld [vmem:[%s0 + $0x2d4] sm:$0xf]
  %v197 = vld [vmem:[%s0 + $0x2d8] sm:$0xf]
  %v198 = vld [vmem:[%s0 + $0x2dc] sm:$0xf]
  %v199 = vld [vmem:[%s0 + $0x2e0] sm:$0xf]
  %v200 = vld [vmem:[%s0 + $0x2e4] sm:$0xf]
  %v201 = vld [vmem:[%s0 + $0x2e8] sm:$0xf]
  %v202 = vld [vmem:[%s0 + $0x2ec] sm:$0xf]
  %v203 = vld [vmem:[%s0 + $0x2f0] sm:$0xf]
  %v204 = vld [vmem:[%s0 + $0x2f4] sm:$0xf]
  %v205 = vld [vmem:[%s0 + $0x2f8] sm:$0xf]
  %v206 = vld [vmem:[%s0 + $0x2fc] sm:$0xf]
  %v207 = vld [vmem:[%s0 + $0x300] sm:$0xf]
  %v208 = vld [vmem:[%s0 + $0x304] sm:$0xf]
  %v209 = vld [vmem:[%s0 + $0x308] sm:$0xf]
  %v210 = vld [vmem:[%s0 + $0x30c] sm:$0xf]
  %v211 = vld [vmem:[%s1] sm:$0xf]
  %v212 = vld [vmem:[%s1 + $0x4] sm:$0xf]
  %v213 = vld [vmem:[%s1 + $0x8] sm:$0xf]
  %v214 = vld [vmem:[%s1 + $0xc] sm:$0xf]
  %v215 = vld [vmem:[%s1 + $0x10] sm:$0xf]
  %v216 = vld [vmem:[%s1 + $0x14] sm:$0xf]
  %v217 = vld [vmem:[%s1 + $0x18] sm:$0xf]
  %v218 = vld [vmem:[%s1 + $0x1c] sm:$0xf]
  %v219 = vld [vmem:[%s1 + $0x20] sm:$0xf]
  %v220 = vld [vmem:[%s1 + $0x24] sm:$0xf]
  %v221 = vld [vmem:[%s1 + $0x28] sm:$0xf]
  %v222 = vld [vmem:[%s1 + $0x2c] sm:$0xf]
  %v223 = vld [vmem:[%s1 + $0x30] sm:$0xf]
  %v224 = vld [vmem:[%s1 + $0x34] sm:$0xf]
  %v225 = vld [vmem:[%s1 + $0x38] sm:$0xf]
  %v226 = vld [vmem:[%s1 + $0x3c] sm:$0xf]
  %v227 = vld [vmem:[%s2] sm:$0x1]
  %v229 = vlaneseq
  %v230 = vshrl.u32 %v229, 7
  %v231 = vsub.s32 0, %v230
  %v232 = vrot.slane %v227, %v231
  %v430 = vunpack.c.l.b16 %v15
  %v431 = vunpack.c.l.b16 %v16
  %v432 = vunpack.c.l.b16 %v17
  %v433 = vunpack.c.l.b16 %v18
  %v434 = vunpack.c.l.b16 %v19
  %v435 = vunpack.c.l.b16 %v20
  %v436 = vunpack.c.l.b16 %v21
  %v437 = vunpack.c.l.b16 %v22
  %v438 = vunpack.c.l.b16 %v23
  %v439 = vunpack.c.l.b16 %v24
  %v440 = vunpack.c.l.b16 %v25
  %v441 = vunpack.c.l.b16 %v26
  %v442 = vunpack.c.l.b16 %v27
  %v443 = vunpack.c.l.b16 %v28
  %v444 = vunpack.c.l.b16 %v29
  %v445 = vunpack.c.l.b16 %v30
  %v446 = vunpack.c.l.b16 %v31
  %v447 = vunpack.c.l.b16 %v32
  %v448 = vunpack.c.l.b16 %v33
  %v449 = vunpack.c.l.b16 %v34
  %v450 = vunpack.c.l.b16 %v35
  %v451 = vunpack.c.l.b16 %v36
  %v452 = vunpack.c.l.b16 %v37
  %v453 = vunpack.c.l.b16 %v38
  %v454 = vunpack.c.l.b16 %v39
  %v455 = vunpack.c.l.b16 %v40
  %v456 = vunpack.c.l.b16 %v41
  %v457 = vunpack.c.l.b16 %v42
  %v458 = vunpack.c.l.b16 %v43
  %v459 = vunpack.c.l.b16 %v44
  %v460 = vunpack.c.l.b16 %v45
  %v461 = vunpack.c.l.b16 %v46
  %v462 = vunpack.c.l.b16 %v47
  %v463 = vunpack.c.l.b16 %v48
  %v464 = vunpack.c.l.b16 %v49
  %v465 = vunpack.c.l.b16 %v50
  %v466 = vunpack.c.l.b16 %v51
  %v467 = vunpack.c.l.b16 %v52
  %v468 = vunpack.c.l.b16 %v53
  %v469 = vunpack.c.l.b16 %v54
  %v470 = vunpack.c.l.b16 %v55
  %v471 = vunpack.c.l.b16 %v56
  %v472 = vunpack.c.l.b16 %v57
  %v473 = vunpack.c.l.b16 %v58
  %v474 = vunpack.c.l.b16 %v59
  %v475 = vunpack.c.l.b16 %v60
  %v476 = vunpack.c.l.b16 %v61
  %v477 = vunpack.c.l.b16 %v62
  %v478 = vunpack.c.l.b16 %v63
  %v479 = vunpack.c.l.b16 %v64
  %v480 = vunpack.c.l.b16 %v65
  %v481 = vunpack.c.l.b16 %v66
  %v482 = vunpack.c.l.b16 %v67
  %v483 = vunpack.c.l.b16 %v68
  %v484 = vunpack.c.l.b16 %v69
  %v485 = vunpack.c.l.b16 %v70
  %v486 = vunpack.c.l.b16 %v71
  %v487 = vunpack.c.l.b16 %v72
  %v488 = vunpack.c.l.b16 %v73
  %v489 = vunpack.c.l.b16 %v74
  %v490 = vunpack.c.l.b16 %v75
  %v491 = vunpack.c.l.b16 %v76
  %v492 = vunpack.c.l.b16 %v77
  %v493 = vunpack.c.l.b16 %v78
  %v494 = vunpack.c.l.b16 %v79
  %v495 = vunpack.c.l.b16 %v80
  %v496 = vunpack.c.l.b16 %v81
  %v497 = vunpack.c.l.b16 %v82
  %v498 = vunpack.c.l.b16 %v83
  %v499 = vunpack.c.l.b16 %v84
  %v500 = vunpack.c.l.b16 %v85
  %v501 = vunpack.c.l.b16 %v86
  %v502 = vunpack.c.l.b16 %v87
  %v503 = vunpack.c.l.b16 %v88
  %v504 = vunpack.c.l.b16 %v89
  %v505 = vunpack.c.l.b16 %v90
  %v506 = vunpack.c.l.b16 %v91
  %v507 = vunpack.c.l.b16 %v92
  %v508 = vunpack.c.l.b16 %v93
  %v509 = vunpack.c.l.b16 %v94
  %v510 = vunpack.c.l.b16 %v95
  %v511 = vunpack.c.l.b16 %v96
  %v512 = vunpack.c.l.b16 %v97
  %v513 = vunpack.c.l.b16 %v98
  %v514 = vunpack.c.l.b16 %v99
  %v515 = vunpack.c.l.b16 %v100
  %v516 = vunpack.c.l.b16 %v101
  %v517 = vunpack.c.l.b16 %v102
  %v518 = vunpack.c.l.b16 %v103
  %v519 = vunpack.c.l.b16 %v104
  %v520 = vunpack.c.l.b16 %v105
  %v521 = vunpack.c.l.b16 %v106
  %v522 = vunpack.c.l.b16 %v107
  %v523 = vunpack.c.l.b16 %v108
  %v524 = vunpack.c.l.b16 %v109
  %v525 = vunpack.c.l.b16 %v110
  %v526 = vunpack.c.l.b16 %v111
  %v527 = vunpack.c.l.b16 %v112
  %v528 = vunpack.c.l.b16 %v113
  %v529 = vunpack.c.l.b16 %v114
  %v530 = vunpack.c.l.b16 %v115
  %v531 = vunpack.c.l.b16 %v116
  %v532 = vunpack.c.l.b16 %v117
  %v533 = vunpack.c.l.b16 %v118
  %v534 = vunpack.c.l.b16 %v119
  %v535 = vunpack.c.l.b16 %v120
  %v536 = vunpack.c.l.b16 %v121
  %v537 = vunpack.c.l.b16 %v122
  %v538 = vunpack.c.l.b16 %v123
  %v539 = vunpack.c.l.b16 %v124
  %v540 = vunpack.c.l.b16 %v125
  %v541 = vunpack.c.l.b16 %v126
  %v542 = vunpack.c.l.b16 %v127
  %v543 = vunpack.c.l.b16 %v128
  %v544 = vunpack.c.l.b16 %v129
  %v545 = vunpack.c.l.b16 %v130
  %v546 = vunpack.c.l.b16 %v131
  %v547 = vunpack.c.l.b16 %v132
  %v548 = vunpack.c.l.b16 %v133
  %v549 = vunpack.c.l.b16 %v134
  %v550 = vunpack.c.l.b16 %v135
  %v551 = vunpack.c.l.b16 %v136
  %v552 = vunpack.c.l.b16 %v137
  %v553 = vunpack.c.l.b16 %v138
  %v554 = vunpack.c.l.b16 %v139
  %v555 = vunpack.c.l.b16 %v140
  %v556 = vunpack.c.l.b16 %v141
  %v557 = vunpack.c.l.b16 %v142
  %v558 = vunpack.c.l.b16 %v143
  %v559 = vunpack.c.l.b16 %v144
  %v560 = vunpack.c.l.b16 %v145
  %v561 = vunpack.c.l.b16 %v146
  %v562 = vunpack.c.l.b16 %v147
  %v563 = vunpack.c.l.b16 %v148
  %v564 = vunpack.c.l.b16 %v149
  %v565 = vunpack.c.l.b16 %v150
  %v566 = vunpack.c.l.b16 %v151
  %v567 = vunpack.c.l.b16 %v152
  %v568 = vunpack.c.l.b16 %v153
  %v569 = vunpack.c.l.b16 %v154
  %v570 = vunpack.c.l.b16 %v155
  %v571 = vunpack.c.l.b16 %v156
  %v572 = vunpack.c.l.b16 %v157
  %v573 = vunpack.c.l.b16 %v158
  %v574 = vunpack.c.l.b16 %v159
  %v575 = vunpack.c.l.b16 %v160
  %v576 = vunpack.c.l.b16 %v161
  %v577 = vunpack.c.l.b16 %v162
  %v578 = vunpack.c.l.b16 %v163
  %v579 = vunpack.c.l.b16 %v164
  %v580 = vunpack.c.l.b16 %v165
  %v581 = vunpack.c.l.b16 %v166
  %v582 = vunpack.c.l.b16 %v167
  %v583 = vunpack.c.l.b16 %v168
  %v584 = vunpack.c.l.b16 %v169
  %v585 = vunpack.c.l.b16 %v170
  %v586 = vunpack.c.l.b16 %v171
  %v587 = vunpack.c.l.b16 %v172
  %v588 = vunpack.c.l.b16 %v173
  %v589 = vunpack.c.l.b16 %v174
  %v590 = vunpack.c.l.b16 %v175
  %v591 = vunpack.c.l.b16 %v176
  %v592 = vunpack.c.l.b16 %v177
  %v593 = vunpack.c.l.b16 %v178
  %v594 = vunpack.c.l.b16 %v179
  %v595 = vunpack.c.l.b16 %v180
  %v596 = vunpack.c.l.b16 %v181
  %v597 = vunpack.c.l.b16 %v182
  %v598 = vunpack.c.l.b16 %v183
  %v599 = vunpack.c.l.b16 %v184
  %v600 = vunpack.c.l.b16 %v185
  %v601 = vunpack.c.l.b16 %v186
  %v602 = vunpack.c.l.b16 %v187
  %v603 = vunpack.c.l.b16 %v188
  %v604 = vunpack.c.l.b16 %v189
  %v605 = vunpack.c.l.b16 %v190
  %v606 = vunpack.c.l.b16 %v191
  %v607 = vunpack.c.l.b16 %v192
  %v608 = vunpack.c.l.b16 %v193
  %v609 = vunpack.c.l.b16 %v194
  %v610 = vunpack.c.l.b16 %v195
  %v611 = vunpack.c.l.b16 %v196
  %v612 = vunpack.c.l.b16 %v197
  %v613 = vunpack.c.l.b16 %v198
  %v614 = vunpack.c.l.b16 %v199
  %v615 = vunpack.c.l.b16 %v200
  %v616 = vunpack.c.l.b16 %v201
  %v617 = vunpack.c.l.b16 %v202
  %v618 = vunpack.c.l.b16 %v203
  %v619 = vunpack.c.l.b16 %v204
  %v620 = vunpack.c.l.b16 %v205
  %v621 = vunpack.c.l.b16 %v206
  %v622 = vunpack.c.l.b16 %v207
  %v623 = vunpack.c.l.b16 %v208
  %v624 = vunpack.c.l.b16 %v209
  %v625 = vunpack.c.l.b16 %v210
  %v626 = vpack.c.b16 %v431, %v430
  %v627 = vpack.c.b16 %v433, %v432
  %v628 = vpack.c.b16 %v435, %v434
  %v629 = vpack.c.b16 %v437, %v436
  %v630 = vpack.c.b16 %v439, %v438
  %v631 = vpack.c.b16 %v441, %v440
  %v632 = vpack.c.b16 %v443, %v442
  %v633 = vpack.c.b16 %v445, %v444
  %v634 = vpack.c.b16 %v447, %v446
  %v635 = vpack.c.b16 %v449, %v448
  %v636 = vpack.c.b16 %v451, %v450
  %v637 = vpack.c.b16 %v453, %v452
  %v638 = vpack.c.b16 %v455, %v454
  %v639 = vpack.c.b16 %v457, %v456
  %v640 = vpack.c.b16 %v459, %v458
  %v641 = vpack.c.b16 %v461, %v460
  %v642 = vpack.c.b16 %v463, %v462
  %v643 = vpack.c.b16 %v465, %v464
  %v644 = vpack.c.b16 %v467, %v466
  %v645 = vpack.c.b16 %v469, %v468
  %v646 = vpack.c.b16 %v471, %v470
  %v647 = vpack.c.b16 %v473, %v472
  %v648 = vpack.c.b16 %v475, %v474
  %v649 = vpack.c.b16 %v477, %v476
  %v650 = vpack.c.b16 %v479, %v478
  %v651 = vpack.c.b16 %v481, %v480
  %v652 = vpack.c.b16 %v483, %v482
  %v653 = vpack.c.b16 %v485, %v484
  %v654 = vpack.c.b16 %v487, %v486
  %v655 = vpack.c.b16 %v489, %v488
  %v656 = vpack.c.b16 %v491, %v490
  %v657 = vpack.c.b16 %v493, %v492
  %v658 = vpack.c.b16 %v495, %v494
  %v659 = vpack.c.b16 %v497, %v496
  %v660 = vpack.c.b16 %v499, %v498
  %v661 = vpack.c.b16 %v501, %v500
  %v662 = vpack.c.b16 %v503, %v502
  %v663 = vpack.c.b16 %v505, %v504
  %v664 = vpack.c.b16 %v507, %v506
  %v665 = vpack.c.b16 %v509, %v508
  %v666 = vpack.c.b16 %v511, %v510
  %v667 = vpack.c.b16 %v513, %v512
  %v668 = vpack.c.b16 %v515, %v514
  %v669 = vpack.c.b16 %v517, %v516
  %v670 = vpack.c.b16 %v519, %v518
  %v671 = vpack.c.b16 %v521, %v520
  %v672 = vpack.c.b16 %v523, %v522
  %v673 = vpack.c.b16 %v525, %v524
  %v674 = vpack.c.b16 %v527, %v526
  %v675 = vpack.c.b16 %v529, %v528
  %v676 = vpack.c.b16 %v531, %v530
  %v677 = vpack.c.b16 %v533, %v532
  %v678 = vpack.c.b16 %v535, %v534
  %v679 = vpack.c.b16 %v537, %v536
  %v680 = vpack.c.b16 %v539, %v538
  %v681 = vpack.c.b16 %v541, %v540
  %v682 = vpack.c.b16 %v543, %v542
  %v683 = vpack.c.b16 %v545, %v544
  %v684 = vpack.c.b16 %v547, %v546
  %v685 = vpack.c.b16 %v549, %v548
  %v686 = vpack.c.b16 %v551, %v550
  %v687 = vpack.c.b16 %v553, %v552
  %v688 = vpack.c.b16 %v555, %v554
  %v689 = vpack.c.b16 %v557, %v556
  %v690 = vpack.c.b16 %v559, %v558
  %v691 = vpack.c.b16 %v561, %v560
  %v692 = vpack.c.b16 %v563, %v562
  %v693 = vpack.c.b16 %v565, %v564
  %v694 = vpack.c.b16 %v567, %v566
  %v695 = vpack.c.b16 %v569, %v568
  %v696 = vpack.c.b16 %v571, %v570
  %v697 = vpack.c.b16 %v573, %v572
  %v698 = vpack.c.b16 %v575, %v574
  %v699 = vpack.c.b16 %v577, %v576
  %v700 = vpack.c.b16 %v579, %v578
  %v701 = vpack.c.b16 %v581, %v580
  %v702 = vpack.c.b16 %v583, %v582
  %v703 = vpack.c.b16 %v585, %v584
  %v704 = vpack.c.b16 %v587, %v586
  %v705 = vpack.c.b16 %v589, %v588
  %v706 = vpack.c.b16 %v591, %v590
  %v707 = vpack.c.b16 %v593, %v592
  %v708 = vpack.c.b16 %v595, %v594
  %v709 = vpack.c.b16 %v597, %v596
  %v710 = vpack.c.b16 %v599, %v598
  %v711 = vpack.c.b16 %v601, %v600
  %v712 = vpack.c.b16 %v603, %v602
  %v713 = vpack.c.b16 %v605, %v604
  %v714 = vpack.c.b16 %v607, %v606
  %v715 = vpack.c.b16 %v609, %v608
  %v716 = vpack.c.b16 %v611, %v610
  %v717 = vpack.c.b16 %v613, %v612
  %v718 = vpack.c.b16 %v615, %v614
  %v719 = vpack.c.b16 %v617, %v616
  %v720 = vpack.c.b16 %v619, %v618
  %v721 = vpack.c.b16 %v621, %v620
  %v722 = vpack.c.b16 %v623, %v622
  %v723 = vpack.c.b16 %v625, %v624
  %v838 = vunpack.c.l.b16 %v211
  %v839 = vunpack.c.l.b16 %v212
  %v840 = vunpack.c.l.b16 %v213
  %v841 = vunpack.c.l.b16 %v214
  %v842 = vunpack.c.l.b16 %v215
  %v843 = vunpack.c.l.b16 %v216
  %v844 = vunpack.c.l.b16 %v217
  %v845 = vunpack.c.l.b16 %v218
  %v846 = vunpack.c.l.b16 %v219
  %v847 = vunpack.c.l.b16 %v220
  %v848 = vunpack.c.l.b16 %v221
  %v849 = vunpack.c.l.b16 %v222
  %v850 = vunpack.c.l.b16 %v223
  %v851 = vunpack.c.l.b16 %v224
  %v852 = vunpack.c.l.b16 %v225
  %v853 = vunpack.c.l.b16 %v226
  %v854 = vpack.c.b16 %v839, %v838
  %v855 = vpack.c.b16 %v841, %v840
  %v856 = vpack.c.b16 %v843, %v842
  %v857 = vpack.c.b16 %v845, %v844
  %v858 = vpack.c.b16 %v847, %v846
  %v859 = vpack.c.b16 %v849, %v848
  %v860 = vpack.c.b16 %v851, %v850
  %v861 = vpack.c.b16 %v853, %v852
  %870 = vmatprep.subr.bf16.mxu0 0
  %871 = vmatpush1.bf16.msra.mxu0 %v854
  %872 = vmatprep.subr.bf16.mxu0 0
  %873 = vmatpush1.bf16.msra.mxu0 %v855
  %874 = vmatprep.subr.bf16.mxu0 0
  %875 = vmatpush1.bf16.msra.mxu0 %v856
  %876 = vmatprep.subr.bf16.mxu0 0
  %877 = vmatpush1.bf16.msra.mxu0 %v857
  %878 = vmatprep.subr.bf16.mxu0 0
  %879 = vmatpush1.bf16.msra.mxu0 %v858
  %880 = vmatprep.subr.bf16.mxu0 0
  %881 = vmatpush1.bf16.msra.mxu0 %v859
  %882 = vmatprep.subr.bf16.mxu0 0
  %883 = vmatpush1.bf16.msra.mxu0 %v860
  %884 = vmatprep.subr.bf16.mxu0 0
  %885 = vmatpush1.bf16.msra.mxu0 %v861
  %886 = vmatprep.subr.bf16.mxu0 0
  %887 = vmatpush1.bf16.msra.mxu0 0
  %888 = vmatprep.subr.bf16.mxu0 0
  %889 = vmatpush1.bf16.msra.mxu0 0
  %890 = vmatprep.subr.bf16.mxu0 0
  %891 = vmatpush1.bf16.msra.mxu0 0
  %892 = vmatprep.subr.bf16.mxu0 0
  %893 = vmatpush1.bf16.msra.mxu0 0
  %894 = vmatprep.subr.bf16.mxu0 0
  %895 = vmatpush1.bf16.msra.mxu0 0
  %896 = vmatprep.subr.bf16.mxu0 0
  %897 = vmatpush1.bf16.msra.mxu0 0
  %898 = vmatprep.subr.bf16.mxu0 0
  %899 = vmatpush1.bf16.msra.mxu0 0
  %900 = vmatprep.subr.bf16.mxu0 0
  %901 = vmatpush1.bf16.msra.mxu0 0
  %902 = vmatprep.mubr.bf16.mxu0 0
  %903 = vmatmul.mubr.bf16.gmra.mrb[0].mxu0 %v626
  %v904 = vpop.f32.mrb[0].mxu0
  %v905 = vadd.f32 %v232, %v904
  %v906 = vpop.f32.mrb[0].mxu0
  %v907 = vpop.f32.mrb[0].mxu0
  %v908 = vadd.f32 %v232, %v907
  %v909 = vpop.f32.mrb[0].mxu0
  %910 = vmatprep.mubr.bf16.mxu0 0
  %911 = vmatmul.mubr.bf16.gmra.mrb[0].mxu0 %v627
  %v912 = vpop.f32.mrb[0].mxu0
  %v913 = vadd.f32 %v232, %v912
  %v914 = vpop.f32.mrb[0].mxu0
  %v915 = vpop.f32.mrb[0].mxu0
  %v916 = vadd.f32 %v232, %v915
  %v917 = vpop.f32.mrb[0].mxu0
  %918 = vmatprep.mubr.bf16.mxu0 0
  %919 = vmatmul.mubr.bf16.gmra.mrb[0].mxu0 %v628
  %v920 = vpop.f32.mrb[0].mxu0
  %v921 = vadd.f32 %v232, %v920
  %v922 = vpop.f32.mrb[0].mxu0
  %v923 = vpop.f32.mrb[0].mxu0
  %v924 = vadd.f32 %v232, %v923
  %v925 = vpop.f32.mrb[0].mxu0
  %926 = vmatprep.mubr.bf16.mxu0 0
  %927 = vmatmul.mubr.bf16.gmra.mrb[0].mxu0 %v629
  %v928 = vpop.f32.mrb[0].mxu0
  %v929 = vadd.f32 %v232, %v928
  %v930 = vpop.f32.mrb[0].mxu0
  %v931 = vpop.f32.mrb[0].mxu0
  %v932 = vadd.f32 %v232, %v931
  %v933 = vpop.f32.mrb[0].mxu0
  %934 = vmatprep.mubr.bf16.mxu0 0
  %935 = vmatmul.mubr.bf16.gmra.mrb[0].mxu0 %v630
  %v936 = vpop.f32.mrb[0].mxu0
  %v937 = vadd.f32 %v232, %v936
  %v938 = vpop.f32.mrb[0].mxu0
  %v939 = vpop.f32.mrb[0].mxu0
  %v940 = vadd.f32 %v232, %v939
  %v941 = vpop.f32.mrb[0].mxu0
  %942 = vmatprep.mubr.bf16.mxu0 0
  %943 = vmatmul.mubr.bf16.gmra.mrb[0].mxu0 %v631
  %v944 = vpop.f32.mrb[0].mxu0
  %v945 = vadd.f32 %v232, %v944
  %v946 = vpop.f32.mrb[0].mxu0
  %v947 = vpop.f32.mrb[0].mxu0
  %v948 = vadd.f32 %v232, %v947
  %v949 = vpop.f32.mrb[0].mxu0
  %950 = vmatprep.mubr.bf16.mxu0 0
  %951 = vmatmul.mubr.bf16.gmra.mrb[0].mxu0 %v632
  %v952 = vpop.f32.mrb[0].mxu0
  %v953 = vadd.f32 %v232, %v952
  %v954 = vpop.f32.mrb[0].mxu0
  %v955 = vpop.f32.mrb[0].mxu0
  %v956 = vadd.f32 %v232, %v955
  %v957 = vpop.f32.mrb[0].mxu0
  %958 = vmatprep.mubr.bf16.mxu0 0
  %959 = vmatmul.mubr.bf16.gmra.mrb[0].mxu0 %v633
  %v960 = vpop.f32.mrb[0].mxu0
  %v961 = vadd.f32 %v232, %v960
  %v962 = vpop.f32.mrb[0].mxu0
  %v963 = vpop.f32.mrb[0].mxu0
  %v964 = vadd.f32 %v232, %v963
  %v965 = vpop.f32.mrb[0].mxu0
  %966 = vmatprep.mubr.bf16.mxu0 0
  %967 = vmatmul.mubr.bf16.gmra.mrb[0].mxu0 %v634
  %v968 = vpop.f32.mrb[0].mxu0
  %v969 = vadd.f32 %v232, %v968
  %v970 = vpop.f32.mrb[0].mxu0
  %v971 = vpop.f32.mrb[0].mxu0
  %v972 = vadd.f32 %v232, %v971
  %v973 = vpop.f32.mrb[0].mxu0
  %974 = vmatprep.mubr.bf16.mxu0 0
  %975 = vmatmul.mubr.bf16.gmra.mrb[0].mxu0 %v635
  %v976 = vpop.f32.mrb[0].mxu0
  %v977 = vadd.f32 %v232, %v976
  %v978 = vpop.f32.mrb[0].mxu0
  %v979 = vpop.f32.mrb[0].mxu0
  %v980 = vadd.f32 %v232, %v979
  %v981 = vpop.f32.mrb[0].mxu0
  %982 = vmatprep.mubr.bf16.mxu0 0
  %983 = vmatmul.mubr.bf16.gmra.mrb[0].mxu0 %v636
  %v984 = vpop.f32.mrb[0].mxu0
  %v985 = vadd.f32 %v232, %v984
  %v986 = vpop.f32.mrb[0].mxu0
  %v987 = vpop.f32.mrb[0].mxu0
  %v988 = vadd.f32 %v232, %v987
  %v989 = vpop.f32.mrb[0].mxu0
  %990 = vmatprep.mubr.bf16.mxu0 0
  %991 = vmatmul.mubr.bf16.gmra.mrb[0].mxu0 %v637
  %v992 = vpop.f32.mrb[0].mxu0
  %v993 = vadd.f32 %v232, %v992
  %v994 = vpop.f32.mrb[0].mxu0
  %v995 = vpop.f32.mrb[0].mxu0
  %v996 = vadd.f32 %v232, %v995
  %v997 = vpop.f32.mrb[0].mxu0
  %998 = vmatprep.mubr.bf16.mxu0 0
  %999 = vmatmul.mubr.bf16.gmra.mrb[0].mxu0 %v638
  %v1000 = vpop.f32.mrb[0].mxu0
  %v1001 = vadd.f32 %v232, %v1000
  %v1002 = vpop.f32.mrb[0].mxu0
  %v1003 = vpop.f32.mrb[0].mxu0
  %v1004 = vadd.f32 %v232, %v1003
  %v1005 = vpop.f32.mrb[0].mxu0
  %1006 = vmatprep.mubr.bf16.mxu0 0
  %1007 = vmatmul.mubr.bf16.gmra.mrb[0].mxu0 %v639
  %v1008 = vpop.f32.mrb[0].mxu0
  %v1009 = vadd.f32 %v232, %v1008
  %v1010 = vpop.f32.mrb[0].mxu0
  %v1011 = vpop.f32.mrb[0].mxu0
  %v1012 = vadd.f32 %v232, %v1011
  %v1013 = vpop.f32.mrb[0].mxu0
  %1014 = vmatprep.mubr.bf16.mxu0 0
  %1015 = vmatmul.mubr.bf16.gmra.mrb[0].mxu0 %v640
  %v1016 = vpop.f32.mrb[0].mxu0
  %v1017 = vadd.f32 %v232, %v1016
  %v1018 = vpop.f32.mrb[0].mxu0
  %v1019 = vpop.f32.mrb[0].mxu0
  %v1020 = vadd.f32 %v232, %v1019
  %v1021 = vpop.f32.mrb[0].mxu0
  %1022 = vmatprep.mubr.bf16.mxu0 0
  %1023 = vmatmul.mubr.bf16.gmra.mrb[0].mxu0 %v641
  %v1024 = vpop.f32.mrb[0].mxu0
  %v1025 = vadd.f32 %v232, %v1024
  %v1026 = vpop.f32.mrb[0].mxu0
  %v1027 = vpop.f32.mrb[0].mxu0
  %v1028 = vadd.f32 %v232, %v1027
  %v1029 = vpop.f32.mrb[0].mxu0
  %1030 = vmatprep.mubr.bf16.mxu0 0
  %1031 = vmatmul.mubr.bf16.gmra.mrb[0].mxu0 %v642
  %v1032 = vpop.f32.mrb[0].mxu0
  %v1033 = vadd.f32 %v232, %v1032
  %v1034 = vpop.f32.mrb[0].mxu0
  %v1035 = vpop.f32.mrb[0].mxu0
  %v1036 = vadd.f32 %v232, %v1035
  %v1037 = vpop.f32.mrb[0].mxu0
  %1038 = vmatprep.mubr.bf16.mxu0 0
  %1039 = vmatmul.mubr.bf16.gmra.mrb[0].mxu0 %v643
  %v1040 = vpop.f32.mrb[0].mxu0
  %v1041 = vadd.f32 %v232, %v1040
  %v1042 = vpop.f32.mrb[0].mxu0
  %v1043 = vpop.f32.mrb[0].mxu0
  %v1044 = vadd.f32 %v232, %v1043
  %v1045 = vpop.f32.mrb[0].mxu0
  %1046 = vmatprep.mubr.bf16.mxu0 0
  %1047 = vmatmul.mubr.bf16.gmra.mrb[0].mxu0 %v644
  %v1048 = vpop.f32.mrb[0].mxu0
  %v1049 = vadd.f32 %v232, %v1048
  %v1050 = vpop.f32.mrb[0].mxu0
  %v1051 = vpop.f32.mrb[0].mxu0
  %v1052 = vadd.f32 %v232, %v1051
  %v1053 = vpop.f32.mrb[0].mxu0
  %1054 = vmatprep.mubr.bf16.mxu0 0
  %1055 = vmatmul.mubr.bf16.gmra.mrb[0].mxu0 %v645
  %v1056 = vpop.f32.mrb[0].mxu0
  %v1057 = vadd.f32 %v232, %v1056
  %v1058 = vpop.f32.mrb[0].mxu0
  %v1059 = vpop.f32.mrb[0].mxu0
  %v1060 = vadd.f32 %v232, %v1059
  %v1061 = vpop.f32.mrb[0].mxu0
  %1062 = vmatprep.mubr.bf16.mxu0 0
  %1063 = vmatmul.mubr.bf16.gmra.mrb[0].mxu0 %v646
  %v1064 = vpop.f32.mrb[0].mxu0
  %v1065 = vadd.f32 %v232, %v1064
  %v1066 = vpop.f32.mrb[0].mxu0
  %v1067 = vpop.f32.mrb[0].mxu0
  %v1068 = vadd.f32 %v232, %v1067
  %v1069 = vpop.f32.mrb[0].mxu0
  %1070 = vmatprep.mubr.bf16.mxu0 0
  %1071 = vmatmul.mubr.bf16.gmra.mrb[0].mxu0 %v647
  %v1072 = vpop.f32.mrb[0].mxu0
  %v1073 = vadd.f32 %v232, %v1072
  %v1074 = vpop.f32.mrb[0].mxu0
  %v1075 = vpop.f32.mrb[0].mxu0
  %v1076 = vadd.f32 %v232, %v1075
  %v1077 = vpop.f32.mrb[0].mxu0
  %1078 = vmatprep.mubr.bf16.mxu0 0
  %1079 = vmatmul.mubr.bf16.gmra.mrb[0].mxu0 %v648
  %v1080 = vpop.f32.mrb[0].mxu0
  %v1081 = vadd.f32 %v232, %v1080
  %v1082 = vpop.f32.mrb[0].mxu0
  %v1083 = vpop.f32.mrb[0].mxu0
  %v1084 = vadd.f32 %v232, %v1083
  %v1085 = vpop.f32.mrb[0].mxu0
  %1086 = vmatprep.mubr.bf16.mxu0 0
  %1087 = vmatmul.mubr.bf16.gmra.mrb[0].mxu0 %v649
  %v1088 = vpop.f32.mrb[0].mxu0
  %v1089 = vadd.f32 %v232, %v1088
  %v1090 = vpop.f32.mrb[0].mxu0
  %v1091 = vpop.f32.mrb[0].mxu0
  %v1092 = vadd.f32 %v232, %v1091
  %v1093 = vpop.f32.mrb[0].mxu0
  %1094 = vmatprep.mubr.bf16.mxu0 0
  %1095 = vmatmul.mubr.bf16.gmra.mrb[0].mxu0 %v650
  %v1096 = vpop.f32.mrb[0].mxu0
  %v1097 = vadd.f32 %v232, %v1096
  %v1098 = vpop.f32.mrb[0].mxu0
  %v1099 = vpop.f32.mrb[0].mxu0
  %v1100 = vadd.f32 %v232, %v1099
  %v1101 = vpop.f32.mrb[0].mxu0
  %1102 = vmatprep.mubr.bf16.mxu0 0
  %1103 = vmatmul.mubr.bf16.gmra.mrb[0].mxu0 %v651
  %v1104 = vpop.f32.mrb[0].mxu0
  %v1105 = vadd.f32 %v232, %v1104
  %v1106 = vpop.f32.mrb[0].mxu0
  %v1107 = vpop.f32.mrb[0].mxu0
  %v1108 = vadd.f32 %v232, %v1107
  %v1109 = vpop.f32.mrb[0].mxu0
  %1110 = vmatprep.mubr.bf16.mxu0 0
  %1111 = vmatmul.mubr.bf16.gmra.mrb[0].mxu0 %v652
  %v1112 = vpop.f32.mrb[0].mxu0
  %v1113 = vadd.f32 %v232, %v1112
  %v1114 = vpop.f32.mrb[0].mxu0
  %v1115 = vpop.f32.mrb[0].mxu0
  %v1116 = vadd.f32 %v232, %v1115
  %v1117 = vpop.f32.mrb[0].mxu0
  %1118 = vmatprep.mubr.bf16.mxu0 0
  %1119 = vmatmul.mubr.bf16.gmra.mrb[0].mxu0 %v653
  %v1120 = vpop.f32.mrb[0].mxu0
  %v1121 = vadd.f32 %v232, %v1120
  %v1122 = vpop.f32.mrb[0].mxu0
  %v1123 = vpop.f32.mrb[0].mxu0
  %v1124 = vadd.f32 %v232, %v1123
  %v1125 = vpop.f32.mrb[0].mxu0
  %1126 = vmatprep.mubr.bf16.mxu0 0
  %1127 = vmatmul.mubr.bf16.gmra.mrb[0].mxu0 %v654
  %v1128 = vpop.f32.mrb[0].mxu0
  %v1129 = vadd.f32 %v232, %v1128
  %v1130 = vpop.f32.mrb[0].mxu0
  %v1131 = vpop.f32.mrb[0].mxu0
  %v1132 = vadd.f32 %v232, %v1131
  %v1133 = vpop.f32.mrb[0].mxu0
  %1134 = vmatprep.mubr.bf16.mxu0 0
  %1135 = vmatmul.mubr.bf16.gmra.mrb[0].mxu0 %v655
  %v1136 = vpop.f32.mrb[0].mxu0
  %v1137 = vadd.f32 %v232, %v1136
  %v1138 = vpop.f32.mrb[0].mxu0
  %v1139 = vpop.f32.mrb[0].mxu0
  %v1140 = vadd.f32 %v232, %v1139
  %v1141 = vpop.f32.mrb[0].mxu0
  %1142 = vmatprep.mubr.bf16.mxu0 0
  %1143 = vmatmul.mubr.bf16.gmra.mrb[0].mxu0 %v656
  %v1144 = vpop.f32.mrb[0].mxu0
  %v1145 = vadd.f32 %v232, %v1144
  %v1146 = vpop.f32.mrb[0].mxu0
  %v1147 = vpop.f32.mrb[0].mxu0
  %v1148 = vadd.f32 %v232, %v1147
  %v1149 = vpop.f32.mrb[0].mxu0
  %1150 = vmatprep.mubr.bf16.mxu0 0
  %1151 = vmatmul.mubr.bf16.gmra.mrb[0].mxu0 %v657
  %v1152 = vpop.f32.mrb[0].mxu0
  %v1153 = vadd.f32 %v232, %v1152
  %v1154 = vpop.f32.mrb[0].mxu0
  %v1155 = vpop.f32.mrb[0].mxu0
  %v1156 = vadd.f32 %v232, %v1155
  %v1157 = vpop.f32.mrb[0].mxu0
  %1158 = vmatprep.mubr.bf16.mxu0 0
  %1159 = vmatmul.mubr.bf16.gmra.mrb[0].mxu0 %v658
  %v1160 = vpop.f32.mrb[0].mxu0
  %v1161 = vadd.f32 %v232, %v1160
  %v1162 = vpop.f32.mrb[0].mxu0
  %v1163 = vpop.f32.mrb[0].mxu0
  %v1164 = vadd.f32 %v232, %v1163
  %v1165 = vpop.f32.mrb[0].mxu0
  %1166 = vmatprep.mubr.bf16.mxu0 0
  %1167 = vmatmul.mubr.bf16.gmra.mrb[0].mxu0 %v659
  %v1168 = vpop.f32.mrb[0].mxu0
  %v1169 = vadd.f32 %v232, %v1168
  %v1170 = vpop.f32.mrb[0].mxu0
  %v1171 = vpop.f32.mrb[0].mxu0
  %v1172 = vadd.f32 %v232, %v1171
  %v1173 = vpop.f32.mrb[0].mxu0
  %1174 = vmatprep.mubr.bf16.mxu0 0
  %1175 = vmatmul.mubr.bf16.gmra.mrb[0].mxu0 %v660
  %v1176 = vpop.f32.mrb[0].mxu0
  %v1177 = vadd.f32 %v232, %v1176
  %v1178 = vpop.f32.mrb[0].mxu0
  %v1179 = vpop.f32.mrb[0].mxu0
  %v1180 = vadd.f32 %v232, %v1179
  %v1181 = vpop.f32.mrb[0].mxu0
  %1182 = vmatprep.mubr.bf16.mxu0 0
  %1183 = vmatmul.mubr.bf16.gmra.mrb[0].mxu0 %v661
  %v1184 = vpop.f32.mrb[0].mxu0
  %v1185 = vadd.f32 %v232, %v1184
  %v1186 = vpop.f32.mrb[0].mxu0
  %v1187 = vpop.f32.mrb[0].mxu0
  %v1188 = vadd.f32 %v232, %v1187
  %v1189 = vpop.f32.mrb[0].mxu0
  %1190 = vmatprep.mubr.bf16.mxu0 0
  %1191 = vmatmul.mubr.bf16.gmra.mrb[0].mxu0 %v662
  %v1192 = vpop.f32.mrb[0].mxu0
  %v1193 = vadd.f32 %v232, %v1192
  %v1194 = vpop.f32.mrb[0].mxu0
  %v1195 = vpop.f32.mrb[0].mxu0
  %v1196 = vadd.f32 %v232, %v1195
  %v1197 = vpop.f32.mrb[0].mxu0
  %1198 = vmatprep.mubr.bf16.mxu0 0
  %1199 = vmatmul.mubr.bf16.gmra.mrb[0].mxu0 %v663
  %v1200 = vpop.f32.mrb[0].mxu0
  %v1201 = vadd.f32 %v232, %v1200
  %v1202 = vpop.f32.mrb[0].mxu0
  %v1203 = vpop.f32.mrb[0].mxu0
  %v1204 = vadd.f32 %v232, %v1203
  %v1205 = vpop.f32.mrb[0].mxu0
  %1206 = vmatprep.mubr.bf16.mxu0 0
  %1207 = vmatmul.mubr.bf16.gmra.mrb[0].mxu0 %v664
  %v1208 = vpop.f32.mrb[0].mxu0
  %v1209 = vadd.f32 %v232, %v1208
  %v1210 = vpop.f32.mrb[0].mxu0
  %v1211 = vpop.f32.mrb[0].mxu0
  %v1212 = vadd.f32 %v232, %v1211
  %v1213 = vpop.f32.mrb[0].mxu0
  %1214 = vmatprep.mubr.bf16.mxu0 0
  %1215 = vmatmul.mubr.bf16.gmra.mrb[0].mxu0 %v665
  %v1216 = vpop.f32.mrb[0].mxu0
  %v1217 = vadd.f32 %v232, %v1216
  %v1218 = vpop.f32.mrb[0].mxu0
  %v1219 = vpop.f32.mrb[0].mxu0
  %v1220 = vadd.f32 %v232, %v1219
  %v1221 = vpop.f32.mrb[0].mxu0
  %1222 = vmatprep.mubr.bf16.mxu0 0
  %1223 = vmatmul.mubr.bf16.gmra.mrb[0].mxu0 %v666
  %v1224 = vpop.f32.mrb[0].mxu0
  %v1225 = vadd.f32 %v232, %v1224
  %v1226 = vpop.f32.mrb[0].mxu0
  %v1227 = vpop.f32.mrb[0].mxu0
  %v1228 = vadd.f32 %v232, %v1227
  %v1229 = vpop.f32.mrb[0].mxu0
  %1230 = vmatprep.mubr.bf16.mxu0 0
  %1231 = vmatmul.mubr.bf16.gmra.mrb[0].mxu0 %v667
  %v1232 = vpop.f32.mrb[0].mxu0
  %v1233 = vadd.f32 %v232, %v1232
  %v1234 = vpop.f32.mrb[0].mxu0
  %v1235 = vpop.f32.mrb[0].mxu0
  %v1236 = vadd.f32 %v232, %v1235
  %v1237 = vpop.f32.mrb[0].mxu0
  %1238 = vmatprep.mubr.bf16.mxu0 0
  %1239 = vmatmul.mubr.bf16.gmra.mrb[0].mxu0 %v668
  %v1240 = vpop.f32.mrb[0].mxu0
  %v1241 = vadd.f32 %v232, %v1240
  %v1242 = vpop.f32.mrb[0].mxu0
  %v1243 = vpop.f32.mrb[0].mxu0
  %v1244 = vadd.f32 %v232, %v1243
  %v1245 = vpop.f32.mrb[0].mxu0
  %1246 = vmatprep.mubr.bf16.mxu0 0
  %1247 = vmatmul.mubr.bf16.gmra.mrb[0].mxu0 %v669
  %v1248 = vpop.f32.mrb[0].mxu0
  %v1249 = vadd.f32 %v232, %v1248
  %v1250 = vpop.f32.mrb[0].mxu0
  %v1251 = vpop.f32.mrb[0].mxu0
  %v1252 = vadd.f32 %v232, %v1251
  %v1253 = vpop.f32.mrb[0].mxu0
  %1254 = vmatprep.mubr.bf16.mxu0 0
  %1255 = vmatmul.mubr.bf16.gmra.mrb[0].mxu0 %v670
  %v1256 = vpop.f32.mrb[0].mxu0
  %v1257 = vadd.f32 %v232, %v1256
  %v1258 = vpop.f32.mrb[0].mxu0
  %v1259 = vpop.f32.mrb[0].mxu0
  %v1260 = vadd.f32 %v232, %v1259
  %v1261 = vpop.f32.mrb[0].mxu0
  %1262 = vmatprep.mubr.bf16.mxu0 0
  %1263 = vmatmul.mubr.bf16.gmra.mrb[0].mxu0 %v671
  %v1264 = vpop.f32.mrb[0].mxu0
  %v1265 = vadd.f32 %v232, %v1264
  %v1266 = vpop.f32.mrb[0].mxu0
  %v1267 = vpop.f32.mrb[0].mxu0
  %v1268 = vadd.f32 %v232, %v1267
  %v1269 = vpop.f32.mrb[0].mxu0
  %1270 = vmatprep.mubr.bf16.mxu0 0
  %1271 = vmatmul.mubr.bf16.gmra.mrb[0].mxu0 %v672
  %v1272 = vpop.f32.mrb[0].mxu0
  %v1273 = vadd.f32 %v232, %v1272
  %v1274 = vpop.f32.mrb[0].mxu0
  %v1275 = vpop.f32.mrb[0].mxu0
  %v1276 = vadd.f32 %v232, %v1275
  %v1277 = vpop.f32.mrb[0].mxu0
  %1278 = vmatprep.mubr.bf16.mxu0 0
  %1279 = vmatmul.mubr.bf16.gmra.mrb[0].mxu0 %v673
  %v1280 = vpop.f32.mrb[0].mxu0
  %v1281 = vadd.f32 %v232, %v1280
  %v1282 = vpop.f32.mrb[0].mxu0
  %v1283 = vpop.f32.mrb[0].mxu0
  %v1284 = vadd.f32 %v232, %v1283
  %v1285 = vpop.f32.mrb[0].mxu0
  %1286 = vmatprep.mubr.bf16.mxu0 0
  %1287 = vmatmul.mubr.bf16.gmra.mrb[0].mxu0 %v674
  %v1288 = vpop.f32.mrb[0].mxu0
  %v1289 = vadd.f32 %v232, %v1288
  %v1290 = vpop.f32.mrb[0].mxu0
  %v1291 = vpop.f32.mrb[0].mxu0
  %v1292 = vadd.f32 %v232, %v1291
  %v1293 = vpop.f32.mrb[0].mxu0
  %1294 = vmatprep.mubr.bf16.mxu0 0
  %1295 = vmatmul.mubr.bf16.gmra.mrb[0].mxu0 %v675
  %v1296 = vpop.f32.mrb[0].mxu0
  %v1297 = vadd.f32 %v232, %v1296
  %v1298 = vpop.f32.mrb[0].mxu0
  %v1299 = vpop.f32.mrb[0].mxu0
  %v1300 = vadd.f32 %v232, %v1299
  %v1301 = vpop.f32.mrb[0].mxu0
  %1302 = vmatprep.mubr.bf16.mxu0 0
  %1303 = vmatmul.mubr.bf16.gmra.mrb[0].mxu0 %v676
  %v1304 = vpop.f32.mrb[0].mxu0
  %v1305 = vadd.f32 %v232, %v1304
  %v1306 = vpop.f32.mrb[0].mxu0
  %v1307 = vpop.f32.mrb[0].mxu0
  %v1308 = vadd.f32 %v232, %v1307
  %v1309 = vpop.f32.mrb[0].mxu0
  %1310 = vmatprep.mubr.bf16.mxu0 0
  %1311 = vmatmul.mubr.bf16.gmra.mrb[0].mxu0 %v677
  %v1312 = vpop.f32.mrb[0].mxu0
  %v1313 = vadd.f32 %v232, %v1312
  %v1314 = vpop.f32.mrb[0].mxu0
  %v1315 = vpop.f32.mrb[0].mxu0
  %v1316 = vadd.f32 %v232, %v1315
  %v1317 = vpop.f32.mrb[0].mxu0
  %1318 = vmatprep.mubr.bf16.mxu0 0
  %1319 = vmatmul.mubr.bf16.gmra.mrb[0].mxu0 %v678
  %v1320 = vpop.f32.mrb[0].mxu0
  %v1321 = vadd.f32 %v232, %v1320
  %v1322 = vpop.f32.mrb[0].mxu0
  %v1323 = vpop.f32.mrb[0].mxu0
  %v1324 = vadd.f32 %v232, %v1323
  %v1325 = vpop.f32.mrb[0].mxu0
  %1326 = vmatprep.mubr.bf16.mxu0 0
  %1327 = vmatmul.mubr.bf16.gmra.mrb[0].mxu0 %v679
  %v1328 = vpop.f32.mrb[0].mxu0
  %v1329 = vadd.f32 %v232, %v1328
  %v1330 = vpop.f32.mrb[0].mxu0
  %v1331 = vpop.f32.mrb[0].mxu0
  %v1332 = vadd.f32 %v232, %v1331
  %v1333 = vpop.f32.mrb[0].mxu0
  %1334 = vmatprep.mubr.bf16.mxu0 0
  %1335 = vmatmul.mubr.bf16.gmra.mrb[0].mxu0 %v680
  %v1336 = vpop.f32.mrb[0].mxu0
  %v1337 = vadd.f32 %v232, %v1336
  %v1338 = vpop.f32.mrb[0].mxu0
  %v1339 = vpop.f32.mrb[0].mxu0
  %v1340 = vadd.f32 %v232, %v1339
  %v1341 = vpop.f32.mrb[0].mxu0
  %1342 = vmatprep.mubr.bf16.mxu0 0
  %1343 = vmatmul.mubr.bf16.gmra.mrb[0].mxu0 %v681
  %v1344 = vpop.f32.mrb[0].mxu0
  %v1345 = vadd.f32 %v232, %v1344
  %v1346 = vpop.f32.mrb[0].mxu0
  %v1347 = vpop.f32.mrb[0].mxu0
  %v1348 = vadd.f32 %v232, %v1347
  %v1349 = vpop.f32.mrb[0].mxu0
  %1350 = vmatprep.mubr.bf16.mxu0 0
  %1351 = vmatmul.mubr.bf16.gmra.mrb[0].mxu0 %v682
  %v1352 = vpop.f32.mrb[0].mxu0
  %v1353 = vadd.f32 %v232, %v1352
  %v1354 = vpop.f32.mrb[0].mxu0
  %v1355 = vpop.f32.mrb[0].mxu0
  %v1356 = vadd.f32 %v232, %v1355
  %v1357 = vpop.f32.mrb[0].mxu0
  %1358 = vmatprep.mubr.bf16.mxu0 0
  %1359 = vmatmul.mubr.bf16.gmra.mrb[0].mxu0 %v683
  %v1360 = vpop.f32.mrb[0].mxu0
  %v1361 = vadd.f32 %v232, %v1360
  %v1362 = vpop.f32.mrb[0].mxu0
  %v1363 = vpop.f32.mrb[0].mxu0
  %v1364 = vadd.f32 %v232, %v1363
  %v1365 = vpop.f32.mrb[0].mxu0
  %1366 = vmatprep.mubr.bf16.mxu0 0
  %1367 = vmatmul.mubr.bf16.gmra.mrb[0].mxu0 %v684
  %v1368 = vpop.f32.mrb[0].mxu0
  %v1369 = vadd.f32 %v232, %v1368
  %v1370 = vpop.f32.mrb[0].mxu0
  %v1371 = vpop.f32.mrb[0].mxu0
  %v1372 = vadd.f32 %v232, %v1371
  %v1373 = vpop.f32.mrb[0].mxu0
  %1374 = vmatprep.mubr.bf16.mxu0 0
  %1375 = vmatmul.mubr.bf16.gmra.mrb[0].mxu0 %v685
  %v1376 = vpop.f32.mrb[0].mxu0
  %v1377 = vadd.f32 %v232, %v1376
  %v1378 = vpop.f32.mrb[0].mxu0
  %v1379 = vpop.f32.mrb[0].mxu0
  %v1380 = vadd.f32 %v232, %v1379
  %v1381 = vpop.f32.mrb[0].mxu0
  %1382 = vmatprep.mubr.bf16.mxu0 0
  %1383 = vmatmul.mubr.bf16.gmra.mrb[0].mxu0 %v686
  %v1384 = vpop.f32.mrb[0].mxu0
  %v1385 = vadd.f32 %v232, %v1384
  %v1386 = vpop.f32.mrb[0].mxu0
  %v1387 = vpop.f32.mrb[0].mxu0
  %v1388 = vadd.f32 %v232, %v1387
  %v1389 = vpop.f32.mrb[0].mxu0
  %1390 = vmatprep.mubr.bf16.mxu0 0
  %1391 = vmatmul.mubr.bf16.gmra.mrb[0].mxu0 %v687
  %v1392 = vpop.f32.mrb[0].mxu0
  %v1393 = vadd.f32 %v232, %v1392
  %v1394 = vpop.f32.mrb[0].mxu0
  %v1395 = vpop.f32.mrb[0].mxu0
  %v1396 = vadd.f32 %v232, %v1395
  %v1397 = vpop.f32.mrb[0].mxu0
  %1398 = vmatprep.mubr.bf16.mxu0 0
  %1399 = vmatmul.mubr.bf16.gmra.mrb[0].mxu0 %v688
  %v1400 = vpop.f32.mrb[0].mxu0
  %v1401 = vadd.f32 %v232, %v1400
  %v1402 = vpop.f32.mrb[0].mxu0
  %v1403 = vpop.f32.mrb[0].mxu0
  %v1404 = vadd.f32 %v232, %v1403
  %v1405 = vpop.f32.mrb[0].mxu0
  %1406 = vmatprep.mubr.bf16.mxu0 0
  %1407 = vmatmul.mubr.bf16.gmra.mrb[0].mxu0 %v689
  %v1408 = vpop.f32.mrb[0].mxu0
  %v1409 = vadd.f32 %v232, %v1408
  %v1410 = vpop.f32.mrb[0].mxu0
  %v1411 = vpop.f32.mrb[0].mxu0
  %v1412 = vadd.f32 %v232, %v1411
  %v1413 = vpop.f32.mrb[0].mxu0
  %1414 = vmatprep.mubr.bf16.mxu0 0
  %1415 = vmatmul.mubr.bf16.gmra.mrb[0].mxu0 %v690
  %v1416 = vpop.f32.mrb[0].mxu0
  %v1417 = vadd.f32 %v232, %v1416
  %v1418 = vpop.f32.mrb[0].mxu0
  %v1419 = vpop.f32.mrb[0].mxu0
  %v1420 = vadd.f32 %v232, %v1419
  %v1421 = vpop.f32.mrb[0].mxu0
  %1422 = vmatprep.mubr.bf16.mxu0 0
  %1423 = vmatmul.mubr.bf16.gmra.mrb[0].mxu0 %v691
  %v1424 = vpop.f32.mrb[0].mxu0
  %v1425 = vadd.f32 %v232, %v1424
  %v1426 = vpop.f32.mrb[0].mxu0
  %v1427 = vpop.f32.mrb[0].mxu0
  %v1428 = vadd.f32 %v232, %v1427
  %v1429 = vpop.f32.mrb[0].mxu0
  %1430 = vmatprep.mubr.bf16.mxu0 0
  %1431 = vmatmul.mubr.bf16.gmra.mrb[0].mxu0 %v692
  %v1432 = vpop.f32.mrb[0].mxu0
  %v1433 = vadd.f32 %v232, %v1432
  %v1434 = vpop.f32.mrb[0].mxu0
  %v1435 = vpop.f32.mrb[0].mxu0
  %v1436 = vadd.f32 %v232, %v1435
  %v1437 = vpop.f32.mrb[0].mxu0
  %1438 = vmatprep.mubr.bf16.mxu0 0
  %1439 = vmatmul.mubr.bf16.gmra.mrb[0].mxu0 %v693
  %v1440 = vpop.f32.mrb[0].mxu0
  %v1441 = vadd.f32 %v232, %v1440
  %v1442 = vpop.f32.mrb[0].mxu0
  %v1443 = vpop.f32.mrb[0].mxu0
  %v1444 = vadd.f32 %v232, %v1443
  %v1445 = vpop.f32.mrb[0].mxu0
  %1446 = vmatprep.mubr.bf16.mxu0 0
  %1447 = vmatmul.mubr.bf16.gmra.mrb[0].mxu0 %v694
  %v1448 = vpop.f32.mrb[0].mxu0
  %v1449 = vadd.f32 %v232, %v1448
  %v1450 = vpop.f32.mrb[0].mxu0
  %v1451 = vpop.f32.mrb[0].mxu0
  %v1452 = vadd.f32 %v232, %v1451
  %v1453 = vpop.f32.mrb[0].mxu0
  %1454 = vmatprep.mubr.bf16.mxu0 0
  %1455 = vmatmul.mubr.bf16.gmra.mrb[0].mxu0 %v695
  %v1456 = vpop.f32.mrb[0].mxu0
  %v1457 = vadd.f32 %v232, %v1456
  %v1458 = vpop.f32.mrb[0].mxu0
  %v1459 = vpop.f32.mrb[0].mxu0
  %v1460 = vadd.f32 %v232, %v1459
  %v1461 = vpop.f32.mrb[0].mxu0
  %1462 = vmatprep.mubr.bf16.mxu0 0
  %1463 = vmatmul.mubr.bf16.gmra.mrb[0].mxu0 %v696
  %v1464 = vpop.f32.mrb[0].mxu0
  %v1465 = vadd.f32 %v232, %v1464
  %v1466 = vpop.f32.mrb[0].mxu0
  %v1467 = vpop.f32.mrb[0].mxu0
  %v1468 = vadd.f32 %v232, %v1467
  %v1469 = vpop.f32.mrb[0].mxu0
  %1470 = vmatprep.mubr.bf16.mxu0 0
  %1471 = vmatmul.mubr.bf16.gmra.mrb[0].mxu0 %v697
  %v1472 = vpop.f32.mrb[0].mxu0
  %v1473 = vadd.f32 %v232, %v1472
  %v1474 = vpop.f32.mrb[0].mxu0
  %v1475 = vpop.f32.mrb[0].mxu0
  %v1476 = vadd.f32 %v232, %v1475
  %v1477 = vpop.f32.mrb[0].mxu0
  %1478 = vmatprep.mubr.bf16.mxu0 0
  %1479 = vmatmul.mubr.bf16.gmra.mrb[0].mxu0 %v698
  %v1480 = vpop.f32.mrb[0].mxu0
  %v1481 = vadd.f32 %v232, %v1480
  %v1482 = vpop.f32.mrb[0].mxu0
  %v1483 = vpop.f32.mrb[0].mxu0
  %v1484 = vadd.f32 %v232, %v1483
  %v1485 = vpop.f32.mrb[0].mxu0
  %1486 = vmatprep.mubr.bf16.mxu0 0
  %1487 = vmatmul.mubr.bf16.gmra.mrb[0].mxu0 %v699
  %v1488 = vpop.f32.mrb[0].mxu0
  %v1489 = vadd.f32 %v232, %v1488
  %v1490 = vpop.f32.mrb[0].mxu0
  %v1491 = vpop.f32.mrb[0].mxu0
  %v1492 = vadd.f32 %v232, %v1491
  %v1493 = vpop.f32.mrb[0].mxu0
  %1494 = vmatprep.mubr.bf16.mxu0 0
  %1495 = vmatmul.mubr.bf16.gmra.mrb[0].mxu0 %v700
  %v1496 = vpop.f32.mrb[0].mxu0
  %v1497 = vadd.f32 %v232, %v1496
  %v1498 = vpop.f32.mrb[0].mxu0
  %v1499 = vpop.f32.mrb[0].mxu0
  %v1500 = vadd.f32 %v232, %v1499
  %v1501 = vpop.f32.mrb[0].mxu0
  %1502 = vmatprep.mubr.bf16.mxu0 0
  %1503 = vmatmul.mubr.bf16.gmra.mrb[0].mxu0 %v701
  %v1504 = vpop.f32.mrb[0].mxu0
  %v1505 = vadd.f32 %v232, %v1504
  %v1506 = vpop.f32.mrb[0].mxu0
  %v1507 = vpop.f32.mrb[0].mxu0
  %v1508 = vadd.f32 %v232, %v1507
  %v1509 = vpop.f32.mrb[0].mxu0
  %1510 = vmatprep.mubr.bf16.mxu0 0
  %1511 = vmatmul.mubr.bf16.gmra.mrb[0].mxu0 %v702
  %v1512 = vpop.f32.mrb[0].mxu0
  %v1513 = vadd.f32 %v232, %v1512
  %v1514 = vpop.f32.mrb[0].mxu0
  %v1515 = vpop.f32.mrb[0].mxu0
  %v1516 = vadd.f32 %v232, %v1515
  %v1517 = vpop.f32.mrb[0].mxu0
  %1518 = vmatprep.mubr.bf16.mxu0 0
  %1519 = vmatmul.mubr.bf16.gmra.mrb[0].mxu0 %v703
  %v1520 = vpop.f32.mrb[0].mxu0
  %v1521 = vadd.f32 %v232, %v1520
  %v1522 = vpop.f32.mrb[0].mxu0
  %v1523 = vpop.f32.mrb[0].mxu0
  %v1524 = vadd.f32 %v232, %v1523
  %v1525 = vpop.f32.mrb[0].mxu0
  %1526 = vmatprep.mubr.bf16.mxu0 0
  %1527 = vmatmul.mubr.bf16.gmra.mrb[0].mxu0 %v704
  %v1528 = vpop.f32.mrb[0].mxu0
  %v1529 = vadd.f32 %v232, %v1528
  %v1530 = vpop.f32.mrb[0].mxu0
  %v1531 = vpop.f32.mrb[0].mxu0
  %v1532 = vadd.f32 %v232, %v1531
  %v1533 = vpop.f32.mrb[0].mxu0
  %1534 = vmatprep.mubr.bf16.mxu0 0
  %1535 = vmatmul.mubr.bf16.gmra.mrb[0].mxu0 %v705
  %v1536 = vpop.f32.mrb[0].mxu0
  %v1537 = vadd.f32 %v232, %v1536
  %v1538 = vpop.f32.mrb[0].mxu0
  %v1539 = vpop.f32.mrb[0].mxu0
  %v1540 = vadd.f32 %v232, %v1539
  %v1541 = vpop.f32.mrb[0].mxu0
  %1542 = vmatprep.mubr.bf16.mxu0 0
  %1543 = vmatmul.mubr.bf16.gmra.mrb[0].mxu0 %v706
  %v1544 = vpop.f32.mrb[0].mxu0
  %v1545 = vadd.f32 %v232, %v1544
  %v1546 = vpop.f32.mrb[0].mxu0
  %v1547 = vpop.f32.mrb[0].mxu0
  %v1548 = vadd.f32 %v232, %v1547
  %v1549 = vpop.f32.mrb[0].mxu0
  %1550 = vmatprep.mubr.bf16.mxu0 0
  %1551 = vmatmul.mubr.bf16.gmra.mrb[0].mxu0 %v707
  %v1552 = vpop.f32.mrb[0].mxu0
  %v1553 = vadd.f32 %v232, %v1552
  %v1554 = vpop.f32.mrb[0].mxu0
  %v1555 = vpop.f32.mrb[0].mxu0
  %v1556 = vadd.f32 %v232, %v1555
  %v1557 = vpop.f32.mrb[0].mxu0
  %1558 = vmatprep.mubr.bf16.mxu0 0
  %1559 = vmatmul.mubr.bf16.gmra.mrb[0].mxu0 %v708
  %v1560 = vpop.f32.mrb[0].mxu0
  %v1561 = vadd.f32 %v232, %v1560
  %v1562 = vpop.f32.mrb[0].mxu0
  %v1563 = vpop.f32.mrb[0].mxu0
  %v1564 = vadd.f32 %v232, %v1563
  %v1565 = vpop.f32.mrb[0].mxu0
  %1566 = vmatprep.mubr.bf16.mxu0 0
  %1567 = vmatmul.mubr.bf16.gmra.mrb[0].mxu0 %v709
  %v1568 = vpop.f32.mrb[0].mxu0
  %v1569 = vadd.f32 %v232, %v1568
  %v1570 = vpop.f32.mrb[0].mxu0
  %v1571 = vpop.f32.mrb[0].mxu0
  %v1572 = vadd.f32 %v232, %v1571
  %v1573 = vpop.f32.mrb[0].mxu0
  %1574 = vmatprep.mubr.bf16.mxu0 0
  %1575 = vmatmul.mubr.bf16.gmra.mrb[0].mxu0 %v710
  %v1576 = vpop.f32.mrb[0].mxu0
  %v1577 = vadd.f32 %v232, %v1576
  %v1578 = vpop.f32.mrb[0].mxu0
  %v1579 = vpop.f32.mrb[0].mxu0
  %v1580 = vadd.f32 %v232, %v1579
  %v1581 = vpop.f32.mrb[0].mxu0
  %1582 = vmatprep.mubr.bf16.mxu0 0
  %1583 = vmatmul.mubr.bf16.gmra.mrb[0].mxu0 %v711
  %v1584 = vpop.f32.mrb[0].mxu0
  %v1585 = vadd.f32 %v232, %v1584
  %v1586 = vpop.f32.mrb[0].mxu0
  %v1587 = vpop.f32.mrb[0].mxu0
  %v1588 = vadd.f32 %v232, %v1587
  %v1589 = vpop.f32.mrb[0].mxu0
  %1590 = vmatprep.mubr.bf16.mxu0 0
  %1591 = vmatmul.mubr.bf16.gmra.mrb[0].mxu0 %v712
  %v1592 = vpop.f32.mrb[0].mxu0
  %v1593 = vadd.f32 %v232, %v1592
  %v1594 = vpop.f32.mrb[0].mxu0
  %v1595 = vpop.f32.mrb[0].mxu0
  %v1596 = vadd.f32 %v232, %v1595
  %v1597 = vpop.f32.mrb[0].mxu0
  %1598 = vmatprep.mubr.bf16.mxu0 0
  %1599 = vmatmul.mubr.bf16.gmra.mrb[0].mxu0 %v713
  %v1600 = vpop.f32.mrb[0].mxu0
  %v1601 = vadd.f32 %v232, %v1600
  %v1602 = vpop.f32.mrb[0].mxu0
  %v1603 = vpop.f32.mrb[0].mxu0
  %v1604 = vadd.f32 %v232, %v1603
  %v1605 = vpop.f32.mrb[0].mxu0
  %1606 = vmatprep.mubr.bf16.mxu0 0
  %1607 = vmatmul.mubr.bf16.gmra.mrb[0].mxu0 %v714
  %v1608 = vpop.f32.mrb[0].mxu0
  %v1609 = vadd.f32 %v232, %v1608
  %v1610 = vpop.f32.mrb[0].mxu0
  %v1611 = vpop.f32.mrb[0].mxu0
  %v1612 = vadd.f32 %v232, %v1611
  %v1613 = vpop.f32.mrb[0].mxu0
  %1614 = vmatprep.mubr.bf16.mxu0 0
  %1615 = vmatmul.mubr.bf16.gmra.mrb[0].mxu0 %v715
  %v1616 = vpop.f32.mrb[0].mxu0
  %v1617 = vadd.f32 %v232, %v1616
  %v1618 = vpop.f32.mrb[0].mxu0
  %v1619 = vpop.f32.mrb[0].mxu0
  %v1620 = vadd.f32 %v232, %v1619
  %v1621 = vpop.f32.mrb[0].mxu0
  %1622 = vmatprep.mubr.bf16.mxu0 0
  %1623 = vmatmul.mubr.bf16.gmra.mrb[0].mxu0 %v716
  %v1624 = vpop.f32.mrb[0].mxu0
  %v1625 = vadd.f32 %v232, %v1624
  %v1626 = vpop.f32.mrb[0].mxu0
  %v1627 = vpop.f32.mrb[0].mxu0
  %v1628 = vadd.f32 %v232, %v1627
  %v1629 = vpop.f32.mrb[0].mxu0
  %1630 = vmatprep.mubr.bf16.mxu0 0
  %1631 = vmatmul.mubr.bf16.gmra.mrb[0].mxu0 %v717
  %v1632 = vpop.f32.mrb[0].mxu0
  %v1633 = vadd.f32 %v232, %v1632
  %v1634 = vpop.f32.mrb[0].mxu0
  %v1635 = vpop.f32.mrb[0].mxu0
  %v1636 = vadd.f32 %v232, %v1635
  %v1637 = vpop.f32.mrb[0].mxu0
  %1638 = vmatprep.mubr.bf16.mxu0 0
  %1639 = vmatmul.mubr.bf16.gmra.mrb[0].mxu0 %v718
  %v1640 = vpop.f32.mrb[0].mxu0
  %v1641 = vadd.f32 %v232, %v1640
  %v1642 = vpop.f32.mrb[0].mxu0
  %v1643 = vpop.f32.mrb[0].mxu0
  %v1644 = vadd.f32 %v232, %v1643
  %v1645 = vpop.f32.mrb[0].mxu0
  %1646 = vmatprep.mubr.bf16.mxu0 0
  %1647 = vmatmul.mubr.bf16.gmra.mrb[0].mxu0 %v719
  %v1648 = vpop.f32.mrb[0].mxu0
  %v1649 = vadd.f32 %v232, %v1648
  %v1650 = vpop.f32.mrb[0].mxu0
  %v1651 = vpop.f32.mrb[0].mxu0
  %v1652 = vadd.f32 %v232, %v1651
  %v1653 = vpop.f32.mrb[0].mxu0
  %1654 = vmatprep.mubr.bf16.mxu0 0
  %1655 = vmatmul.mubr.bf16.gmra.mrb[0].mxu0 %v720
  %v1656 = vpop.f32.mrb[0].mxu0
  %v1657 = vadd.f32 %v232, %v1656
  %v1658 = vpop.f32.mrb[0].mxu0
  %v1659 = vpop.f32.mrb[0].mxu0
  %v1660 = vadd.f32 %v232, %v1659
  %v1661 = vpop.f32.mrb[0].mxu0
  %1662 = vmatprep.mubr.bf16.mxu0 0
  %1663 = vmatmul.mubr.bf16.gmra.mrb[0].mxu0 %v721
  %v1664 = vpop.f32.mrb[0].mxu0
  %v1665 = vadd.f32 %v232, %v1664
  %v1666 = vpop.f32.mrb[0].mxu0
  %v1667 = vpop.f32.mrb[0].mxu0
  %v1668 = vadd.f32 %v232, %v1667
  %v1669 = vpop.f32.mrb[0].mxu0
  %1670 = vmatprep.mubr.bf16.mxu0 0
  %1671 = vmatmul.mubr.bf16.gmra.mrb[0].mxu0 %v722
  %v1672 = vpop.f32.mrb[0].mxu0
  %v1673 = vadd.f32 %v232, %v1672
  %v1674 = vpop.f32.mrb[0].mxu0
  %v1675 = vpop.f32.mrb[0].mxu0
  %v1676 = vadd.f32 %v232, %v1675
  %v1677 = vpop.f32.mrb[0].mxu0
  %1678 = vmatprep.mubr.bf16.mxu0 0
  %1679 = vmatmul.mubr.bf16.gmra.mrb[0].mxu0 %v723
  %v1680 = vpop.f32.mrb[0].mxu0
  %v1681 = vadd.f32 %v232, %v1680
  %v1682 = vpop.f32.mrb[0].mxu0
  %v1683 = vpop.f32.mrb[0].mxu0
  %v1684 = vadd.f32 %v232, %v1683
  %v1685 = vpop.f32.mrb[0].mxu0
  %1686 = vdwg.mxu0
  %v1687 = vtanh.pop %v905
  %v1688 = vtanh.pop %v908
  %v1689 = vtanh.pop %v913
  %v1690 = vtanh.pop %v916
  %v1691 = vtanh.pop %v921
  %v1692 = vtanh.pop %v924
  %v1693 = vtanh.pop %v929
  %v1694 = vtanh.pop %v932
  %v1695 = vtanh.pop %v937
  %v1696 = vtanh.pop %v940
  %v1697 = vtanh.pop %v945
  %v1698 = vtanh.pop %v948
  %v1699 = vtanh.pop %v953
  %v1700 = vtanh.pop %v956
  %v1701 = vtanh.pop %v961
  %v1702 = vtanh.pop %v964
  %v1703 = vtanh.pop %v969
  %v1704 = vtanh.pop %v972
  %v1705 = vtanh.pop %v977
  %v1706 = vtanh.pop %v980
  %v1707 = vtanh.pop %v985
  %v1708 = vtanh.pop %v988
  %v1709 = vtanh.pop %v993
  %v1710 = vtanh.pop %v996
  %v1711 = vtanh.pop %v1001
  %v1712 = vtanh.pop %v1004
  %v1713 = vtanh.pop %v1009
  %v1714 = vtanh.pop %v1012
  %v1715 = vtanh.pop %v1017
  %v1716 = vtanh.pop %v1020
  %v1717 = vtanh.pop %v1025
  %v1718 = vtanh.pop %v1028
  %v1719 = vtanh.pop %v1033
  %v1720 = vtanh.pop %v1036
  %v1721 = vtanh.pop %v1041
  %v1722 = vtanh.pop %v1044
  %v1723 = vtanh.pop %v1049
  %v1724 = vtanh.pop %v1052
  %v1725 = vtanh.pop %v1057
  %v1726 = vtanh.pop %v1060
  %v1727 = vtanh.pop %v1065
  %v1728 = vtanh.pop %v1068
  %v1729 = vtanh.pop %v1073
  %v1730 = vtanh.pop %v1076
  %v1731 = vtanh.pop %v1081
  %v1732 = vtanh.pop %v1084
  %v1733 = vtanh.pop %v1089
  %v1734 = vtanh.pop %v1092
  %v1735 = vtanh.pop %v1097
  %v1736 = vtanh.pop %v1100
  %v1737 = vtanh.pop %v1105
  %v1738 = vtanh.pop %v1108
  %v1739 = vtanh.pop %v1113
  %v1740 = vtanh.pop %v1116
  %v1741 = vtanh.pop %v1121
  %v1742 = vtanh.pop %v1124
  %v1743 = vtanh.pop %v1129
  %v1744 = vtanh.pop %v1132
  %v1745 = vtanh.pop %v1137
  %v1746 = vtanh.pop %v1140
  %v1747 = vtanh.pop %v1145
  %v1748 = vtanh.pop %v1148
  %v1749 = vtanh.pop %v1153
  %v1750 = vtanh.pop %v1156
  %v1751 = vtanh.pop %v1161
  %v1752 = vtanh.pop %v1164
  %v1753 = vtanh.pop %v1169
  %v1754 = vtanh.pop %v1172
  %v1755 = vtanh.pop %v1177
  %v1756 = vtanh.pop %v1180
  %v1757 = vtanh.pop %v1185
  %v1758 = vtanh.pop %v1188
  %v1759 = vtanh.pop %v1193
  %v1760 = vtanh.pop %v1196
  %v1761 = vtanh.pop %v1201
  %v1762 = vtanh.pop %v1204
  %v1763 = vtanh.pop %v1209
  %v1764 = vtanh.pop %v1212
  %v1765 = vtanh.pop %v1217
  %v1766 = vtanh.pop %v1220
  %v1767 = vtanh.pop %v1225
  %v1768 = vtanh.pop %v1228
  %v1769 = vtanh.pop %v1233
  %v1770 = vtanh.pop %v1236
  %v1771 = vtanh.pop %v1241
  %v1772 = vtanh.pop %v1244
  %v1773 = vtanh.pop %v1249
  %v1774 = vtanh.pop %v1252
  %v1775 = vtanh.pop %v1257
  %v1776 = vtanh.pop %v1260
  %v1777 = vtanh.pop %v1265
  %v1778 = vtanh.pop %v1268
  %v1779 = vtanh.pop %v1273
  %v1780 = vtanh.pop %v1276
  %v1781 = vtanh.pop %v1281
  %v1782 = vtanh.pop %v1284
  %v1783 = vtanh.pop %v1289
  %v1784 = vtanh.pop %v1292
  %v1785 = vtanh.pop %v1297
  %v1786 = vtanh.pop %v1300
  %v1787 = vtanh.pop %v1305
  %v1788 = vtanh.pop %v1308
  %v1789 = vtanh.pop %v1313
  %v1790 = vtanh.pop %v1316
  %v1791 = vtanh.pop %v1321
  %v1792 = vtanh.pop %v1324
  %v1793 = vtanh.pop %v1329
  %v1794 = vtanh.pop %v1332
  %v1795 = vtanh.pop %v1337
  %v1796 = vtanh.pop %v1340
  %v1797 = vtanh.pop %v1345
  %v1798 = vtanh.pop %v1348
  %v1799 = vtanh.pop %v1353
  %v1800 = vtanh.pop %v1356
  %v1801 = vtanh.pop %v1361
  %v1802 = vtanh.pop %v1364
  %v1803 = vtanh.pop %v1369
  %v1804 = vtanh.pop %v1372
  %v1805 = vtanh.pop %v1377
  %v1806 = vtanh.pop %v1380
  %v1807 = vtanh.pop %v1385
  %v1808 = vtanh.pop %v1388
  %v1809 = vtanh.pop %v1393
  %v1810 = vtanh.pop %v1396
  %v1811 = vtanh.pop %v1401
  %v1812 = vtanh.pop %v1404
  %v1813 = vtanh.pop %v1409
  %v1814 = vtanh.pop %v1412
  %v1815 = vtanh.pop %v1417
  %v1816 = vtanh.pop %v1420
  %v1817 = vtanh.pop %v1425
  %v1818 = vtanh.pop %v1428
  %v1819 = vtanh.pop %v1433
  %v1820 = vtanh.pop %v1436
  %v1821 = vtanh.pop %v1441
  %v1822 = vtanh.pop %v1444
  %v1823 = vtanh.pop %v1449
  %v1824 = vtanh.pop %v1452
  %v1825 = vtanh.pop %v1457
  %v1826 = vtanh.pop %v1460
  %v1827 = vtanh.pop %v1465
  %v1828 = vtanh.pop %v1468
  %v1829 = vtanh.pop %v1473
  %v1830 = vtanh.pop %v1476
  %v1831 = vtanh.pop %v1481
  %v1832 = vtanh.pop %v1484
  %v1833 = vtanh.pop %v1489
  %v1834 = vtanh.pop %v1492
  %v1835 = vtanh.pop %v1497
  %v1836 = vtanh.pop %v1500
  %v1837 = vtanh.pop %v1505
  %v1838 = vtanh.pop %v1508
  %v1839 = vtanh.pop %v1513
  %v1840 = vtanh.pop %v1516
  %v1841 = vtanh.pop %v1521
  %v1842 = vtanh.pop %v1524
  %v1843 = vtanh.pop %v1529
  %v1844 = vtanh.pop %v1532
  %v1845 = vtanh.pop %v1537
  %v1846 = vtanh.pop %v1540
  %v1847 = vtanh.pop %v1545
  %v1848 = vtanh.pop %v1548
  %v1849 = vtanh.pop %v1553
  %v1850 = vtanh.pop %v1556
  %v1851 = vtanh.pop %v1561
  %v1852 = vtanh.pop %v1564
  %v1853 = vtanh.pop %v1569
  %v1854 = vtanh.pop %v1572
  %v1855 = vtanh.pop %v1577
  %v1856 = vtanh.pop %v1580
  %v1857 = vtanh.pop %v1585
  %v1858 = vtanh.pop %v1588
  %v1859 = vtanh.pop %v1593
  %v1860 = vtanh.pop %v1596
  %v1861 = vtanh.pop %v1601
  %v1862 = vtanh.pop %v1604
  %v1863 = vtanh.pop %v1609
  %v1864 = vtanh.pop %v1612
  %v1865 = vtanh.pop %v1617
  %v1866 = vtanh.pop %v1620
  %v1867 = vtanh.pop %v1625
  %v1868 = vtanh.pop %v1628
  %v1869 = vtanh.pop %v1633
  %v1870 = vtanh.pop %v1636
  %v1871 = vtanh.pop %v1641
  %v1872 = vtanh.pop %v1644
  %v1873 = vtanh.pop %v1649
  %v1874 = vtanh.pop %v1652
  %v1875 = vtanh.pop %v1657
  %v1876 = vtanh.pop %v1660
  %v1877 = vtanh.pop %v1665
  %v1878 = vtanh.pop %v1668
  %v1879 = vtanh.pop %v1673
  %v1880 = vtanh.pop %v1676
  %v1881 = vtanh.pop %v1681
  %v1882 = vtanh.pop %v1684
  %v1883 = vadd.f32 %v1687, %v1736
  %v1884 = vadd.f32 %v1688, %v1737
  %v1885 = vadd.f32 %v1689, %v1738
  %v1886 = vadd.f32 %v1690, %v1739
  %v1887 = vadd.f32 %v1691, %v1740
  %v1888 = vadd.f32 %v1692, %v1741
  %v1889 = vadd.f32 %v1693, %v1742
  %v1890 = vadd.f32 %v1694, %v1743
  %v1891 = vadd.f32 %v1695, %v1744
  %v1892 = vadd.f32 %v1696, %v1745
  %v1893 = vadd.f32 %v1697, %v1746
  %v1894 = vadd.f32 %v1698, %v1747
  %v1895 = vadd.f32 %v1699, %v1748
  %v1896 = vadd.f32 %v1700, %v1749
  %v1897 = vadd.f32 %v1701, %v1750
  %v1898 = vadd.f32 %v1702, %v1751
  %v1899 = vadd.f32 %v1703, %v1752
  %v1900 = vadd.f32 %v1704, %v1753
  %v1901 = vadd.f32 %v1705, %v1754
  %v1902 = vadd.f32 %v1706, %v1755
  %v1903 = vadd.f32 %v1707, %v1756
  %v1904 = vadd.f32 %v1708, %v1757
  %v1905 = vadd.f32 %v1709, %v1758
  %v1906 = vadd.f32 %v1710, %v1759
  %v1907 = vadd.f32 %v1711, %v1760
  %v1908 = vadd.f32 %v1712, %v1761
  %v1909 = vadd.f32 %v1713, %v1762
  %v1910 = vadd.f32 %v1714, %v1763
  %v1911 = vadd.f32 %v1715, %v1764
  %v1912 = vadd.f32 %v1716, %v1765
  %v1913 = vadd.f32 %v1717, %v1766
  %v1914 = vadd.f32 %v1718, %v1767
  %v1915 = vadd.f32 %v1719, %v1768
  %v1916 = vadd.f32 %v1720, %v1769
  %v1917 = vadd.f32 %v1721, %v1770
  %v1918 = vadd.f32 %v1722, %v1771
  %v1919 = vadd.f32 %v1723, %v1772
  %v1920 = vadd.f32 %v1724, %v1773
  %v1921 = vadd.f32 %v1725, %v1774
  %v1922 = vadd.f32 %v1726, %v1775
  %v1923 = vadd.f32 %v1727, %v1776
  %v1924 = vadd.f32 %v1728, %v1777
  %v1925 = vadd.f32 %v1729, %v1778
  %v1926 = vadd.f32 %v1730, %v1779
  %v1927 = vadd.f32 %v1731, %v1780
  %v1928 = vadd.f32 %v1732, %v1781
  %v1929 = vadd.f32 %v1733, %v1782
  %v1930 = vadd.f32 %v1734, %v1783
  %v1931 = vadd.f32 %v1735, %v1784
  %v1932 = vadd.f32 %v1883, %v1785
  %v1933 = vadd.f32 %v1884, %v1786
  %v1934 = vadd.f32 %v1885, %v1787
  %v1935 = vadd.f32 %v1886, %v1788
  %v1936 = vadd.f32 %v1887, %v1789
  %v1937 = vadd.f32 %v1888, %v1790
  %v1938 = vadd.f32 %v1889, %v1791
  %v1939 = vadd.f32 %v1890, %v1792
  %v1940 = vadd.f32 %v1891, %v1793
  %v1941 = vadd.f32 %v1892, %v1794
  %v1942 = vadd.f32 %v1893, %v1795
  %v1943 = vadd.f32 %v1894, %v1796
  %v1944 = vadd.f32 %v1895, %v1797
  %v1945 = vadd.f32 %v1896, %v1798
  %v1946 = vadd.f32 %v1897, %v1799
  %v1947 = vadd.f32 %v1898, %v1800
  %v1948 = vadd.f32 %v1899, %v1801
  %v1949 = vadd.f32 %v1900, %v1802
  %v1950 = vadd.f32 %v1901, %v1803
  %v1951 = vadd.f32 %v1902, %v1804
  %v1952 = vadd.f32 %v1903, %v1805
  %v1953 = vadd.f32 %v1904, %v1806
  %v1954 = vadd.f32 %v1905, %v1807
  %v1955 = vadd.f32 %v1906, %v1808
  %v1956 = vadd.f32 %v1907, %v1809
  %v1957 = vadd.f32 %v1908, %v1810
  %v1958 = vadd.f32 %v1909, %v1811
  %v1959 = vadd.f32 %v1910, %v1812
  %v1960 = vadd.f32 %v1911, %v1813
  %v1961 = vadd.f32 %v1912, %v1814
  %v1962 = vadd.f32 %v1913, %v1815
  %v1963 = vadd.f32 %v1914, %v1816
  %v1964 = vadd.f32 %v1915, %v1817
  %v1965 = vadd.f32 %v1916, %v1818
  %v1966 = vadd.f32 %v1917, %v1819
  %v1967 = vadd.f32 %v1918, %v1820
  %v1968 = vadd.f32 %v1919, %v1821
  %v1969 = vadd.f32 %v1920, %v1822
  %v1970 = vadd.f32 %v1921, %v1823
  %v1971 = vadd.f32 %v1922, %v1824
  %v1972 = vadd.f32 %v1923, %v1825
  %v1973 = vadd.f32 %v1924, %v1826
  %v1974 = vadd.f32 %v1925, %v1827
  %v1975 = vadd.f32 %v1926, %v1828
  %v1976 = vadd.f32 %v1927, %v1829
  %v1977 = vadd.f32 %v1928, %v1830
  %v1978 = vadd.f32 %v1929, %v1831
  %v1979 = vadd.f32 %v1930, %v1832
  %v1980 = vadd.f32 %v1931, %v1833
  %v1981 = vadd.f32 %v1932, %v1834
  %v1982 = vadd.f32 %v1933, %v1835
  %v1983 = vadd.f32 %v1934, %v1836
  %v1984 = vadd.f32 %v1935, %v1837
  %v1985 = vadd.f32 %v1936, %v1838
  %v1986 = vadd.f32 %v1937, %v1839
  %v1987 = vadd.f32 %v1938, %v1840
  %v1988 = vadd.f32 %v1939, %v1841
  %v1989 = vadd.f32 %v1940, %v1842
  %v1990 = vadd.f32 %v1941, %v1843
  %v1991 = vadd.f32 %v1942, %v1844
  %v1992 = vadd.f32 %v1943, %v1845
  %v1993 = vadd.f32 %v1944, %v1846
  %v1994 = vadd.f32 %v1945, %v1847
  %v1995 = vadd.f32 %v1946, %v1848
  %v1996 = vadd.f32 %v1947, %v1849
  %v1997 = vadd.f32 %v1948, %v1850
  %v1998 = vadd.f32 %v1949, %v1851
  %v1999 = vadd.f32 %v1950, %v1852
  %v2000 = vadd.f32 %v1951, %v1853
  %v2001 = vadd.f32 %v1952, %v1854
  %v2002 = vadd.f32 %v1953, %v1855
  %v2003 = vadd.f32 %v1954, %v1856
  %v2004 = vadd.f32 %v1955, %v1857
  %v2005 = vadd.f32 %v1956, %v1858
  %v2006 = vadd.f32 %v1957, %v1859
  %v2007 = vadd.f32 %v1958, %v1860
  %v2008 = vadd.f32 %v1959, %v1861
  %v2009 = vadd.f32 %v1960, %v1862
  %v2010 = vadd.f32 %v1961, %v1863
  %v2011 = vadd.f32 %v1962, %v1864
  %v2012 = vadd.f32 %v1963, %v1865
  %v2013 = vadd.f32 %v1964, %v1866
  %v2014 = vadd.f32 %v1965, %v1867
  %v2015 = vadd.f32 %v1966, %v1868
  %v2016 = vadd.f32 %v1967, %v1869
  %v2017 = vadd.f32 %v1968, %v1870
  %v2018 = vadd.f32 %v1969, %v1871
  %v2019 = vadd.f32 %v1970, %v1872
  %v2020 = vadd.f32 %v1971, %v1873
  %v2021 = vadd.f32 %v1972, %v1874
  %v2022 = vadd.f32 %v1973, %v1875
  %v2023 = vadd.f32 %v1974, %v1876
  %v2024 = vadd.f32 %v1975, %v1877
  %v2025 = vadd.f32 %v1976, %v1878
  %v2026 = vadd.f32 %v1977, %v1879
  %v2027 = vadd.f32 %v1978, %v1880
  %v2028 = vadd.f32 %v1979, %v1881
  %v2029 = vadd.f32 %v1980, %v1882
  %v2030 = vmul.f32 %v1981, 0.25
  %v2031 = vmul.f32 %v1982, 0.25
  %v2032 = vmul.f32 %v1983, 0.25
  %v2033 = vmul.f32 %v1984, 0.25
  %v2034 = vmul.f32 %v1985, 0.25
  %v2035 = vmul.f32 %v1986, 0.25
  %v2036 = vmul.f32 %v1987, 0.25
  %v2037 = vmul.f32 %v1988, 0.25
  %v2038 = vmul.f32 %v1989, 0.25
  %v2039 = vmul.f32 %v1990, 0.25
  %v2040 = vmul.f32 %v1991, 0.25
  %v2041 = vmul.f32 %v1992, 0.25
  %v2042 = vmul.f32 %v1993, 0.25
  %v2043 = vmul.f32 %v1994, 0.25
  %v2044 = vmul.f32 %v1995, 0.25
  %v2045 = vmul.f32 %v1996, 0.25
  %v2046 = vmul.f32 %v1997, 0.25
  %v2047 = vmul.f32 %v1998, 0.25
  %v2048 = vmul.f32 %v1999, 0.25
  %v2049 = vmul.f32 %v2000, 0.25
  %v2050 = vmul.f32 %v2001, 0.25
  %v2051 = vmul.f32 %v2002, 0.25
  %v2052 = vmul.f32 %v2003, 0.25
  %v2053 = vmul.f32 %v2004, 0.25
  %v2054 = vmul.f32 %v2005, 0.25
  %v2055 = vmul.f32 %v2006, 0.25
  %v2056 = vmul.f32 %v2007, 0.25
  %v2057 = vmul.f32 %v2008, 0.25
  %v2058 = vmul.f32 %v2009, 0.25
  %v2059 = vmul.f32 %v2010, 0.25
  %v2060 = vmul.f32 %v2011, 0.25
  %v2061 = vmul.f32 %v2012, 0.25
  %v2062 = vmul.f32 %v2013, 0.25
  %v2063 = vmul.f32 %v2014, 0.25
  %v2064 = vmul.f32 %v2015, 0.25
  %v2065 = vmul.f32 %v2016, 0.25
  %v2066 = vmul.f32 %v2017, 0.25
  %v2067 = vmul.f32 %v2018, 0.25
  %v2068 = vmul.f32 %v2019, 0.25
  %v2069 = vmul.f32 %v2020, 0.25
  %v2070 = vmul.f32 %v2021, 0.25
  %v2071 = vmul.f32 %v2022, 0.25
  %v2072 = vmul.f32 %v2023, 0.25
  %v2073 = vmul.f32 %v2024, 0.25
  %v2074 = vmul.f32 %v2025, 0.25
  %v2075 = vmul.f32 %v2026, 0.25
  %v2076 = vmul.f32 %v2027, 0.25
  %v2077 = vmul.f32 %v2028, 0.25
  %v2078 = vmul.f32 %v2029, 0.25
  %v2079 = vpack.c.bf16 %v2031, %v2030
  %v2080 = vpack.c.bf16 %v2033, %v2032
  %v2081 = vpack.c.bf16 %v2035, %v2034
  %v2082 = vpack.c.bf16 %v2037, %v2036
  %v2083 = vpack.c.bf16 %v2039, %v2038
  %v2084 = vpack.c.bf16 %v2041, %v2040
  %v2085 = vpack.c.bf16 %v2043, %v2042
  %v2086 = vpack.c.bf16 %v2045, %v2044
  %v2087 = vpack.c.bf16 %v2047, %v2046
  %v2088 = vpack.c.bf16 %v2049, %v2048
  %v2089 = vpack.c.bf16 %v2051, %v2050
  %v2090 = vpack.c.bf16 %v2053, %v2052
  %v2091 = vpack.c.bf16 %v2055, %v2054
  %v2092 = vpack.c.bf16 %v2057, %v2056
  %v2093 = vpack.c.bf16 %v2059, %v2058
  %v2094 = vpack.c.bf16 %v2061, %v2060
  %v2095 = vpack.c.bf16 %v2063, %v2062
  %v2096 = vpack.c.bf16 %v2065, %v2064
  %v2097 = vpack.c.bf16 %v2067, %v2066
  %v2098 = vpack.c.bf16 %v2069, %v2068
  %v2099 = vpack.c.bf16 %v2071, %v2070
  %v2100 = vpack.c.bf16 %v2073, %v2072
  %v2101 = vpack.c.bf16 %v2075, %v2074
  %v2102 = vpack.c.bf16 %v2077, %v2076
  %v2103 = vpack.c.bf16 %v2078, %v2078
  %v2129 = vunpack.c.l.b16 %v2079
  %v2130 = vunpack.c.h.b16 %v2079
  %v2131 = vunpack.c.l.b16 %v2080
  %v2132 = vunpack.c.h.b16 %v2080
  %v2133 = vunpack.c.l.b16 %v2081
  %v2134 = vunpack.c.h.b16 %v2081
  %v2135 = vunpack.c.l.b16 %v2082
  %v2136 = vunpack.c.h.b16 %v2082
  %v2137 = vunpack.c.l.b16 %v2083
  %v2138 = vunpack.c.h.b16 %v2083
  %v2139 = vunpack.c.l.b16 %v2084
  %v2140 = vunpack.c.h.b16 %v2084
  %v2141 = vunpack.c.l.b16 %v2085
  %v2142 = vunpack.c.h.b16 %v2085
  %v2143 = vunpack.c.l.b16 %v2086
  %v2144 = vunpack.c.h.b16 %v2086
  %v2145 = vunpack.c.l.b16 %v2087
  %v2146 = vunpack.c.h.b16 %v2087
  %v2147 = vunpack.c.l.b16 %v2088
  %v2148 = vunpack.c.h.b16 %v2088
  %v2149 = vunpack.c.l.b16 %v2089
  %v2150 = vunpack.c.h.b16 %v2089
  %v2151 = vunpack.c.l.b16 %v2090
  %v2152 = vunpack.c.h.b16 %v2090
  %v2153 = vunpack.c.l.b16 %v2091
  %v2154 = vunpack.c.h.b16 %v2091
  %v2155 = vunpack.c.l.b16 %v2092
  %v2156 = vunpack.c.h.b16 %v2092
  %v2157 = vunpack.c.l.b16 %v2093
  %v2158 = vunpack.c.h.b16 %v2093
  %v2159 = vunpack.c.l.b16 %v2094
  %v2160 = vunpack.c.h.b16 %v2094
  %v2161 = vunpack.c.l.b16 %v2095
  %v2162 = vunpack.c.h.b16 %v2095
  %v2163 = vunpack.c.l.b16 %v2096
  %v2164 = vunpack.c.h.b16 %v2096
  %v2165 = vunpack.c.l.b16 %v2097
  %v2166 = vunpack.c.h.b16 %v2097
  %v2167 = vunpack.c.l.b16 %v2098
  %v2168 = vunpack.c.h.b16 %v2098
  %v2169 = vunpack.c.l.b16 %v2099
  %v2170 = vunpack.c.h.b16 %v2099
  %v2171 = vunpack.c.l.b16 %v2100
  %v2172 = vunpack.c.h.b16 %v2100
  %v2173 = vunpack.c.l.b16 %v2101
  %v2174 = vunpack.c.h.b16 %v2101
  %v2175 = vunpack.c.l.b16 %v2102
  %v2176 = vunpack.c.h.b16 %v2102
  %v2177 = vunpack.c.l.b16 %v2103
  %v2178 = vpack.c.b16 %v2129, %v2129
  %v2179 = vpack.c.b16 %v2130, %v2130
  %v2180 = vpack.c.b16 %v2131, %v2131
  %v2181 = vpack.c.b16 %v2132, %v2132
  %v2182 = vpack.c.b16 %v2133, %v2133
  %v2183 = vpack.c.b16 %v2134, %v2134
  %v2184 = vpack.c.b16 %v2135, %v2135
  %v2185 = vpack.c.b16 %v2136, %v2136
  %v2186 = vpack.c.b16 %v2137, %v2137
  %v2187 = vpack.c.b16 %v2138, %v2138
  %v2188 = vpack.c.b16 %v2139, %v2139
  %v2189 = vpack.c.b16 %v2140, %v2140
  %v2190 = vpack.c.b16 %v2141, %v2141
  %v2191 = vpack.c.b16 %v2142, %v2142
  %v2192 = vpack.c.b16 %v2143, %v2143
  %v2193 = vpack.c.b16 %v2144, %v2144
  %v2194 = vpack.c.b16 %v2145, %v2145
  %v2195 = vpack.c.b16 %v2146, %v2146
  %v2196 = vpack.c.b16 %v2147, %v2147
  %v2197 = vpack.c.b16 %v2148, %v2148
  %v2198 = vpack.c.b16 %v2149, %v2149
  %v2199 = vpack.c.b16 %v2150, %v2150
  %v2200 = vpack.c.b16 %v2151, %v2151
  %v2201 = vpack.c.b16 %v2152, %v2152
  %v2202 = vpack.c.b16 %v2153, %v2153
  %v2203 = vpack.c.b16 %v2154, %v2154
  %v2204 = vpack.c.b16 %v2155, %v2155
  %v2205 = vpack.c.b16 %v2156, %v2156
  %v2206 = vpack.c.b16 %v2157, %v2157
  %v2207 = vpack.c.b16 %v2158, %v2158
  %v2208 = vpack.c.b16 %v2159, %v2159
  %v2209 = vpack.c.b16 %v2160, %v2160
  %v2210 = vpack.c.b16 %v2161, %v2161
  %v2211 = vpack.c.b16 %v2162, %v2162
  %v2212 = vpack.c.b16 %v2163, %v2163
  %v2213 = vpack.c.b16 %v2164, %v2164
  %v2214 = vpack.c.b16 %v2165, %v2165
  %v2215 = vpack.c.b16 %v2166, %v2166
  %v2216 = vpack.c.b16 %v2167, %v2167
  %v2217 = vpack.c.b16 %v2168, %v2168
  %v2218 = vpack.c.b16 %v2169, %v2169
  %v2219 = vpack.c.b16 %v2170, %v2170
  %v2220 = vpack.c.b16 %v2171, %v2171
  %v2221 = vpack.c.b16 %v2172, %v2172
  %v2222 = vpack.c.b16 %v2173, %v2173
  %v2223 = vpack.c.b16 %v2174, %v2174
  %v2224 = vpack.c.b16 %v2175, %v2175
  %v2225 = vpack.c.b16 %v2176, %v2176
  %v2226 = vpack.c.b16 %v2177, %v2177
  %vm2276 = vcmask 60416
  %2277 = vst.msk [vmem:[%s3] sm:$0xf] %vm2276, %v2178
  %2278 = vst.msk [vmem:[%s3 + $0x4] sm:$0xf] %vm2276, %v2179
  %2279 = vst.msk [vmem:[%s3 + $0x8] sm:$0xf] %vm2276, %v2180
  %2280 = vst.msk [vmem:[%s3 + $0xc] sm:$0xf] %vm2276, %v2181
  %2281 = vst.msk [vmem:[%s3 + $0x10] sm:$0xf] %vm2276, %v2182
  %2282 = vst.msk [vmem:[%s3 + $0x14] sm:$0xf] %vm2276, %v2183
  %2283 = vst.msk [vmem:[%s3 + $0x18] sm:$0xf] %vm2276, %v2184
  %2284 = vst.msk [vmem:[%s3 + $0x1c] sm:$0xf] %vm2276, %v2185
  %2285 = vst.msk [vmem:[%s3 + $0x20] sm:$0xf] %vm2276, %v2186
  %2286 = vst.msk [vmem:[%s3 + $0x24] sm:$0xf] %vm2276, %v2187
  %2287 = vst.msk [vmem:[%s3 + $0x28] sm:$0xf] %vm2276, %v2188
  %2288 = vst.msk [vmem:[%s3 + $0x2c] sm:$0xf] %vm2276, %v2189
  %2289 = vst.msk [vmem:[%s3 + $0x30] sm:$0xf] %vm2276, %v2190
  %2290 = vst.msk [vmem:[%s3 + $0x34] sm:$0xf] %vm2276, %v2191
  %2291 = vst.msk [vmem:[%s3 + $0x38] sm:$0xf] %vm2276, %v2192
  %2292 = vst.msk [vmem:[%s3 + $0x3c] sm:$0xf] %vm2276, %v2193
  %2293 = vst.msk [vmem:[%s3 + $0x40] sm:$0xf] %vm2276, %v2194
  %2294 = vst.msk [vmem:[%s3 + $0x44] sm:$0xf] %vm2276, %v2195
  %2295 = vst.msk [vmem:[%s3 + $0x48] sm:$0xf] %vm2276, %v2196
  %2296 = vst.msk [vmem:[%s3 + $0x4c] sm:$0xf] %vm2276, %v2197
  %2297 = vst.msk [vmem:[%s3 + $0x50] sm:$0xf] %vm2276, %v2198
  %2298 = vst.msk [vmem:[%s3 + $0x54] sm:$0xf] %vm2276, %v2199
  %2299 = vst.msk [vmem:[%s3 + $0x58] sm:$0xf] %vm2276, %v2200
  %2300 = vst.msk [vmem:[%s3 + $0x5c] sm:$0xf] %vm2276, %v2201
  %2301 = vst.msk [vmem:[%s3 + $0x60] sm:$0xf] %vm2276, %v2202
  %2302 = vst.msk [vmem:[%s3 + $0x64] sm:$0xf] %vm2276, %v2203
  %2303 = vst.msk [vmem:[%s3 + $0x68] sm:$0xf] %vm2276, %v2204
  %2304 = vst.msk [vmem:[%s3 + $0x6c] sm:$0xf] %vm2276, %v2205
  %2305 = vst.msk [vmem:[%s3 + $0x70] sm:$0xf] %vm2276, %v2206
  %2306 = vst.msk [vmem:[%s3 + $0x74] sm:$0xf] %vm2276, %v2207
  %2307 = vst.msk [vmem:[%s3 + $0x78] sm:$0xf] %vm2276, %v2208
  %2308 = vst.msk [vmem:[%s3 + $0x7c] sm:$0xf] %vm2276, %v2209
  %2309 = vst.msk [vmem:[%s3 + $0x80] sm:$0xf] %vm2276, %v2210
  %2310 = vst.msk [vmem:[%s3 + $0x84] sm:$0xf] %vm2276, %v2211
  %2311 = vst.msk [vmem:[%s3 + $0x88] sm:$0xf] %vm2276, %v2212
  %2312 = vst.msk [vmem:[%s3 + $0x8c] sm:$0xf] %vm2276, %v2213
  %2313 = vst.msk [vmem:[%s3 + $0x90] sm:$0xf] %vm2276, %v2214
  %2314 = vst.msk [vmem:[%s3 + $0x94] sm:$0xf] %vm2276, %v2215
  %2315 = vst.msk [vmem:[%s3 + $0x98] sm:$0xf] %vm2276, %v2216
  %2316 = vst.msk [vmem:[%s3 + $0x9c] sm:$0xf] %vm2276, %v2217
  %2317 = vst.msk [vmem:[%s3 + $0xa0] sm:$0xf] %vm2276, %v2218
  %2318 = vst.msk [vmem:[%s3 + $0xa4] sm:$0xf] %vm2276, %v2219
  %2319 = vst.msk [vmem:[%s3 + $0xa8] sm:$0xf] %vm2276, %v2220
  %2320 = vst.msk [vmem:[%s3 + $0xac] sm:$0xf] %vm2276, %v2221
  %2321 = vst.msk [vmem:[%s3 + $0xb0] sm:$0xf] %vm2276, %v2222
  %2322 = vst.msk [vmem:[%s3 + $0xb4] sm:$0xf] %vm2276, %v2223
  %2323 = vst.msk [vmem:[%s3 + $0xb8] sm:$0xf] %vm2276, %v2224
  %2324 = vst.msk [vmem:[%s3 + $0xbc] sm:$0xf] %vm2276, %v2225
  %2325 = vst.msk [vmem:[%s3 + $0xc0] sm:$0xf] %vm2276, %v2226
  // Predicated region
  $region14: #{lenet_forward.2} parent=0 // pred_check
    _
  $region15: #{lenet_forward.2} parent=0 // pred_check_branch
    %2327 = sbr.rel (0) target = $region17
  $region16: #{lenet_forward.2} parent=0 // pred_region
    _
  $region17: #{lenet_forward.2} parent=0 // pred_fallthru
    _
  // Predicated region
  $region18: #{lenet_forward.2} parent=0 // pred_check
    _
  $region19: #{lenet_forward.2} parent=0 // pred_check_branch
    %2329 = sbr.rel (0) target = $region21
  $region20: #{lenet_forward.2} parent=0 // pred_region
    _
  $region21: #{lenet_forward.2} parent=0 // pred_fallthru
    _

// kernel: lenet_forward.3
$region0: #{lenet_forward.3}
  #allocation0 [shape = 'u32[]', space=smem, size = 0x4, offset = 0x4, fixed_abs, tag = 'smem constant byte address 0x4 - core index']
  #allocation1 [shape = 'u32[144,128]{1,0:T(1,128)}', space=vmem, size = 0x12000, scoped, tag = 'internal scratch']
  %s0 = inlined_call_operand.vmem [shape: bf16[800,256], index: 0, kind: input, shape index: {}]
  %s1 = inlined_call_operand.vmem [shape: bf16[256,16], index: 1, kind: input, shape index: {}]
  %s2 = inlined_call_operand.vmem [shape: f32[1,16], index: 2, kind: input, shape index: {}]
  %s3 = inlined_call_operand.vmem [shape: bf16[25,16,128], index: 3, kind: input, shape index: {}]
  %s4 = inlined_call_operand.vmem [shape: f32[1,128], index: 4, kind: input, shape index: {}]
  %s5 = inlined_call_operand.vmem [shape: bf16[128,128], index: 5, kind: input, shape index: {}]
  %s6 = inlined_call_operand.vmem [shape: f32[1,128], index: 6, kind: input, shape index: {}]
  %s7 = inlined_call_operand.vmem [shape: bf16[128,128], index: 7, kind: input, shape index: {}]
  %s8 = inlined_call_operand.vmem [shape: f32[1,128], index: 8, kind: input, shape index: {}]
  %s9 = inlined_call_operand.hbm [shape: f32[2,128], index: 9, kind: output, shape index: {}]
  %s10 = sld [smem:[#allocation0]]
  $region46: #{lenet_forward.3} parent=0
    _
  %s12 = ssub.s32 1, %s10
  %s13 = scalar_select 0, %s12, %s10
  $region1: #{lenet_forward.3} parent=0
    #allocation2 [shape = 'u8[1024]{0}', space=vmem, size = 0x400, scoped, tag = 'output window, operand 0, single buffered']
    #allocation3 [shape = 's32[1]{0}', space=sflag, size = 0x4, scoped, tag = 'scoped memory for lenet_forward.3']
    %14 = vsyncpa [#allocation3], 0
    // Predicated region
    $region2: #{lenet_forward.3} parent=1 // pred_check
      _
    $region3: #{lenet_forward.3} parent=1 // pred_check_branch
      %16 = sbr.rel (0) target = $region5
    $region4: #{lenet_forward.3} parent=1 // pred_region
      _
    $region5: #{lenet_forward.3} parent=1 // pred_fallthru
      _
    // Predicated region
    $region6: #{lenet_forward.3} parent=1 // pred_check
      _
    $region7: #{lenet_forward.3} parent=1 // pred_check_branch
      %18 = sbr.rel (0) target = $region9
    $region8: #{lenet_forward.3} parent=1 // pred_region
      _
    $region9: #{lenet_forward.3} parent=1 // pred_fallthru
      _
    // Predicated region
    $region10: #{lenet_forward.3} parent=1 // pred_check
      _
    $region11: #{lenet_forward.3} parent=1 // pred_check_branch
      %20 = sbr.rel (0) target = $region13
    $region12: #{lenet_forward.3} parent=1 // pred_region
      _
    $region13: #{lenet_forward.3} parent=1 // pred_fallthru
      _
    // Predicated region
    $region14: #{lenet_forward.3} parent=1 // pred_check
      _
    $region15: #{lenet_forward.3} parent=1 // pred_check_branch
      %22 = sbr.rel (0) target = $region17
    $region16: #{lenet_forward.3} parent=1 // pred_region
      _
    $region17: #{lenet_forward.3} parent=1 // pred_fallthru
      _
    // Predicated region
    $region18: #{lenet_forward.3} parent=1 // pred_check
      _
    $region19: #{lenet_forward.3} parent=1 // pred_check_branch
      %24 = sbr.rel (0) target = $region21
    $region20: #{lenet_forward.3} parent=1 // pred_region
      _
    $region21: #{lenet_forward.3} parent=1 // pred_fallthru
      _
    // Predicated region
    $region22: #{lenet_forward.3} parent=1 // pred_check
      _
    $region23: #{lenet_forward.3} parent=1 // pred_check_branch
      %26 = sbr.rel (0) target = $region25
    $region24: #{lenet_forward.3} parent=1 // pred_region
      _
    $region25: #{lenet_forward.3} parent=1 // pred_fallthru
      _
    // Predicated region
    $region26: #{lenet_forward.3} parent=1 // pred_check
      _
    $region27: #{lenet_forward.3} parent=1 // pred_check_branch
      %28 = sbr.rel (0) target = $region29
    $region28: #{lenet_forward.3} parent=1 // pred_region
      _
    $region29: #{lenet_forward.3} parent=1 // pred_fallthru
      _
    // Predicated region
    $region30: #{lenet_forward.3} parent=1 // pred_check
      _
    $region31: #{lenet_forward.3} parent=1 // pred_check_branch
      %30 = sbr.rel (0) target = $region33
    $region32: #{lenet_forward.3} parent=1 // pred_region
      _
    $region33: #{lenet_forward.3} parent=1 // pred_fallthru
      _
    // Predicated region
    $region34: #{lenet_forward.3} parent=1 // pred_check
      _
    $region35: #{lenet_forward.3} parent=1 // pred_check_branch
      %32 = sbr.rel (0) target = $region37
    $region36: #{lenet_forward.3} parent=1 // pred_region
      _
    $region37: #{lenet_forward.3} parent=1 // pred_fallthru
      _
    %v34 = vld [vmem:[%s0] sm:$0xff]
    %v35 = vld [vmem:[%s0 + $0x8] sm:$0xff]
    %v36 = vld [vmem:[%s0 + $0x10] sm:$0xff]
    %v37 = vld [vmem:[%s0 + $0x18] sm:$0xff]
    %v38 = vld [vmem:[%s0 + $0x20] sm:$0xff]
    %v39 = vld [vmem:[%s0 + $0x28] sm:$0xff]
    %v40 = vld [vmem:[%s0 + $0x30] sm:$0xff]
    %v41 = vld [vmem:[%s0 + $0x38] sm:$0xff]
    %v42 = vld [vmem:[%s0 + $0x40] sm:$0xff]
    %v43 = vld [vmem:[%s0 + $0x48] sm:$0xff]
    %v44 = vld [vmem:[%s0 + $0x50] sm:$0xff]
    %v45 = vld [vmem:[%s0 + $0x58] sm:$0xff]
    %v46 = vld [vmem:[%s0 + $0x60] sm:$0xff]
    %v47 = vld [vmem:[%s0 + $0x68] sm:$0xff]
    %v48 = vld [vmem:[%s0 + $0x70] sm:$0xff]
    %v49 = vld [vmem:[%s0 + $0x78] sm:$0xff]
    %v50 = vld [vmem:[%s0 + $0x80] sm:$0xff]
    %v51 = vld [vmem:[%s0 + $0x88] sm:$0xff]
    %v52 = vld [vmem:[%s0 + $0x90] sm:$0xff]
    %v53 = vld [vmem:[%s0 + $0x98] sm:$0xff]
    %v54 = vld [vmem:[%s0 + $0xa0] sm:$0xff]
    %v55 = vld [vmem:[%s0 + $0xa8] sm:$0xff]
    %v56 = vld [vmem:[%s0 + $0xb0] sm:$0xff]
    %v57 = vld [vmem:[%s0 + $0xb8] sm:$0xff]
    %v58 = vld [vmem:[%s0 + $0xc0] sm:$0xff]
    %v59 = vld [vmem:[%s0 + $0xc8] sm:$0xff]
    %v60 = vld [vmem:[%s0 + $0xd0] sm:$0xff]
    %v61 = vld [vmem:[%s0 + $0xd8] sm:$0xff]
    %v62 = vld [vmem:[%s0 + $0xe0] sm:$0xff]
    %v63 = vld [vmem:[%s0 + $0xe8] sm:$0xff]
    %v64 = vld [vmem:[%s0 + $0xf0] sm:$0xff]
    %v65 = vld [vmem:[%s0 + $0xf8] sm:$0xff]
    %v66 = vld [vmem:[%s0 + $0x100] sm:$0xff]
    %v67 = vld [vmem:[%s0 + $0x108] sm:$0xff]
    %v68 = vld [vmem:[%s0 + $0x110] sm:$0xff]
    %v69 = vld [vmem:[%s0 + $0x118] sm:$0xff]
    %v70 = vld [vmem:[%s0 + $0x120] sm:$0xff]
    %v71 = vld [vmem:[%s0 + $0x128] sm:$0xff]
    %v72 = vld [vmem:[%s0 + $0x130] sm:$0xff]
    %v73 = vld [vmem:[%s0 + $0x138] sm:$0xff]
    %v74 = vld [vmem:[%s0 + $0x140] sm:$0xff]
    %v75 = vld [vmem:[%s0 + $0x148] sm:$0xff]
    %v76 = vld [vmem:[%s0 + $0x150] sm:$0xff]
    %v77 = vld [vmem:[%s0 + $0x158] sm:$0xff]
    %v78 = vld [vmem:[%s0 + $0x160] sm:$0xff]
    %v79 = vld [vmem:[%s0 + $0x168] sm:$0xff]
    %v80 = vld [vmem:[%s0 + $0x170] sm:$0xff]
    %v81 = vld [vmem:[%s0 + $0x178] sm:$0xff]
    %v82 = vld [vmem:[%s0 + $0x180] sm:$0xff]
    %v83 = vld [vmem:[%s0 + $0x188] sm:$0xff]
    %v84 = vld [vmem:[%s0 + $0x190] sm:$0xff]
    %v85 = vld [vmem:[%s0 + $0x198] sm:$0xff]
    %v86 = vld [vmem:[%s0 + $0x1a0] sm:$0xff]
    %v87 = vld [vmem:[%s0 + $0x1a8] sm:$0xff]
    %v88 = vld [vmem:[%s0 + $0x1b0] sm:$0xff]
    %v89 = vld [vmem:[%s0 + $0x1b8] sm:$0xff]
    %v90 = vld [vmem:[%s0 + $0x1c0] sm:$0xff]
    %v91 = vld [vmem:[%s0 + $0x1c8] sm:$0xff]
    %v92 = vld [vmem:[%s0 + $0x1d0] sm:$0xff]
    %v93 = vld [vmem:[%s0 + $0x1d8] sm:$0xff]
    %v94 = vld [vmem:[%s0 + $0x1e0] sm:$0xff]
    %v95 = vld [vmem:[%s0 + $0x1e8] sm:$0xff]
    %v96 = vld [vmem:[%s0 + $0x1f0] sm:$0xff]
    %v97 = vld [vmem:[%s0 + $0x1f8] sm:$0xff]
    %v98 = vld [vmem:[%s0 + $0x200] sm:$0xff]
    %v99 = vld [vmem:[%s0 + $0x208] sm:$0xff]
    %v100 = vld [vmem:[%s0 + $0x210] sm:$0xff]
    %v101 = vld [vmem:[%s0 + $0x218] sm:$0xff]
    %v102 = vld [vmem:[%s0 + $0x220] sm:$0xff]
    %v103 = vld [vmem:[%s0 + $0x228] sm:$0xff]
    %v104 = vld [vmem:[%s0 + $0x230] sm:$0xff]
    %v105 = vld [vmem:[%s0 + $0x238] sm:$0xff]
    %v106 = vld [vmem:[%s0 + $0x240] sm:$0xff]
    %v107 = vld [vmem:[%s0 + $0x248] sm:$0xff]
    %v108 = vld [vmem:[%s0 + $0x250] sm:$0xff]
    %v109 = vld [vmem:[%s0 + $0x258] sm:$0xff]
    %v110 = vld [vmem:[%s0 + $0x260] sm:$0xff]
    %v111 = vld [vmem:[%s0 + $0x268] sm:$0xff]
    %v112 = vld [vmem:[%s0 + $0x270] sm:$0xff]
    %v113 = vld [vmem:[%s0 + $0x278] sm:$0xff]
    %v114 = vld [vmem:[%s0 + $0x280] sm:$0xff]
    %v115 = vld [vmem:[%s0 + $0x288] sm:$0xff]
    %v116 = vld [vmem:[%s0 + $0x290] sm:$0xff]
    %v117 = vld [vmem:[%s0 + $0x298] sm:$0xff]
    %v118 = vld [vmem:[%s0 + $0x2a0] sm:$0xff]
    %v119 = vld [vmem:[%s0 + $0x2a8] sm:$0xff]
    %v120 = vld [vmem:[%s0 + $0x2b0] sm:$0xff]
    %v121 = vld [vmem:[%s0 + $0x2b8] sm:$0xff]
    %v122 = vld [vmem:[%s0 + $0x2c0] sm:$0xff]
    %v123 = vld [vmem:[%s0 + $0x2c8] sm:$0xff]
    %v124 = vld [vmem:[%s0 + $0x2d0] sm:$0xff]
    %v125 = vld [vmem:[%s0 + $0x2d8] sm:$0xff]
    %v126 = vld [vmem:[%s0 + $0x2e0] sm:$0xff]
    %v127 = vld [vmem:[%s0 + $0x2e8] sm:$0xff]
    %v128 = vld [vmem:[%s0 + $0x2f0] sm:$0xff]
    %v129 = vld [vmem:[%s0 + $0x2f8] sm:$0xff]
    %v130 = vld [vmem:[%s0 + $0x300] sm:$0xff]
    %v131 = vld [vmem:[%s0 + $0x308] sm:$0xff]
    %v132 = vld [vmem:[%s0 + $0x310] sm:$0xff]
    %v133 = vld [vmem:[%s0 + $0x318] sm:$0xff]
    %v134 = vld [vmem:[%s1] sm:$0xf]
    %v135 = vld [vmem:[%s1 + $0x4] sm:$0xf]
    %v136 = vld [vmem:[%s1 + $0x8] sm:$0xf]
    %v137 = vld [vmem:[%s1 + $0xc] sm:$0xf]
    %v138 = vld [vmem:[%s1 + $0x10] sm:$0xf]
    %v139 = vld [vmem:[%s1 + $0x14] sm:$0xf]
    %v140 = vld [vmem:[%s1 + $0x18] sm:$0xf]
    %v141 = vld [vmem:[%s1 + $0x1c] sm:$0xf]
    %v142 = vld [vmem:[%s1 + $0x20] sm:$0xf]
    %v143 = vld [vmem:[%s1 + $0x24] sm:$0xf]
    %v144 = vld [vmem:[%s1 + $0x28] sm:$0xf]
    %v145 = vld [vmem:[%s1 + $0x2c] sm:$0xf]
    %v146 = vld [vmem:[%s1 + $0x30] sm:$0xf]
    %v147 = vld [vmem:[%s1 + $0x34] sm:$0xf]
    %v148 = vld [vmem:[%s1 + $0x38] sm:$0xf]
    %v149 = vld [vmem:[%s1 + $0x3c] sm:$0xf]
    %v150 = vld [vmem:[%s1 + $0x40] sm:$0xf]
    %v151 = vld [vmem:[%s1 + $0x44] sm:$0xf]
    %v152 = vld [vmem:[%s1 + $0x48] sm:$0xf]
    %v153 = vld [vmem:[%s1 + $0x4c] sm:$0xf]
    %v154 = vld [vmem:[%s1 + $0x50] sm:$0xf]
    %v155 = vld [vmem:[%s1 + $0x54] sm:$0xf]
    %v156 = vld [vmem:[%s1 + $0x58] sm:$0xf]
    %v157 = vld [vmem:[%s1 + $0x5c] sm:$0xf]
    %v158 = vld [vmem:[%s1 + $0x60] sm:$0xf]
    %v159 = vld [vmem:[%s1 + $0x64] sm:$0xf]
    %v160 = vld [vmem:[%s1 + $0x68] sm:$0xf]
    %v161 = vld [vmem:[%s1 + $0x6c] sm:$0xf]
    %v162 = vld [vmem:[%s1 + $0x70] sm:$0xf]
    %v163 = vld [vmem:[%s1 + $0x74] sm:$0xf]
    %v164 = vld [vmem:[%s1 + $0x78] sm:$0xf]
    %v165 = vld [vmem:[%s1 + $0x7c] sm:$0xf]
    %v166 = vld [vmem:[%s2] sm:$0x1]
    %v168 = vlaneseq
    %v169 = vshrl.u32 %v168, 7
    %v170 = vsub.s32 0, %v169
    %v171 = vrot.slane %v166, %v170
    %v273 = vunpack.c.l.b16 %v34
    %v274 = vunpack.c.h.b16 %v34
    %v275 = vunpack.c.l.b16 %v35
    %v276 = vunpack.c.h.b16 %v35
    %v277 = vunpack.c.l.b16 %v36
    %v278 = vunpack.c.h.b16 %v36
    %v279 = vunpack.c.l.b16 %v37
    %v280 = vunpack.c.h.b16 %v37
    %v281 = vunpack.c.l.b16 %v38
    %v282 = vunpack.c.h.b16 %v38
    %v283 = vunpack.c.l.b16 %v39
    %v284 = vunpack.c.h.b16 %v39
    %v285 = vunpack.c.l.b16 %v40
    %v286 = vunpack.c.h.b16 %v40
    %v287 = vunpack.c.l.b16 %v41
    %v288 = vunpack.c.h.b16 %v41
    %v289 = vunpack.c.l.b16 %v42
    %v290 = vunpack.c.h.b16 %v42
    %v291 = vunpack.c.l.b16 %v43
    %v292 = vunpack.c.h.b16 %v43
    %v293 = vunpack.c.l.b16 %v44
    %v294 = vunpack.c.h.b16 %v44
    %v295 = vunpack.c.l.b16 %v45
    %v296 = vunpack.c.h.b16 %v45
    %v297 = vunpack.c.l.b16 %v46
    %v298 = vunpack.c.h.b16 %v46
    %v299 = vunpack.c.l.b16 %v47
    %v300 = vunpack.c.h.b16 %v47
    %v301 = vunpack.c.l.b16 %v48
    %v302 = vunpack.c.h.b16 %v48
    %v303 = vunpack.c.l.b16 %v49
    %v304 = vunpack.c.h.b16 %v49
    %v305 = vunpack.c.l.b16 %v50
    %v306 = vunpack.c.h.b16 %v50
    %v307 = vunpack.c.l.b16 %v51
    %v308 = vunpack.c.h.b16 %v51
    %v309 = vunpack.c.l.b16 %v52
    %v310 = vunpack.c.h.b16 %v52
    %v311 = vunpack.c.l.b16 %v53
    %v312 = vunpack.c.h.b16 %v53
    %v313 = vunpack.c.l.b16 %v54
    %v314 = vunpack.c.h.b16 %v54
    %v315 = vunpack.c.l.b16 %v55
    %v316 = vunpack.c.h.b16 %v55
    %v317 = vunpack.c.l.b16 %v56
    %v318 = vunpack.c.h.b16 %v56
    %v319 = vunpack.c.l.b16 %v57
    %v320 = vunpack.c.h.b16 %v57
    %v321 = vunpack.c.l.b16 %v58
    %v322 = vunpack.c.h.b16 %v58
    %v323 = vunpack.c.l.b16 %v59
    %v324 = vunpack.c.h.b16 %v59
    %v325 = vunpack.c.l.b16 %v60
    %v326 = vunpack.c.h.b16 %v60
    %v327 = vunpack.c.l.b16 %v61
    %v328 = vunpack.c.h.b16 %v61
    %v329 = vunpack.c.l.b16 %v62
    %v330 = vunpack.c.h.b16 %v62
    %v331 = vunpack.c.l.b16 %v63
    %v332 = vunpack.c.h.b16 %v63
    %v333 = vunpack.c.l.b16 %v64
    %v334 = vunpack.c.h.b16 %v64
    %v335 = vunpack.c.l.b16 %v65
    %v336 = vunpack.c.h.b16 %v65
    %v337 = vunpack.c.l.b16 %v66
    %v338 = vunpack.c.h.b16 %v66
    %v339 = vunpack.c.l.b16 %v67
    %v340 = vunpack.c.h.b16 %v67
    %v341 = vunpack.c.l.b16 %v68
    %v342 = vunpack.c.h.b16 %v68
    %v343 = vunpack.c.l.b16 %v69
    %v344 = vunpack.c.h.b16 %v69
    %v345 = vunpack.c.l.b16 %v70
    %v346 = vunpack.c.h.b16 %v70
    %v347 = vunpack.c.l.b16 %v71
    %v348 = vunpack.c.h.b16 %v71
    %v349 = vunpack.c.l.b16 %v72
    %v350 = vunpack.c.h.b16 %v72
    %v351 = vunpack.c.l.b16 %v73
    %v352 = vunpack.c.h.b16 %v73
    %v353 = vunpack.c.l.b16 %v74
    %v354 = vunpack.c.h.b16 %v74
    %v355 = vunpack.c.l.b16 %v75
    %v356 = vunpack.c.h.b16 %v75
    %v357 = vunpack.c.l.b16 %v76
    %v358 = vunpack.c.h.b16 %v76
    %v359 = vunpack.c.l.b16 %v77
    %v360 = vunpack.c.h.b16 %v77
    %v361 = vunpack.c.l.b16 %v78
    %v362 = vunpack.c.h.b16 %v78
    %v363 = vunpack.c.l.b16 %v79
    %v364 = vunpack.c.h.b16 %v79
    %v365 = vunpack.c.l.b16 %v80
    %v366 = vunpack.c.h.b16 %v80
    %v367 = vunpack.c.l.b16 %v81
    %v368 = vunpack.c.h.b16 %v81
    %v369 = vunpack.c.l.b16 %v82
    %v370 = vunpack.c.h.b16 %v82
    %v371 = vunpack.c.l.b16 %v83
    %v372 = vunpack.c.h.b16 %v83
    %v373 = vunpack.c.l.b16 %v84
    %v374 = vunpack.c.h.b16 %v84
    %v375 = vunpack.c.l.b16 %v85
    %v376 = vunpack.c.h.b16 %v85
    %v377 = vunpack.c.l.b16 %v86
    %v378 = vunpack.c.h.b16 %v86
    %v379 = vunpack.c.l.b16 %v87
    %v380 = vunpack.c.h.b16 %v87
    %v381 = vunpack.c.l.b16 %v88
    %v382 = vunpack.c.h.b16 %v88
    %v383 = vunpack.c.l.b16 %v89
    %v384 = vunpack.c.h.b16 %v89
    %v385 = vunpack.c.l.b16 %v90
    %v386 = vunpack.c.h.b16 %v90
    %v387 = vunpack.c.l.b16 %v91
    %v388 = vunpack.c.h.b16 %v91
    %v389 = vunpack.c.l.b16 %v92
    %v390 = vunpack.c.h.b16 %v92
    %v391 = vunpack.c.l.b16 %v93
    %v392 = vunpack.c.h.b16 %v93
    %v393 = vunpack.c.l.b16 %v94
    %v394 = vunpack.c.h.b16 %v94
    %v395 = vunpack.c.l.b16 %v95
    %v396 = vunpack.c.h.b16 %v95
    %v397 = vunpack.c.l.b16 %v96
    %v398 = vunpack.c.h.b16 %v96
    %v399 = vunpack.c.l.b16 %v97
    %v400 = vunpack.c.h.b16 %v97
    %v401 = vunpack.c.l.b16 %v98
    %v402 = vunpack.c.h.b16 %v98
    %v403 = vunpack.c.l.b16 %v99
    %v404 = vunpack.c.h.b16 %v99
    %v405 = vunpack.c.l.b16 %v100
    %v406 = vunpack.c.h.b16 %v100
    %v407 = vunpack.c.l.b16 %v101
    %v408 = vunpack.c.h.b16 %v101
    %v409 = vunpack.c.l.b16 %v102
    %v410 = vunpack.c.h.b16 %v102
    %v411 = vunpack.c.l.b16 %v103
    %v412 = vunpack.c.h.b16 %v103
    %v413 = vunpack.c.l.b16 %v104
    %v414 = vunpack.c.h.b16 %v104
    %v415 = vunpack.c.l.b16 %v105
    %v416 = vunpack.c.h.b16 %v105
    %v417 = vunpack.c.l.b16 %v106
    %v418 = vunpack.c.h.b16 %v106
    %v419 = vunpack.c.l.b16 %v107
    %v420 = vunpack.c.h.b16 %v107
    %v421 = vunpack.c.l.b16 %v108
    %v422 = vunpack.c.h.b16 %v108
    %v423 = vunpack.c.l.b16 %v109
    %v424 = vunpack.c.h.b16 %v109
    %v425 = vunpack.c.l.b16 %v110
    %v426 = vunpack.c.h.b16 %v110
    %v427 = vunpack.c.l.b16 %v111
    %v428 = vunpack.c.h.b16 %v111
    %v429 = vunpack.c.l.b16 %v112
    %v430 = vunpack.c.h.b16 %v112
    %v431 = vunpack.c.l.b16 %v113
    %v432 = vunpack.c.h.b16 %v113
    %v433 = vunpack.c.l.b16 %v114
    %v434 = vunpack.c.h.b16 %v114
    %v435 = vunpack.c.l.b16 %v115
    %v436 = vunpack.c.h.b16 %v115
    %v437 = vunpack.c.l.b16 %v116
    %v438 = vunpack.c.h.b16 %v116
    %v439 = vunpack.c.l.b16 %v117
    %v440 = vunpack.c.h.b16 %v117
    %v441 = vunpack.c.l.b16 %v118
    %v442 = vunpack.c.h.b16 %v118
    %v443 = vunpack.c.l.b16 %v119
    %v444 = vunpack.c.h.b16 %v119
    %v445 = vunpack.c.l.b16 %v120
    %v446 = vunpack.c.h.b16 %v120
    %v447 = vunpack.c.l.b16 %v121
    %v448 = vunpack.c.h.b16 %v121
    %v449 = vunpack.c.l.b16 %v122
    %v450 = vunpack.c.h.b16 %v122
    %v451 = vunpack.c.l.b16 %v123
    %v452 = vunpack.c.h.b16 %v123
    %v453 = vunpack.c.l.b16 %v124
    %v454 = vunpack.c.h.b16 %v124
    %v455 = vunpack.c.l.b16 %v125
    %v456 = vunpack.c.h.b16 %v125
    %v457 = vunpack.c.l.b16 %v126
    %v458 = vunpack.c.h.b16 %v126
    %v459 = vunpack.c.l.b16 %v127
    %v460 = vunpack.c.h.b16 %v127
    %v461 = vunpack.c.l.b16 %v128
    %v462 = vunpack.c.h.b16 %v128
    %v463 = vunpack.c.l.b16 %v129
    %v464 = vunpack.c.h.b16 %v129
    %v465 = vunpack.c.l.b16 %v130
    %v466 = vunpack.c.h.b16 %v130
    %v467 = vunpack.c.l.b16 %v131
    %v468 = vunpack.c.h.b16 %v131
    %v469 = vunpack.c.l.b16 %v132
    %v470 = vunpack.c.h.b16 %v132
    %v471 = vunpack.c.l.b16 %v133
    %v472 = vunpack.c.h.b16 %v133
    %v473 = vpack.c.b16 %v275, %v273
    %v474 = vpack.c.b16 %v276, %v274
    %v475 = vpack.c.b16 %v279, %v277
    %v476 = vpack.c.b16 %v280, %v278
    %v477 = vpack.c.b16 %v283, %v281
    %v478 = vpack.c.b16 %v284, %v282
    %v479 = vpack.c.b16 %v287, %v285
    %v480 = vpack.c.b16 %v288, %v286
    %v481 = vpack.c.b16 %v291, %v289
    %v482 = vpack.c.b16 %v292, %v290
    %v483 = vpack.c.b16 %v295, %v293
    %v484 = vpack.c.b16 %v296, %v294
    %v485 = vpack.c.b16 %v299, %v297
    %v486 = vpack.c.b16 %v300, %v298
    %v487 = vpack.c.b16 %v303, %v301
    %v488 = vpack.c.b16 %v304, %v302
    %v489 = vpack.c.b16 %v307, %v305
    %v490 = vpack.c.b16 %v308, %v306
    %v491 = vpack.c.b16 %v311, %v309
    %v492 = vpack.c.b16 %v312, %v310
    %v493 = vpack.c.b16 %v315, %v313
    %v494 = vpack.c.b16 %v316, %v314
    %v495 = vpack.c.b16 %v319, %v317
    %v496 = vpack.c.b16 %v320, %v318
    %v497 = vpack.c.b16 %v323, %v321
    %v498 = vpack.c.b16 %v324, %v322
    %v499 = vpack.c.b16 %v327, %v325
    %v500 = vpack.c.b16 %v328, %v326
    %v501 = vpack.c.b16 %v331, %v329
    %v502 = vpack.c.b16 %v332, %v330
    %v503 = vpack.c.b16 %v335, %v333
    %v504 = vpack.c.b16 %v336, %v334
    %v505 = vpack.c.b16 %v339, %v337
    %v506 = vpack.c.b16 %v340, %v338
    %v507 = vpack.c.b16 %v343, %v341
    %v508 = vpack.c.b16 %v344, %v342
    %v509 = vpack.c.b16 %v347, %v345
    %v510 = vpack.c.b16 %v348, %v346
    %v511 = vpack.c.b16 %v351, %v349
    %v512 = vpack.c.b16 %v352, %v350
    %v513 = vpack.c.b16 %v355, %v353
    %v514 = vpack.c.b16 %v356, %v354
    %v515 = vpack.c.b16 %v359, %v357
    %v516 = vpack.c.b16 %v360, %v358
    %v517 = vpack.c.b16 %v363, %v361
    %v518 = vpack.c.b16 %v364, %v362
    %v519 = vpack.c.b16 %v367, %v365
    %v520 = vpack.c.b16 %v368, %v366
    %v521 = vpack.c.b16 %v371, %v369
    %v522 = vpack.c.b16 %v372, %v370
    %v523 = vpack.c.b16 %v375, %v373
    %v524 = vpack.c.b16 %v376, %v374
    %v525 = vpack.c.b16 %v379, %v377
    %v526 = vpack.c.b16 %v380, %v378
    %v527 = vpack.c.b16 %v383, %v381
    %v528 = vpack.c.b16 %v384, %v382
    %v529 = vpack.c.b16 %v387, %v385
    %v530 = vpack.c.b16 %v388, %v386
    %v531 = vpack.c.b16 %v391, %v389
    %v532 = vpack.c.b16 %v392, %v390
    %v533 = vpack.c.b16 %v395, %v393
    %v534 = vpack.c.b16 %v396, %v394
    %v535 = vpack.c.b16 %v399, %v397
    %v536 = vpack.c.b16 %v400, %v398
    %v537 = vpack.c.b16 %v403, %v401
    %v538 = vpack.c.b16 %v404, %v402
    %v539 = vpack.c.b16 %v407, %v405
    %v540 = vpack.c.b16 %v408, %v406
    %v541 = vpack.c.b16 %v411, %v409
    %v542 = vpack.c.b16 %v412, %v410
    %v543 = vpack.c.b16 %v415, %v413
    %v544 = vpack.c.b16 %v416, %v414
    %v545 = vpack.c.b16 %v419, %v417
    %v546 = vpack.c.b16 %v420, %v418
    %v547 = vpack.c.b16 %v423, %v421
    %v548 = vpack.c.b16 %v424, %v422
    %v549 = vpack.c.b16 %v427, %v425
    %v550 = vpack.c.b16 %v428, %v426
    %v551 = vpack.c.b16 %v431, %v429
    %v552 = vpack.c.b16 %v432, %v430
    %v553 = vpack.c.b16 %v435, %v433
    %v554 = vpack.c.b16 %v436, %v434
    %v555 = vpack.c.b16 %v439, %v437
    %v556 = vpack.c.b16 %v440, %v438
    %v557 = vpack.c.b16 %v443, %v441
    %v558 = vpack.c.b16 %v444, %v442
    %v559 = vpack.c.b16 %v447, %v445
    %v560 = vpack.c.b16 %v448, %v446
    %v561 = vpack.c.b16 %v451, %v449
    %v562 = vpack.c.b16 %v452, %v450
    %v563 = vpack.c.b16 %v455, %v453
    %v564 = vpack.c.b16 %v456, %v454
    %v565 = vpack.c.b16 %v459, %v457
    %v566 = vpack.c.b16 %v460, %v458
    %v567 = vpack.c.b16 %v463, %v461
    %v568 = vpack.c.b16 %v464, %v462
    %v569 = vpack.c.b16 %v467, %v465
    %v570 = vpack.c.b16 %v468, %v466
    %v571 = vpack.c.b16 %v471, %v469
    %v572 = vpack.c.b16 %v472, %v470
    %v705 = vunpack.c.l.b16 %v134
    %v706 = vunpack.c.l.b16 %v135
    %v707 = vunpack.c.l.b16 %v136
    %v708 = vunpack.c.l.b16 %v137
    %v709 = vunpack.c.l.b16 %v138
    %v710 = vunpack.c.l.b16 %v139
    %v711 = vunpack.c.l.b16 %v140
    %v712 = vunpack.c.l.b16 %v141
    %v713 = vunpack.c.l.b16 %v142
    %v714 = vunpack.c.l.b16 %v143
    %v715 = vunpack.c.l.b16 %v144
    %v716 = vunpack.c.l.b16 %v145
    %v717 = vunpack.c.l.b16 %v146
    %v718 = vunpack.c.l.b16 %v147
    %v719 = vunpack.c.l.b16 %v148
    %v720 = vunpack.c.l.b16 %v149
    %v721 = vunpack.c.l.b16 %v150
    %v722 = vunpack.c.l.b16 %v151
    %v723 = vunpack.c.l.b16 %v152
    %v724 = vunpack.c.l.b16 %v153
    %v725 = vunpack.c.l.b16 %v154
    %v726 = vunpack.c.l.b16 %v155
    %v727 = vunpack.c.l.b16 %v156
    %v728 = vunpack.c.l.b16 %v157
    %v729 = vunpack.c.l.b16 %v158
    %v730 = vunpack.c.l.b16 %v159
    %v731 = vunpack.c.l.b16 %v160
    %v732 = vunpack.c.l.b16 %v161
    %v733 = vunpack.c.l.b16 %v162
    %v734 = vunpack.c.l.b16 %v163
    %v735 = vunpack.c.l.b16 %v164
    %v736 = vunpack.c.l.b16 %v165
    %v737 = vpack.c.b16 %v706, %v705
    %v738 = vpack.c.b16 %v708, %v707
    %v739 = vpack.c.b16 %v710, %v709
    %v740 = vpack.c.b16 %v712, %v711
    %v741 = vpack.c.b16 %v714, %v713
    %v742 = vpack.c.b16 %v716, %v715
    %v743 = vpack.c.b16 %v718, %v717
    %v744 = vpack.c.b16 %v720, %v719
    %v745 = vpack.c.b16 %v722, %v721
    %v746 = vpack.c.b16 %v724, %v723
    %v747 = vpack.c.b16 %v726, %v725
    %v748 = vpack.c.b16 %v728, %v727
    %v749 = vpack.c.b16 %v730, %v729
    %v750 = vpack.c.b16 %v732, %v731
    %v751 = vpack.c.b16 %v734, %v733
    %v752 = vpack.c.b16 %v736, %v735
    %769 = vmatprep.subr.bf16.mxu0 0
    %770 = vmatpush1.bf16.msra.mxu0 %v737
    %771 = vmatprep.subr.bf16.mxu0 0
    %772 = vmatpush1.bf16.msra.mxu0 %v738
    %773 = vmatprep.subr.bf16.mxu0 0
    %774 = vmatpush1.bf16.msra.mxu0 %v739
    %775 = vmatprep.subr.bf16.mxu0 0
    %776 = vmatpush1.bf16.msra.mxu0 %v740
    %777 = vmatprep.subr.bf16.mxu0 0
    %778 = vmatpush1.bf16.msra.mxu0 %v741
    %779 = vmatprep.subr.bf16.mxu0 0
    %780 = vmatpush1.bf16.msra.mxu0 %v742
    %781 = vmatprep.subr.bf16.mxu0 0
    %782 = vmatpush1.bf16.msra.mxu0 %v743
    %783 = vmatprep.subr.bf16.mxu0 0
    %784 = vmatpush1.bf16.msra.mxu0 %v744
    %785 = vmatprep.subr.bf16.mxu0 0
    %786 = vmatpush1.bf16.msra.mxu0 %v745
    %787 = vmatprep.subr.bf16.mxu0 0
    %788 = vmatpush1.bf16.msra.mxu0 %v746
    %789 = vmatprep.subr.bf16.mxu0 0
    %790 = vmatpush1.bf16.msra.mxu0 %v747
    %791 = vmatprep.subr.bf16.mxu0 0
    %792 = vmatpush1.bf16.msra.mxu0 %v748
    %793 = vmatprep.subr.bf16.mxu0 0
    %794 = vmatpush1.bf16.msra.mxu0 %v749
    %795 = vmatprep.subr.bf16.mxu0 0
    %796 = vmatpush1.bf16.msra.mxu0 %v750
    %797 = vmatprep.subr.bf16.mxu0 0
    %798 = vmatpush1.bf16.msra.mxu0 %v751
    %799 = vmatprep.subr.bf16.mxu0 0
    %800 = vmatpush1.bf16.msra.mxu0 %v752
    %801 = vmatprep.mubr.bf16.mxu0 %v474
    %802 = vmatmul.mubr.bf16.gmra.mrb[0].mxu0 %v473
    %v803 = vpop.f32.mrb[0].mxu0
    %v804 = vadd.f32 %v171, %v803
    %v805 = vpop.f32.mrb[0].mxu0
    %v806 = vpop.f32.mrb[0].mxu0
    %v807 = vadd.f32 %v171, %v806
    %v808 = vpop.f32.mrb[0].mxu0
    %809 = vmatprep.mubr.bf16.mxu0 %v476
    %810 = vmatmul.mubr.bf16.gmra.mrb[0].mxu0 %v475
    %v811 = vpop.f32.mrb[0].mxu0
    %v812 = vadd.f32 %v171, %v811
    %v813 = vpop.f32.mrb[0].mxu0
    %v814 = vpop.f32.mrb[0].mxu0
    %v815 = vadd.f32 %v171, %v814
    %v816 = vpop.f32.mrb[0].mxu0
    %817 = vmatprep.mubr.bf16.mxu0 %v478
    %818 = vmatmul.mubr.bf16.gmra.mrb[0].mxu0 %v477
    %v819 = vpop.f32.mrb[0].mxu0
    %v820 = vadd.f32 %v171, %v819
    %v821 = vpop.f32.mrb[0].mxu0
    %v822 = vpop.f32.mrb[0].mxu0
    %v823 = vadd.f32 %v171, %v822
    %v824 = vpop.f32.mrb[0].mxu0
    %825 = vmatprep.mubr.bf16.mxu0 %v480
    %826 = vmatmul.mubr.bf16.gmra.mrb[0].mxu0 %v479
    %v827 = vpop.f32.mrb[0].mxu0
    %v828 = vadd.f32 %v171, %v827
    %v829 = vpop.f32.mrb[0].mxu0
    %v830 = vpop.f32.mrb[0].mxu0
    %v831 = vadd.f32 %v171, %v830
    %v832 = vpop.f32.mrb[0].mxu0
    %833 = vmatprep.mubr.bf16.mxu0 %v482
    %834 = vmatmul.mubr.bf16.gmra.mrb[0].mxu0 %v481
    %v835 = vpop.f32.mrb[0].mxu0
    %v836 = vadd.f32 %v171, %v835
    %v837 = vpop.f32.mrb[0].mxu0
    %v838 = vpop.f32.mrb[0].mxu0
    %v839 = vadd.f32 %v171, %v838
    %v840 = vpop.f32.mrb[0].mxu0
    %841 = vmatprep.mubr.bf16.mxu0 %v484
    %842 = vmatmul.mubr.bf16.gmra.mrb[0].mxu0 %v483
    %v843 = vpop.f32.mrb[0].mxu0
    %v844 = vadd.f32 %v171, %v843
    %v845 = vpop.f32.mrb[0].mxu0
    %v846 = vpop.f32.mrb[0].mxu0
    %v847 = vadd.f32 %v171, %v846
    %v848 = vpop.f32.mrb[0].mxu0
    %849 = vmatprep.mubr.bf16.mxu0 %v486
    %850 = vmatmul.mubr.bf16.gmra.mrb[0].mxu0 %v485
    %v851 = vpop.f32.mrb[0].mxu0
    %v852 = vadd.f32 %v171, %v851
    %v853 = vpop.f32.mrb[0].mxu0
    %v854 = vpop.f32.mrb[0].mxu0
    %v855 = vadd.f32 %v171, %v854
    %v856 = vpop.f32.mrb[0].mxu0
    %857 = vmatprep.mubr.bf16.mxu0 %v488
    %858 = vmatmul.mubr.bf16.gmra.mrb[0].mxu0 %v487
    %v859 = vpop.f32.mrb[0].mxu0
    %v860 = vadd.f32 %v171, %v859
    %v861 = vpop.f32.mrb[0].mxu0
    %v862 = vpop.f32.mrb[0].mxu0
    %v863 = vadd.f32 %v171, %v862
    %v864 = vpop.f32.mrb[0].mxu0
    %865 = vmatprep.mubr.bf16.mxu0 %v490
    %866 = vmatmul.mubr.bf16.gmra.mrb[0].mxu0 %v489
    %v867 = vpop.f32.mrb[0].mxu0
    %v868 = vadd.f32 %v171, %v867
    %v869 = vpop.f32.mrb[0].mxu0
    %v870 = vpop.f32.mrb[0].mxu0
    %v871 = vadd.f32 %v171, %v870
    %v872 = vpop.f32.mrb[0].mxu0
    %873 = vmatprep.mubr.bf16.mxu0 %v492
    %874 = vmatmul.mubr.bf16.gmra.mrb[0].mxu0 %v491
    %v875 = vpop.f32.mrb[0].mxu0
    %v876 = vadd.f32 %v171, %v875
    %v877 = vpop.f32.mrb[0].mxu0
    %v878 = vpop.f32.mrb[0].mxu0
    %v879 = vadd.f32 %v171, %v878
    %v880 = vpop.f32.mrb[0].mxu0
    %881 = vmatprep.mubr.bf16.mxu0 %v494
    %882 = vmatmul.mubr.bf16.gmra.mrb[0].mxu0 %v493
    %v883 = vpop.f32.mrb[0].mxu0
    %v884 = vadd.f32 %v171, %v883
    %v885 = vpop.f32.mrb[0].mxu0
    %v886 = vpop.f32.mrb[0].mxu0
    %v887 = vadd.f32 %v171, %v886
    %v888 = vpop.f32.mrb[0].mxu0
    %889 = vmatprep.mubr.bf16.mxu0 %v496
    %890 = vmatmul.mubr.bf16.gmra.mrb[0].mxu0 %v495
    %v891 = vpop.f32.mrb[0].mxu0
    %v892 = vadd.f32 %v171, %v891
    %v893 = vpop.f32.mrb[0].mxu0
    %v894 = vpop.f32.mrb[0].mxu0
    %v895 = vadd.f32 %v171, %v894
    %v896 = vpop.f32.mrb[0].mxu0
    %897 = vmatprep.mubr.bf16.mxu0 %v498
    %898 = vmatmul.mubr.bf16.gmra.mrb[0].mxu0 %v497
    %v899 = vpop.f32.mrb[0].mxu0
    %v900 = vadd.f32 %v171, %v899
    %v901 = vpop.f32.mrb[0].mxu0
    %v902 = vpop.f32.mrb[0].mxu0
    %v903 = vadd.f32 %v171, %v902
    %v904 = vpop.f32.mrb[0].mxu0
    %905 = vmatprep.mubr.bf16.mxu0 %v500
    %906 = vmatmul.mubr.bf16.gmra.mrb[0].mxu0 %v499
    %v907 = vpop.f32.mrb[0].mxu0
    %v908 = vadd.f32 %v171, %v907
    %v909 = vpop.f32.mrb[0].mxu0
    %v910 = vpop.f32.mrb[0].mxu0
    %v911 = vadd.f32 %v171, %v910
    %v912 = vpop.f32.mrb[0].mxu0
    %913 = vmatprep.mubr.bf16.mxu0 %v502
    %914 = vmatmul.mubr.bf16.gmra.mrb[0].mxu0 %v501
    %v915 = vpop.f32.mrb[0].mxu0
    %v916 = vadd.f32 %v171, %v915
    %v917 = vpop.f32.mrb[0].mxu0
    %v918 = vpop.f32.mrb[0].mxu0
    %v919 = vadd.f32 %v171, %v918
    %v920 = vpop.f32.mrb[0].mxu0
    %921 = vmatprep.mubr.bf16.mxu0 %v504
    %922 = vmatmul.mubr.bf16.gmra.mrb[0].mxu0 %v503
    %v923 = vpop.f32.mrb[0].mxu0
    %v924 = vadd.f32 %v171, %v923
    %v925 = vpop.f32.mrb[0].mxu0
    %v926 = vpop.f32.mrb[0].mxu0
    %v927 = vadd.f32 %v171, %v926
    %v928 = vpop.f32.mrb[0].mxu0
    %929 = vmatprep.mubr.bf16.mxu0 %v506
    %930 = vmatmul.mubr.bf16.gmra.mrb[0].mxu0 %v505
    %v931 = vpop.f32.mrb[0].mxu0
    %v932 = vadd.f32 %v171, %v931
    %v933 = vpop.f32.mrb[0].mxu0
    %v934 = vpop.f32.mrb[0].mxu0
    %v935 = vadd.f32 %v171, %v934
    %v936 = vpop.f32.mrb[0].mxu0
    %937 = vmatprep.mubr.bf16.mxu0 %v508
    %938 = vmatmul.mubr.bf16.gmra.mrb[0].mxu0 %v507
    %v939 = vpop.f32.mrb[0].mxu0
    %v940 = vadd.f32 %v171, %v939
    %v941 = vpop.f32.mrb[0].mxu0
    %v942 = vpop.f32.mrb[0].mxu0
    %v943 = vadd.f32 %v171, %v942
    %v944 = vpop.f32.mrb[0].mxu0
    %945 = vmatprep.mubr.bf16.mxu0 %v510
    %946 = vmatmul.mubr.bf16.gmra.mrb[0].mxu0 %v509
    %v947 = vpop.f32.mrb[0].mxu0
    %v948 = vadd.f32 %v171, %v947
    %v949 = vpop.f32.mrb[0].mxu0
    %v950 = vpop.f32.mrb[0].mxu0
    %v951 = vadd.f32 %v171, %v950
    %v952 = vpop.f32.mrb[0].mxu0
    %953 = vmatprep.mubr.bf16.mxu0 %v512
    %954 = vmatmul.mubr.bf16.gmra.mrb[0].mxu0 %v511
    %v955 = vpop.f32.mrb[0].mxu0
    %v956 = vadd.f32 %v171, %v955
    %v957 = vpop.f32.mrb[0].mxu0
    %v958 = vpop.f32.mrb[0].mxu0
    %v959 = vadd.f32 %v171, %v958
    %v960 = vpop.f32.mrb[0].mxu0
    %961 = vmatprep.mubr.bf16.mxu0 %v514
    %962 = vmatmul.mubr.bf16.gmra.mrb[0].mxu0 %v513
    %v963 = vpop.f32.mrb[0].mxu0
    %v964 = vadd.f32 %v171, %v963
    %v965 = vpop.f32.mrb[0].mxu0
    %v966 = vpop.f32.mrb[0].mxu0
    %v967 = vadd.f32 %v171, %v966
    %v968 = vpop.f32.mrb[0].mxu0
    %969 = vmatprep.mubr.bf16.mxu0 %v516
    %970 = vmatmul.mubr.bf16.gmra.mrb[0].mxu0 %v515
    %v971 = vpop.f32.mrb[0].mxu0
    %v972 = vadd.f32 %v171, %v971
    %v973 = vpop.f32.mrb[0].mxu0
    %v974 = vpop.f32.mrb[0].mxu0
    %v975 = vadd.f32 %v171, %v974
    %v976 = vpop.f32.mrb[0].mxu0
    %977 = vmatprep.mubr.bf16.mxu0 %v518
    %978 = vmatmul.mubr.bf16.gmra.mrb[0].mxu0 %v517
    %v979 = vpop.f32.mrb[0].mxu0
    %v980 = vadd.f32 %v171, %v979
    %v981 = vpop.f32.mrb[0].mxu0
    %v982 = vpop.f32.mrb[0].mxu0
    %v983 = vadd.f32 %v171, %v982
    %v984 = vpop.f32.mrb[0].mxu0
    %985 = vmatprep.mubr.bf16.mxu0 %v520
    %986 = vmatmul.mubr.bf16.gmra.mrb[0].mxu0 %v519
    %v987 = vpop.f32.mrb[0].mxu0
    %v988 = vadd.f32 %v171, %v987
    %v989 = vpop.f32.mrb[0].mxu0
    %v990 = vpop.f32.mrb[0].mxu0
    %v991 = vadd.f32 %v171, %v990
    %v992 = vpop.f32.mrb[0].mxu0
    %993 = vmatprep.mubr.bf16.mxu0 %v522
    %994 = vmatmul.mubr.bf16.gmra.mrb[0].mxu0 %v521
    %v995 = vpop.f32.mrb[0].mxu0
    %v996 = vadd.f32 %v171, %v995
    %v997 = vpop.f32.mrb[0].mxu0
    %v998 = vpop.f32.mrb[0].mxu0
    %v999 = vadd.f32 %v171, %v998
    %v1000 = vpop.f32.mrb[0].mxu0
    %1001 = vmatprep.mubr.bf16.mxu0 %v524
    %1002 = vmatmul.mubr.bf16.gmra.mrb[0].mxu0 %v523
    %v1003 = vpop.f32.mrb[0].mxu0
    %v1004 = vadd.f32 %v171, %v1003
    %v1005 = vpop.f32.mrb[0].mxu0
    %v1006 = vpop.f32.mrb[0].mxu0
    %v1007 = vadd.f32 %v171, %v1006
    %v1008 = vpop.f32.mrb[0].mxu0
    %1009 = vmatprep.mubr.bf16.mxu0 %v526
    %1010 = vmatmul.mubr.bf16.gmra.mrb[0].mxu0 %v525
    %v1011 = vpop.f32.mrb[0].mxu0
    %v1012 = vadd.f32 %v171, %v1011
    %v1013 = vpop.f32.mrb[0].mxu0
    %v1014 = vpop.f32.mrb[0].mxu0
    %v1015 = vadd.f32 %v171, %v1014
    %v1016 = vpop.f32.mrb[0].mxu0
    %1017 = vmatprep.mubr.bf16.mxu0 %v528
    %1018 = vmatmul.mubr.bf16.gmra.mrb[0].mxu0 %v527
    %v1019 = vpop.f32.mrb[0].mxu0
    %v1020 = vadd.f32 %v171, %v1019
    %v1021 = vpop.f32.mrb[0].mxu0
    %v1022 = vpop.f32.mrb[0].mxu0
    %v1023 = vadd.f32 %v171, %v1022
    %v1024 = vpop.f32.mrb[0].mxu0
    %1025 = vmatprep.mubr.bf16.mxu0 %v530
    %1026 = vmatmul.mubr.bf16.gmra.mrb[0].mxu0 %v529
    %v1027 = vpop.f32.mrb[0].mxu0
    %v1028 = vadd.f32 %v171, %v1027
    %v1029 = vpop.f32.mrb[0].mxu0
    %v1030 = vpop.f32.mrb[0].mxu0
    %v1031 = vadd.f32 %v171, %v1030
    %v1032 = vpop.f32.mrb[0].mxu0
    %1033 = vmatprep.mubr.bf16.mxu0 %v532
    %1034 = vmatmul.mubr.bf16.gmra.mrb[0].mxu0 %v531
    %v1035 = vpop.f32.mrb[0].mxu0
    %v1036 = vadd.f32 %v171, %v1035
    %v1037 = vpop.f32.mrb[0].mxu0
    %v1038 = vpop.f32.mrb[0].mxu0
    %v1039 = vadd.f32 %v171, %v1038
    %v1040 = vpop.f32.mrb[0].mxu0
    %1041 = vmatprep.mubr.bf16.mxu0 %v534
    %1042 = vmatmul.mubr.bf16.gmra.mrb[0].mxu0 %v533
    %v1043 = vpop.f32.mrb[0].mxu0
    %v1044 = vadd.f32 %v171, %v1043
    %v1045 = vpop.f32.mrb[0].mxu0
    %v1046 = vpop.f32.mrb[0].mxu0
    %v1047 = vadd.f32 %v171, %v1046
    %v1048 = vpop.f32.mrb[0].mxu0
    %1049 = vmatprep.mubr.bf16.mxu0 %v536
    %1050 = vmatmul.mubr.bf16.gmra.mrb[0].mxu0 %v535
    %v1051 = vpop.f32.mrb[0].mxu0
    %v1052 = vadd.f32 %v171, %v1051
    %v1053 = vpop.f32.mrb[0].mxu0
    %v1054 = vpop.f32.mrb[0].mxu0
    %v1055 = vadd.f32 %v171, %v1054
    %v1056 = vpop.f32.mrb[0].mxu0
    %1057 = vmatprep.mubr.bf16.mxu0 %v538
    %1058 = vmatmul.mubr.bf16.gmra.mrb[0].mxu0 %v537
    %v1059 = vpop.f32.mrb[0].mxu0
    %v1060 = vadd.f32 %v171, %v1059
    %v1061 = vpop.f32.mrb[0].mxu0
    %v1062 = vpop.f32.mrb[0].mxu0
    %v1063 = vadd.f32 %v171, %v1062
    %v1064 = vpop.f32.mrb[0].mxu0
    %1065 = vmatprep.mubr.bf16.mxu0 %v540
    %1066 = vmatmul.mubr.bf16.gmra.mrb[0].mxu0 %v539
    %v1067 = vpop.f32.mrb[0].mxu0
    %v1068 = vadd.f32 %v171, %v1067
    %v1069 = vpop.f32.mrb[0].mxu0
    %v1070 = vpop.f32.mrb[0].mxu0
    %v1071 = vadd.f32 %v171, %v1070
    %v1072 = vpop.f32.mrb[0].mxu0
    %1073 = vmatprep.mubr.bf16.mxu0 %v542
    %1074 = vmatmul.mubr.bf16.gmra.mrb[0].mxu0 %v541
    %v1075 = vpop.f32.mrb[0].mxu0
    %v1076 = vadd.f32 %v171, %v1075
    %v1077 = vpop.f32.mrb[0].mxu0
    %v1078 = vpop.f32.mrb[0].mxu0
    %v1079 = vadd.f32 %v171, %v1078
    %v1080 = vpop.f32.mrb[0].mxu0
    %1081 = vmatprep.mubr.bf16.mxu0 %v544
    %1082 = vmatmul.mubr.bf16.gmra.mrb[0].mxu0 %v543
    %v1083 = vpop.f32.mrb[0].mxu0
    %v1084 = vadd.f32 %v171, %v1083
    %v1085 = vpop.f32.mrb[0].mxu0
    %v1086 = vpop.f32.mrb[0].mxu0
    %v1087 = vadd.f32 %v171, %v1086
    %v1088 = vpop.f32.mrb[0].mxu0
    %1089 = vmatprep.mubr.bf16.mxu0 %v546
    %1090 = vmatmul.mubr.bf16.gmra.mrb[0].mxu0 %v545
    %v1091 = vpop.f32.mrb[0].mxu0
    %v1092 = vadd.f32 %v171, %v1091
    %v1093 = vpop.f32.mrb[0].mxu0
    %v1094 = vpop.f32.mrb[0].mxu0
    %v1095 = vadd.f32 %v171, %v1094
    %v1096 = vpop.f32.mrb[0].mxu0
    %1097 = vmatprep.mubr.bf16.mxu0 %v548
    %1098 = vmatmul.mubr.bf16.gmra.mrb[0].mxu0 %v547
    %v1099 = vpop.f32.mrb[0].mxu0
    %v1100 = vadd.f32 %v171, %v1099
    %v1101 = vpop.f32.mrb[0].mxu0
    %v1102 = vpop.f32.mrb[0].mxu0
    %v1103 = vadd.f32 %v171, %v1102
    %v1104 = vpop.f32.mrb[0].mxu0
    %1105 = vmatprep.mubr.bf16.mxu0 %v550
    %1106 = vmatmul.mubr.bf16.gmra.mrb[0].mxu0 %v549
    %v1107 = vpop.f32.mrb[0].mxu0
    %v1108 = vadd.f32 %v171, %v1107
    %v1109 = vpop.f32.mrb[0].mxu0
    %v1110 = vpop.f32.mrb[0].mxu0
    %v1111 = vadd.f32 %v171, %v1110
    %v1112 = vpop.f32.mrb[0].mxu0
    %1113 = vmatprep.mubr.bf16.mxu0 %v552
    %1114 = vmatmul.mubr.bf16.gmra.mrb[0].mxu0 %v551
    %v1115 = vpop.f32.mrb[0].mxu0
    %v1116 = vadd.f32 %v171, %v1115
    %v1117 = vpop.f32.mrb[0].mxu0
    %v1118 = vpop.f32.mrb[0].mxu0
    %v1119 = vadd.f32 %v171, %v1118
    %v1120 = vpop.f32.mrb[0].mxu0
    %1121 = vmatprep.mubr.bf16.mxu0 %v554
    %1122 = vmatmul.mubr.bf16.gmra.mrb[0].mxu0 %v553
    %v1123 = vpop.f32.mrb[0].mxu0
    %v1124 = vadd.f32 %v171, %v1123
    %v1125 = vpop.f32.mrb[0].mxu0
    %v1126 = vpop.f32.mrb[0].mxu0
    %v1127 = vadd.f32 %v171, %v1126
    %v1128 = vpop.f32.mrb[0].mxu0
    %1129 = vmatprep.mubr.bf16.mxu0 %v556
    %1130 = vmatmul.mubr.bf16.gmra.mrb[0].mxu0 %v555
    %v1131 = vpop.f32.mrb[0].mxu0
    %v1132 = vadd.f32 %v171, %v1131
    %v1133 = vpop.f32.mrb[0].mxu0
    %v1134 = vpop.f32.mrb[0].mxu0
    %v1135 = vadd.f32 %v171, %v1134
    %v1136 = vpop.f32.mrb[0].mxu0
    %1137 = vmatprep.mubr.bf16.mxu0 %v558
    %1138 = vmatmul.mubr.bf16.gmra.mrb[0].mxu0 %v557
    %v1139 = vpop.f32.mrb[0].mxu0
    %v1140 = vadd.f32 %v171, %v1139
    %v1141 = vpop.f32.mrb[0].mxu0
    %v1142 = vpop.f32.mrb[0].mxu0
    %v1143 = vadd.f32 %v171, %v1142
    %v1144 = vpop.f32.mrb[0].mxu0
    %1145 = vmatprep.mubr.bf16.mxu0 %v560
    %1146 = vmatmul.mubr.bf16.gmra.mrb[0].mxu0 %v559
    %v1147 = vpop.f32.mrb[0].mxu0
    %v1148 = vadd.f32 %v171, %v1147
    %v1149 = vpop.f32.mrb[0].mxu0
    %v1150 = vpop.f32.mrb[0].mxu0
    %v1151 = vadd.f32 %v171, %v1150
    %v1152 = vpop.f32.mrb[0].mxu0
    %1153 = vmatprep.mubr.bf16.mxu0 %v562
    %1154 = vmatmul.mubr.bf16.gmra.mrb[0].mxu0 %v561
    %v1155 = vpop.f32.mrb[0].mxu0
    %v1156 = vadd.f32 %v171, %v1155
    %v1157 = vpop.f32.mrb[0].mxu0
    %v1158 = vpop.f32.mrb[0].mxu0
    %v1159 = vadd.f32 %v171, %v1158
    %v1160 = vpop.f32.mrb[0].mxu0
    %1161 = vmatprep.mubr.bf16.mxu0 %v564
    %1162 = vmatmul.mubr.bf16.gmra.mrb[0].mxu0 %v563
    %v1163 = vpop.f32.mrb[0].mxu0
    %v1164 = vadd.f32 %v171, %v1163
    %v1165 = vpop.f32.mrb[0].mxu0
    %v1166 = vpop.f32.mrb[0].mxu0
    %v1167 = vadd.f32 %v171, %v1166
    %v1168 = vpop.f32.mrb[0].mxu0
    %1169 = vmatprep.mubr.bf16.mxu0 %v566
    %1170 = vmatmul.mubr.bf16.gmra.mrb[0].mxu0 %v565
    %v1171 = vpop.f32.mrb[0].mxu0
    %v1172 = vadd.f32 %v171, %v1171
    %v1173 = vpop.f32.mrb[0].mxu0
    %v1174 = vpop.f32.mrb[0].mxu0
    %v1175 = vadd.f32 %v171, %v1174
    %v1176 = vpop.f32.mrb[0].mxu0
    %1177 = vmatprep.mubr.bf16.mxu0 %v568
    %1178 = vmatmul.mubr.bf16.gmra.mrb[0].mxu0 %v567
    %v1179 = vpop.f32.mrb[0].mxu0
    %v1180 = vadd.f32 %v171, %v1179
    %v1181 = vpop.f32.mrb[0].mxu0
    %v1182 = vpop.f32.mrb[0].mxu0
    %v1183 = vadd.f32 %v171, %v1182
    %v1184 = vpop.f32.mrb[0].mxu0
    %1185 = vmatprep.mubr.bf16.mxu0 %v570
    %1186 = vmatmul.mubr.bf16.gmra.mrb[0].mxu0 %v569
    %v1187 = vpop.f32.mrb[0].mxu0
    %v1188 = vadd.f32 %v171, %v1187
    %v1189 = vpop.f32.mrb[0].mxu0
    %v1190 = vpop.f32.mrb[0].mxu0
    %v1191 = vadd.f32 %v171, %v1190
    %v1192 = vpop.f32.mrb[0].mxu0
    %1193 = vmatprep.mubr.bf16.mxu0 %v572
    %1194 = vmatmul.mubr.bf16.gmra.mrb[0].mxu0 %v571
    %v1195 = vpop.f32.mrb[0].mxu0
    %v1196 = vadd.f32 %v171, %v1195
    %v1197 = vpop.f32.mrb[0].mxu0
    %v1198 = vpop.f32.mrb[0].mxu0
    %v1199 = vadd.f32 %v171, %v1198
    %v1200 = vpop.f32.mrb[0].mxu0
    %1201 = vdwg.mxu0
    %v1202 = vtanh.pop %v804
    %v1203 = vtanh.pop %v807
    %v1204 = vtanh.pop %v812
    %v1205 = vtanh.pop %v815
    %v1206 = vtanh.pop %v820
    %v1207 = vtanh.pop %v823
    %v1208 = vtanh.pop %v828
    %v1209 = vtanh.pop %v831
    %v1210 = vtanh.pop %v836
    %v1211 = vtanh.pop %v839
    %v1212 = vtanh.pop %v844
    %v1213 = vtanh.pop %v847
    %v1214 = vtanh.pop %v852
    %v1215 = vtanh.pop %v855
    %v1216 = vtanh.pop %v860
    %v1217 = vtanh.pop %v863
    %v1218 = vtanh.pop %v868
    %v1219 = vtanh.pop %v871
    %v1220 = vtanh.pop %v876
    %v1221 = vtanh.pop %v879
    %v1222 = vtanh.pop %v884
    %v1223 = vtanh.pop %v887
    %v1224 = vtanh.pop %v892
    %v1225 = vtanh.pop %v895
    %v1226 = vtanh.pop %v900
    %v1227 = vtanh.pop %v903
    %v1228 = vtanh.pop %v908
    %v1229 = vtanh.pop %v911
    %v1230 = vtanh.pop %v916
    %v1231 = vtanh.pop %v919
    %v1232 = vtanh.pop %v924
    %v1233 = vtanh.pop %v927
    %v1234 = vtanh.pop %v932
    %v1235 = vtanh.pop %v935
    %v1236 = vtanh.pop %v940
    %v1237 = vtanh.pop %v943
    %v1238 = vtanh.pop %v948
    %v1239 = vtanh.pop %v951
    %v1240 = vtanh.pop %v956
    %v1241 = vtanh.pop %v959
    %v1242 = vtanh.pop %v964
    %v1243 = vtanh.pop %v967
    %v1244 = vtanh.pop %v972
    %v1245 = vtanh.pop %v975
    %v1246 = vtanh.pop %v980
    %v1247 = vtanh.pop %v983
    %v1248 = vtanh.pop %v988
    %v1249 = vtanh.pop %v991
    %v1250 = vtanh.pop %v996
    %v1251 = vtanh.pop %v999
    %v1252 = vtanh.pop %v1004
    %v1253 = vtanh.pop %v1007
    %v1254 = vtanh.pop %v1012
    %v1255 = vtanh.pop %v1015
    %v1256 = vtanh.pop %v1020
    %v1257 = vtanh.pop %v1023
    %v1258 = vtanh.pop %v1028
    %v1259 = vtanh.pop %v1031
    %v1260 = vtanh.pop %v1036
    %v1261 = vtanh.pop %v1039
    %v1262 = vtanh.pop %v1044
    %v1263 = vtanh.pop %v1047
    %v1264 = vtanh.pop %v1052
    %v1265 = vtanh.pop %v1055
    %v1266 = vtanh.pop %v1060
    %v1267 = vtanh.pop %v1063
    %v1268 = vtanh.pop %v1068
    %v1269 = vtanh.pop %v1071
    %v1270 = vtanh.pop %v1076
    %v1271 = vtanh.pop %v1079
    %v1272 = vtanh.pop %v1084
    %v1273 = vtanh.pop %v1087
    %v1274 = vtanh.pop %v1092
    %v1275 = vtanh.pop %v1095
    %v1276 = vtanh.pop %v1100
    %v1277 = vtanh.pop %v1103
    %v1278 = vtanh.pop %v1108
    %v1279 = vtanh.pop %v1111
    %v1280 = vtanh.pop %v1116
    %v1281 = vtanh.pop %v1119
    %v1282 = vtanh.pop %v1124
    %v1283 = vtanh.pop %v1127
    %v1284 = vtanh.pop %v1132
    %v1285 = vtanh.pop %v1135
    %v1286 = vtanh.pop %v1140
    %v1287 = vtanh.pop %v1143
    %v1288 = vtanh.pop %v1148
    %v1289 = vtanh.pop %v1151
    %v1290 = vtanh.pop %v1156
    %v1291 = vtanh.pop %v1159
    %v1292 = vtanh.pop %v1164
    %v1293 = vtanh.pop %v1167
    %v1294 = vtanh.pop %v1172
    %v1295 = vtanh.pop %v1175
    %v1296 = vtanh.pop %v1180
    %v1297 = vtanh.pop %v1183
    %v1298 = vtanh.pop %v1188
    %v1299 = vtanh.pop %v1191
    %v1300 = vtanh.pop %v1196
    %v1301 = vtanh.pop %v1199
    %v1302 = vadd.f32 %v1202, %v1227
    %v1303 = vadd.f32 %v1203, %v1228
    %v1304 = vadd.f32 %v1204, %v1229
    %v1305 = vadd.f32 %v1205, %v1230
    %v1306 = vadd.f32 %v1206, %v1231
    %v1307 = vadd.f32 %v1207, %v1232
    %v1308 = vadd.f32 %v1208, %v1233
    %v1309 = vadd.f32 %v1209, %v1234
    %v1310 = vadd.f32 %v1210, %v1235
    %v1311 = vadd.f32 %v1211, %v1236
    %v1312 = vadd.f32 %v1212, %v1237
    %v1313 = vadd.f32 %v1213, %v1238
    %v1314 = vadd.f32 %v1214, %v1239
    %v1315 = vadd.f32 %v1215, %v1240
    %v1316 = vadd.f32 %v1216, %v1241
    %v1317 = vadd.f32 %v1217, %v1242
    %v1318 = vadd.f32 %v1218, %v1243
    %v1319 = vadd.f32 %v1219, %v1244
    %v1320 = vadd.f32 %v1220, %v1245
    %v1321 = vadd.f32 %v1221, %v1246
    %v1322 = vadd.f32 %v1222, %v1247
    %v1323 = vadd.f32 %v1223, %v1248
    %v1324 = vadd.f32 %v1224, %v1249
    %v1325 = vadd.f32 %v1225, %v1250
    %v1326 = vadd.f32 %v1226, %v1251
    %v1327 = vadd.f32 %v1302, %v1252
    %v1328 = vadd.f32 %v1303, %v1253
    %v1329 = vadd.f32 %v1304, %v1254
    %v1330 = vadd.f32 %v1305, %v1255
    %v1331 = vadd.f32 %v1306, %v1256
    %v1332 = vadd.f32 %v1307, %v1257
    %v1333 = vadd.f32 %v1308, %v1258
    %v1334 = vadd.f32 %v1309, %v1259
    %v1335 = vadd.f32 %v1310, %v1260
    %v1336 = vadd.f32 %v1311, %v1261
    %v1337 = vadd.f32 %v1312, %v1262
    %v1338 = vadd.f32 %v1313, %v1263
    %v1339 = vadd.f32 %v1314, %v1264
    %v1340 = vadd.f32 %v1315, %v1265
    %v1341 = vadd.f32 %v1316, %v1266
    %v1342 = vadd.f32 %v1317, %v1267
    %v1343 = vadd.f32 %v1318, %v1268
    %v1344 = vadd.f32 %v1319, %v1269
    %v1345 = vadd.f32 %v1320, %v1270
    %v1346 = vadd.f32 %v1321, %v1271
    %v1347 = vadd.f32 %v1322, %v1272
    %v1348 = vadd.f32 %v1323, %v1273
    %v1349 = vadd.f32 %v1324, %v1274
    %v1350 = vadd.f32 %v1325, %v1275
    %v1351 = vadd.f32 %v1326, %v1276
    %v1352 = vadd.f32 %v1327, %v1277
    %v1353 = vadd.f32 %v1328, %v1278
    %v1354 = vadd.f32 %v1329, %v1279
    %v1355 = vadd.f32 %v1330, %v1280
    %v1356 = vadd.f32 %v1331, %v1281
    %v1357 = vadd.f32 %v1332, %v1282
    %v1358 = vadd.f32 %v1333, %v1283
    %v1359 = vadd.f32 %v1334, %v1284
    %v1360 = vadd.f32 %v1335, %v1285
    %v1361 = vadd.f32 %v1336, %v1286
    %v1362 = vadd.f32 %v1337, %v1287
    %v1363 = vadd.f32 %v1338, %v1288
    %v1364 = vadd.f32 %v1339, %v1289
    %v1365 = vadd.f32 %v1340, %v1290
    %v1366 = vadd.f32 %v1341, %v1291
    %v1367 = vadd.f32 %v1342, %v1292
    %v1368 = vadd.f32 %v1343, %v1293
    %v1369 = vadd.f32 %v1344, %v1294
    %v1370 = vadd.f32 %v1345, %v1295
    %v1371 = vadd.f32 %v1346, %v1296
    %v1372 = vadd.f32 %v1347, %v1297
    %v1373 = vadd.f32 %v1348, %v1298
    %v1374 = vadd.f32 %v1349, %v1299
    %v1375 = vadd.f32 %v1350, %v1300
    %v1376 = vadd.f32 %v1351, %v1301
    %v1377 = vmul.f32 %v1352, 0.25
    %v1378 = vmul.f32 %v1353, 0.25
    %v1379 = vmul.f32 %v1354, 0.25
    %v1380 = vmul.f32 %v1355, 0.25
    %v1381 = vmul.f32 %v1356, 0.25
    %v1382 = vmul.f32 %v1357, 0.25
    %v1383 = vmul.f32 %v1358, 0.25
    %v1384 = vmul.f32 %v1359, 0.25
    %v1385 = vmul.f32 %v1360, 0.25
    %v1386 = vmul.f32 %v1361, 0.25
    %v1387 = vmul.f32 %v1362, 0.25
    %v1388 = vmul.f32 %v1363, 0.25
    %v1389 = vmul.f32 %v1364, 0.25
    %v1390 = vmul.f32 %v1365, 0.25
    %v1391 = vmul.f32 %v1366, 0.25
    %v1392 = vmul.f32 %v1367, 0.25
    %v1393 = vmul.f32 %v1368, 0.25
    %v1394 = vmul.f32 %v1369, 0.25
    %v1395 = vmul.f32 %v1370, 0.25
    %v1396 = vmul.f32 %v1371, 0.25
    %v1397 = vmul.f32 %v1372, 0.25
    %v1398 = vmul.f32 %v1373, 0.25
    %v1399 = vmul.f32 %v1374, 0.25
    %v1400 = vmul.f32 %v1375, 0.25
    %v1401 = vmul.f32 %v1376, 0.25
    %v1402 = vpack.c.bf16 %v1378, %v1377
    %v1403 = vpack.c.bf16 %v1380, %v1379
    %v1404 = vpack.c.bf16 %v1382, %v1381
    %v1405 = vpack.c.bf16 %v1384, %v1383
    %v1406 = vpack.c.bf16 %v1386, %v1385
    %v1407 = vpack.c.bf16 %v1388, %v1387
    %v1408 = vpack.c.bf16 %v1390, %v1389
    %v1409 = vpack.c.bf16 %v1392, %v1391
    %v1410 = vpack.c.bf16 %v1394, %v1393
    %v1411 = vpack.c.bf16 %v1396, %v1395
    %v1412 = vpack.c.bf16 %v1398, %v1397
    %v1413 = vpack.c.bf16 %v1400, %v1399
    %v1414 = vpack.c.bf16 %v1401, %v1401
    %v1415 = vld [vmem:[%s3] sm:$0xf]
    %v1416 = vld [vmem:[%s3 + $0x4] sm:$0xf]
    %s1417 = scalar_lea.vmem %s3, 8
    %v1418 = vld [vmem:[%s1417] sm:$0xf]
    %v1419 = vld [vmem:[%s1417 + $0x4] sm:$0xf]
    %v1421 = vrot.slane %v1402, 4
    %v1424 = vunpack.c.l.b16 %v1418
    %v1425 = vunpack.c.l.b16 %v1419
    %v1426 = vpack.c.b16 %v1425, %v1424
    %vm1428 = vcmask 130048
    %v1430 = vsel %vm1428, %v1421, 0
    %1432 = vmatprep.subr.bf16.mxu0 0
    %1433 = vmatpush1.bf16.msra.mxu0 %v1426
    %1434 = vmatprep.subr.bf16.mxu0 0
    %1435 = vmatpush1.bf16.msra.mxu0 0
    %1436 = vmatprep.subr.bf16.mxu0 0
    %1437 = vmatpush1.bf16.msra.mxu0 0
    %1438 = vmatprep.subr.bf16.mxu0 0
    %1439 = vmatpush1.bf16.msra.mxu0 0
    %1440 = vmatprep.subr.bf16.mxu0 0
    %1441 = vmatpush1.bf16.msra.mxu0 0
    %1442 = vmatprep.subr.bf16.mxu0 0
    %1443 = vmatpush1.bf16.msra.mxu0 0
    %1444 = vmatprep.subr.bf16.mxu0 0
    %1445 = vmatpush1.bf16.msra.mxu0 0
    %1446 = vmatprep.subr.bf16.mxu0 0
    %1447 = vmatpush1.bf16.msra.mxu0 0
    %1448 = vmatprep.subr.bf16.mxu0 0
    %1449 = vmatpush1.bf16.msra.mxu0 0
    %1450 = vmatprep.subr.bf16.mxu0 0
    %1451 = vmatpush1.bf16.msra.mxu0 0
    %1452 = vmatprep.subr.bf16.mxu0 0
    %1453 = vmatpush1.bf16.msra.mxu0 0
    %1454 = vmatprep.subr.bf16.mxu0 0
    %1455 = vmatpush1.bf16.msra.mxu0 0
    %1456 = vmatprep.subr.bf16.mxu0 0
    %1457 = vmatpush1.bf16.msra.mxu0 0
    %1458 = vmatprep.subr.bf16.mxu0 0
    %1459 = vmatpush1.bf16.msra.mxu0 0
    %1460 = vmatprep.subr.bf16.mxu0 0
    %1461 = vmatpush1.bf16.msra.mxu0 0
    %1462 = vmatprep.subr.bf16.mxu0 0
    %1463 = vmatpush1.bf16.msra.mxu0 0
    %1464 = vmatprep.mubr.bf16.mxu0 0
    %1465 = vmatmul.mubr.bf16.gmra.mrb[0].mxu0 %v1430
    %v1466 = vpop.f32.mrb[0].mxu0
    %v1467 = vadd.f32 0.0, %v1466
    %v1468 = vpop.f32.mrb[0].mxu0
    %v1469 = vpop.f32.mrb[0].mxu0
    %v1470 = vpop.f32.mrb[0].mxu0
    %1471 = vdwg.mxu0
    %v1474 = vunpack.c.l.b16 %v1415
    %v1475 = vunpack.c.l.b16 %v1416
    %v1476 = vpack.c.b16 %v1475, %v1474
    %v1479 = vsel %vm1428, %v1402, 0
    %1481 = vmatprep.subr.bf16.mxu0 0
    %1482 = vmatpush1.bf16.msra.mxu0 %v1476
    %1483 = vmatprep.subr.bf16.mxu0 0
    %1484 = vmatpush1.bf16.msra.mxu0 0
    %1485 = vmatprep.subr.bf16.mxu0 0
    %1486 = vmatpush1.bf16.msra.mxu0 0
    %1487 = vmatprep.subr.bf16.mxu0 0
    %1488 = vmatpush1.bf16.msra.mxu0 0
    %1489 = vmatprep.subr.bf16.mxu0 0
    %1490 = vmatpush1.bf16.msra.mxu0 0
    %1491 = vmatprep.subr.bf16.mxu0 0
    %1492 = vmatpush1.bf16.msra.mxu0 0
    %1493 = vmatprep.subr.bf16.mxu0 0
    %1494 = vmatpush1.bf16.msra.mxu0 0
    %1495 = vmatprep.subr.bf16.mxu0 0
    %1496 = vmatpush1.bf16.msra.mxu0 0
    %1497 = vmatprep.subr.bf16.mxu0 0
    %1498 = vmatpush1.bf16.msra.mxu0 0
    %1499 = vmatprep.subr.bf16.mxu0 0
    %1500 = vmatpush1.bf16.msra.mxu0 0
    %1501 = vmatprep.subr.bf16.mxu0 0
    %1502 = vmatpush1.bf16.msra.mxu0 0
    %1503 = vmatprep.subr.bf16.mxu0 0
    %1504 = vmatpush1.bf16.msra.mxu0 0
    %1505 = vmatprep.subr.bf16.mxu0 0
    %1506 = vmatpush1.bf16.msra.mxu0 0
    %1507 = vmatprep.subr.bf16.mxu0 0
    %1508 = vmatpush1.bf16.msra.mxu0 0
    %1509 = vmatprep.subr.bf16.mxu0 0
    %1510 = vmatpush1.bf16.msra.mxu0 0
    %1511 = vmatprep.subr.bf16.mxu0 0
    %1512 = vmatpush1.bf16.msra.mxu0 0
    %1513 = vmatprep.mubr.bf16.mxu0 0
    %1514 = vmatmul.mubr.bf16.gmra.mrb[0].mxu0 %v1479
    %v1515 = vpop.f32.mrb[0].mxu0
    %v1516 = vadd.f32 %v1467, %v1515
    %v1517 = vpop.f32.mrb[0].mxu0
    %v1518 = vpop.f32.mrb[0].mxu0
    %v1519 = vpop.f32.mrb[0].mxu0
    %1520 = vdwg.mxu0
    %s1521 = scalar_lea.vmem %s3, 16
    %v1522 = vld [vmem:[%s1521] sm:$0xf]
    %v1523 = vld [vmem:[%s1521 + $0x4] sm:$0xf]
    %v1526 = vunpack.c.l.b16 %v1522
    %v1527 = vunpack.c.l.b16 %v1523
    %v1528 = vpack.c.b16 %v1527, %v1526
    %v1531 = vsel %vm1428, %v1403, 0
    %1533 = vmatprep.subr.bf16.mxu0 0
    %1534 = vmatpush1.bf16.msra.mxu0 %v1528
    %1535 = vmatprep.subr.bf16.mxu0 0
    %1536 = vmatpush1.bf16.msra.mxu0 0
    %1537 = vmatprep.subr.bf16.mxu0 0
    %1538 = vmatpush1.bf16.msra.mxu0 0
    %1539 = vmatprep.subr.bf16.mxu0 0
    %1540 = vmatpush1.bf16.msra.mxu0 0
    %1541 = vmatprep.subr.bf16.mxu0 0
    %1542 = vmatpush1.bf16.msra.mxu0 0
    %1543 = vmatprep.subr.bf16.mxu0 0
    %1544 = vmatpush1.bf16.msra.mxu0 0
    %1545 = vmatprep.subr.bf16.mxu0 0
    %1546 = vmatpush1.bf16.msra.mxu0 0
    %1547 = vmatprep.subr.bf16.mxu0 0
    %1548 = vmatpush1.bf16.msra.mxu0 0
    %1549 = vmatprep.subr.bf16.mxu0 0
    %1550 = vmatpush1.bf16.msra.mxu0 0
    %1551 = vmatprep.subr.bf16.mxu0 0
    %1552 = vmatpush1.bf16.msra.mxu0 0
    %1553 = vmatprep.subr.bf16.mxu0 0
    %1554 = vmatpush1.bf16.msra.mxu0 0
    %1555 = vmatprep.subr.bf16.mxu0 0
    %1556 = vmatpush1.bf16.msra.mxu0 0
    %1557 = vmatprep.subr.bf16.mxu0 0
    %1558 = vmatpush1.bf16.msra.mxu0 0
    %1559 = vmatprep.subr.bf16.mxu0 0
    %1560 = vmatpush1.bf16.msra.mxu0 0
    %1561 = vmatprep.subr.bf16.mxu0 0
    %1562 = vmatpush1.bf16.msra.mxu0 0
    %1563 = vmatprep.subr.bf16.mxu0 0
    %1564 = vmatpush1.bf16.msra.mxu0 0
    %1565 = vmatprep.mubr.bf16.mxu0 0
    %1566 = vmatmul.mubr.bf16.gmra.mrb[0].mxu0 %v1531
    %v1567 = vpop.f32.mrb[0].mxu0
    %v1568 = vadd.f32 0.0, %v1567
    %v1569 = vpop.f32.mrb[0].mxu0
    %v1570 = vpop.f32.mrb[0].mxu0
    %v1571 = vpop.f32.mrb[0].mxu0
    %1572 = vdwg.mxu0
    %v1573 = vadd.f32 %v1516, %v1568
    %s1574 = scalar_lea.vmem %s3, 24
    %v1575 = vld [vmem:[%s1574] sm:$0xf]
    %v1576 = vld [vmem:[%s1574 + $0x4] sm:$0xf]
    %v1578 = vrot.slane %v1403, 4
    %v1581 = vunpack.c.l.b16 %v1575
    %v1582 = vunpack.c.l.b16 %v1576
    %v1583 = vpack.c.b16 %v1582, %v1581
    %v1586 = vsel %vm1428, %v1578, 0
    %1588 = vmatprep.subr.bf16.mxu0 0
    %1589 = vmatpush1.bf16.msra.mxu0 %v1583
    %1590 = vmatprep.subr.bf16.mxu0 0
    %1591 = vmatpush1.bf16.msra.mxu0 0
    %1592 = vmatprep.subr.bf16.mxu0 0
    %1593 = vmatpush1.bf16.msra.mxu0 0
    %1594 = vmatprep.subr.bf16.mxu0 0
    %1595 = vmatpush1.bf16.msra.mxu0 0
    %1596 = vmatprep.subr.bf16.mxu0 0
    %1597 = vmatpush1.bf16.msra.mxu0 0
    %1598 = vmatprep.subr.bf16.mxu0 0
    %1599 = vmatpush1.bf16.msra.mxu0 0
    %1600 = vmatprep.subr.bf16.mxu0 0
    %1601 = vmatpush1.bf16.msra.mxu0 0
    %1602 = vmatprep.subr.bf16.mxu0 0
    %1603 = vmatpush1.bf16.msra.mxu0 0
    %1604 = vmatprep.subr.bf16.mxu0 0
    %1605 = vmatpush1.bf16.msra.mxu0 0
    %1606 = vmatprep.subr.bf16.mxu0 0
    %1607 = vmatpush1.bf16.msra.mxu0 0
    %1608 = vmatprep.subr.bf16.mxu0 0
    %1609 = vmatpush1.bf16.msra.mxu0 0
    %1610 = vmatprep.subr.bf16.mxu0 0
    %1611 = vmatpush1.bf16.msra.mxu0 0
    %1612 = vmatprep.subr.bf16.mxu0 0
    %1613 = vmatpush1.bf16.msra.mxu0 0
    %1614 = vmatprep.subr.bf16.mxu0 0
    %1615 = vmatpush1.bf16.msra.mxu0 0
    %1616 = vmatprep.subr.bf16.mxu0 0
    %1617 = vmatpush1.bf16.msra.mxu0 0
    %1618 = vmatprep.subr.bf16.mxu0 0
    %1619 = vmatpush1.bf16.msra.mxu0 0
    %1620 = vmatprep.mubr.bf16.mxu0 0
    %1621 = vmatmul.mubr.bf16.gmra.mrb[0].mxu0 %v1586
    %v1622 = vpop.f32.mrb[0].mxu0
    %v1623 = vadd.f32 0.0, %v1622
    %v1624 = vpop.f32.mrb[0].mxu0
    %v1625 = vpop.f32.mrb[0].mxu0
    %v1626 = vpop.f32.mrb[0].mxu0
    %1627 = vdwg.mxu0
    %v1628 = vadd.f32 %v1573, %v1623
    %s1629 = scalar_lea.vmem %s3, 32
    %v1630 = vld [vmem:[%s1629] sm:$0xf]
    %v1631 = vld [vmem:[%s1629 + $0x4] sm:$0xf]
    %v1634 = vunpack.c.l.b16 %v1630
    %v1635 = vunpack.c.l.b16 %v1631
    %v1636 = vpack.c.b16 %v1635, %v1634
    %v1639 = vsel %vm1428, %v1404, 0
    %1641 = vmatprep.subr.bf16.mxu0 0
    %1642 = vmatpush1.bf16.msra.mxu0 %v1636
    %1643 = vmatprep.subr.bf16.mxu0 0
    %1644 = vmatpush1.bf16.msra.mxu0 0
    %1645 = vmatprep.subr.bf16.mxu0 0
    %1646 = vmatpush1.bf16.msra.mxu0 0
    %1647 = vmatprep.subr.bf16.mxu0 0
    %1648 = vmatpush1.bf16.msra.mxu0 0
    %1649 = vmatprep.subr.bf16.mxu0 0
    %1650 = vmatpush1.bf16.msra.mxu0 0
    %1651 = vmatprep.subr.bf16.mxu0 0
    %1652 = vmatpush1.bf16.msra.mxu0 0
    %1653 = vmatprep.subr.bf16.mxu0 0
    %1654 = vmatpush1.bf16.msra.mxu0 0
    %1655 = vmatprep.subr.bf16.mxu0 0
    %1656 = vmatpush1.bf16.msra.mxu0 0
    %1657 = vmatprep.subr.bf16.mxu0 0
    %1658 = vmatpush1.bf16.msra.mxu0 0
    %1659 = vmatprep.subr.bf16.mxu0 0
    %1660 = vmatpush1.bf16.msra.mxu0 0
    %1661 = vmatprep.subr.bf16.mxu0 0
    %1662 = vmatpush1.bf16.msra.mxu0 0
    %1663 = vmatprep.subr.bf16.mxu0 0
    %1664 = vmatpush1.bf16.msra.mxu0 0
    %1665 = vmatprep.subr.bf16.mxu0 0
    %1666 = vmatpush1.bf16.msra.mxu0 0
    %1667 = vmatprep.subr.bf16.mxu0 0
    %1668 = vmatpush1.bf16.msra.mxu0 0
    %1669 = vmatprep.subr.bf16.mxu0 0
    %1670 = vmatpush1.bf16.msra.mxu0 0
    %1671 = vmatprep.subr.bf16.mxu0 0
    %1672 = vmatpush1.bf16.msra.mxu0 0
    %1673 = vmatprep.mubr.bf16.mxu0 0
    %1674 = vmatmul.mubr.bf16.gmra.mrb[0].mxu0 %v1639
    %v1675 = vpop.f32.mrb[0].mxu0
    %v1676 = vadd.f32 0.0, %v1675
    %v1677 = vpop.f32.mrb[0].mxu0
    %v1678 = vpop.f32.mrb[0].mxu0
    %v1679 = vpop.f32.mrb[0].mxu0
    %1680 = vdwg.mxu0
    %v1681 = vadd.f32 %v1628, %v1676
    %s1682 = scalar_lea.vmem %s3, 40
    %v1683 = vld [vmem:[%s1682] sm:$0xf]
    %v1684 = vld [vmem:[%s1682 + $0x4] sm:$0xf]
    %v1686 = vrot.slane %v1404, 4
    %v1689 = vunpack.c.l.b16 %v1683
    %v1690 = vunpack.c.l.b16 %v1684
    %v1691 = vpack.c.b16 %v1690, %v1689
    %v1694 = vsel %vm1428, %v1686, 0
    %1696 = vmatprep.subr.bf16.mxu0 0
    %1697 = vmatpush1.bf16.msra.mxu0 %v1691
    %1698 = vmatprep.subr.bf16.mxu0 0
    %1699 = vmatpush1.bf16.msra.mxu0 0
    %1700 = vmatprep.subr.bf16.mxu0 0
    %1701 = vmatpush1.bf16.msra.mxu0 0
    %1702 = vmatprep.subr.bf16.mxu0 0
    %1703 = vmatpush1.bf16.msra.mxu0 0
    %1704 = vmatprep.subr.bf16.mxu0 0
    %1705 = vmatpush1.bf16.msra.mxu0 0
    %1706 = vmatprep.subr.bf16.mxu0 0
    %1707 = vmatpush1.bf16.msra.mxu0 0
    %1708 = vmatprep.subr.bf16.mxu0 0
    %1709 = vmatpush1.bf16.msra.mxu0 0
    %1710 = vmatprep.subr.bf16.mxu0 0
    %1711 = vmatpush1.bf16.msra.mxu0 0
    %1712 = vmatprep.subr.bf16.mxu0 0
    %1713 = vmatpush1.bf16.msra.mxu0 0
    %1714 = vmatprep.subr.bf16.mxu0 0
    %1715 = vmatpush1.bf16.msra.mxu0 0
    %1716 = vmatprep.subr.bf16.mxu0 0
    %1717 = vmatpush1.bf16.msra.mxu0 0
    %1718 = vmatprep.subr.bf16.mxu0 0
    %1719 = vmatpush1.bf16.msra.mxu0 0
    %1720 = vmatprep.subr.bf16.mxu0 0
    %1721 = vmatpush1.bf16.msra.mxu0 0
    %1722 = vmatprep.subr.bf16.mxu0 0
    %1723 = vmatpush1.bf16.msra.mxu0 0
    %1724 = vmatprep.subr.bf16.mxu0 0
    %1725 = vmatpush1.bf16.msra.mxu0 0
    %1726 = vmatprep.subr.bf16.mxu0 0
    %1727 = vmatpush1.bf16.msra.mxu0 0
    %1728 = vmatprep.mubr.bf16.mxu0 0
    %1729 = vmatmul.mubr.bf16.gmra.mrb[0].mxu0 %v1694
    %v1730 = vpop.f32.mrb[0].mxu0
    %v1731 = vadd.f32 0.0, %v1730
    %v1732 = vpop.f32.mrb[0].mxu0
    %v1733 = vpop.f32.mrb[0].mxu0
    %v1734 = vpop.f32.mrb[0].mxu0
    %1735 = vdwg.mxu0
    %v1736 = vadd.f32 %v1681, %v1731
    %s1737 = scalar_lea.vmem %s3, 48
    %v1738 = vld [vmem:[%s1737] sm:$0xf]
    %v1739 = vld [vmem:[%s1737 + $0x4] sm:$0xf]
    %v1742 = vunpack.c.l.b16 %v1738
    %v1743 = vunpack.c.l.b16 %v1739
    %v1744 = vpack.c.b16 %v1743, %v1742
    %v1747 = vsel %vm1428, %v1405, 0
    %1749 = vmatprep.subr.bf16.mxu0 0
    %1750 = vmatpush1.bf16.msra.mxu0 %v1744
    %1751 = vmatprep.subr.bf16.mxu0 0
    %1752 = vmatpush1.bf16.msra.mxu0 0
    %1753 = vmatprep.subr.bf16.mxu0 0
    %1754 = vmatpush1.bf16.msra.mxu0 0
    %1755 = vmatprep.subr.bf16.mxu0 0
    %1756 = vmatpush1.bf16.msra.mxu0 0
    %1757 = vmatprep.subr.bf16.mxu0 0
    %1758 = vmatpush1.bf16.msra.mxu0 0
    %1759 = vmatprep.subr.bf16.mxu0 0
    %1760 = vmatpush1.bf16.msra.mxu0 0
    %1761 = vmatprep.subr.bf16.mxu0 0
    %1762 = vmatpush1.bf16.msra.mxu0 0
    %1763 = vmatprep.subr.bf16.mxu0 0
    %1764 = vmatpush1.bf16.msra.mxu0 0
    %1765 = vmatprep.subr.bf16.mxu0 0
    %1766 = vmatpush1.bf16.msra.mxu0 0
    %1767 = vmatprep.subr.bf16.mxu0 0
    %1768 = vmatpush1.bf16.msra.mxu0 0
    %1769 = vmatprep.subr.bf16.mxu0 0
    %1770 = vmatpush1.bf16.msra.mxu0 0
    %1771 = vmatprep.subr.bf16.mxu0 0
    %1772 = vmatpush1.bf16.msra.mxu0 0
    %1773 = vmatprep.subr.bf16.mxu0 0
    %1774 = vmatpush1.bf16.msra.mxu0 0
    %1775 = vmatprep.subr.bf16.mxu0 0
    %1776 = vmatpush1.bf16.msra.mxu0 0
    %1777 = vmatprep.subr.bf16.mxu0 0
    %1778 = vmatpush1.bf16.msra.mxu0 0
    %1779 = vmatprep.subr.bf16.mxu0 0
    %1780 = vmatpush1.bf16.msra.mxu0 0
    %1781 = vmatprep.mubr.bf16.mxu0 0
    %1782 = vmatmul.mubr.bf16.gmra.mrb[0].mxu0 %v1747
    %v1783 = vpop.f32.mrb[0].mxu0
    %v1784 = vadd.f32 0.0, %v1783
    %v1785 = vpop.f32.mrb[0].mxu0
    %v1786 = vpop.f32.mrb[0].mxu0
    %v1787 = vpop.f32.mrb[0].mxu0
    %1788 = vdwg.mxu0
    %v1789 = vadd.f32 %v1736, %v1784
    %s1790 = scalar_lea.vmem %s3, 56
    %v1791 = vld [vmem:[%s1790] sm:$0xf]
    %v1792 = vld [vmem:[%s1790 + $0x4] sm:$0xf]
    %v1794 = vrot.slane %v1405, 4
    %v1797 = vunpack.c.l.b16 %v1791
    %v1798 = vunpack.c.l.b16 %v1792
    %v1799 = vpack.c.b16 %v1798, %v1797
    %v1802 = vsel %vm1428, %v1794, 0
    %1804 = vmatprep.subr.bf16.mxu0 0
    %1805 = vmatpush1.bf16.msra.mxu0 %v1799
    %1806 = vmatprep.subr.bf16.mxu0 0
    %1807 = vmatpush1.bf16.msra.mxu0 0
    %1808 = vmatprep.subr.bf16.mxu0 0
    %1809 = vmatpush1.bf16.msra.mxu0 0
    %1810 = vmatprep.subr.bf16.mxu0 0
    %1811 = vmatpush1.bf16.msra.mxu0 0
    %1812 = vmatprep.subr.bf16.mxu0 0
    %1813 = vmatpush1.bf16.msra.mxu0 0
    %1814 = vmatprep.subr.bf16.mxu0 0
    %1815 = vmatpush1.bf16.msra.mxu0 0
    %1816 = vmatprep.subr.bf16.mxu0 0
    %1817 = vmatpush1.bf16.msra.mxu0 0
    %1818 = vmatprep.subr.bf16.mxu0 0
    %1819 = vmatpush1.bf16.msra.mxu0 0
    %1820 = vmatprep.subr.bf16.mxu0 0
    %1821 = vmatpush1.bf16.msra.mxu0 0
    %1822 = vmatprep.subr.bf16.mxu0 0
    %1823 = vmatpush1.bf16.msra.mxu0 0
    %1824 = vmatprep.subr.bf16.mxu0 0
    %1825 = vmatpush1.bf16.msra.mxu0 0
    %1826 = vmatprep.subr.bf16.mxu0 0
    %1827 = vmatpush1.bf16.msra.mxu0 0
    %1828 = vmatprep.subr.bf16.mxu0 0
    %1829 = vmatpush1.bf16.msra.mxu0 0
    %1830 = vmatprep.subr.bf16.mxu0 0
    %1831 = vmatpush1.bf16.msra.mxu0 0
    %1832 = vmatprep.subr.bf16.mxu0 0
    %1833 = vmatpush1.bf16.msra.mxu0 0
    %1834 = vmatprep.subr.bf16.mxu0 0
    %1835 = vmatpush1.bf16.msra.mxu0 0
    %1836 = vmatprep.mubr.bf16.mxu0 0
    %1837 = vmatmul.mubr.bf16.gmra.mrb[0].mxu0 %v1802
    %v1838 = vpop.f32.mrb[0].mxu0
    %v1839 = vadd.f32 0.0, %v1838
    %v1840 = vpop.f32.mrb[0].mxu0
    %v1841 = vpop.f32.mrb[0].mxu0
    %v1842 = vpop.f32.mrb[0].mxu0
    %1843 = vdwg.mxu0
    %v1844 = vadd.f32 %v1789, %v1839
    %s1845 = scalar_lea.vmem %s3, 64
    %v1846 = vld [vmem:[%s1845] sm:$0xf]
    %v1847 = vld [vmem:[%s1845 + $0x4] sm:$0xf]
    %v1850 = vunpack.c.l.b16 %v1846
    %v1851 = vunpack.c.l.b16 %v1847
    %v1852 = vpack.c.b16 %v1851, %v1850
    %v1855 = vsel %vm1428, %v1406, 0
    %1857 = vmatprep.subr.bf16.mxu0 0
    %1858 = vmatpush1.bf16.msra.mxu0 %v1852
    %1859 = vmatprep.subr.bf16.mxu0 0
    %1860 = vmatpush1.bf16.msra.mxu0 0
    %1861 = vmatprep.subr.bf16.mxu0 0
    %1862 = vmatpush1.bf16.msra.mxu0 0
    %1863 = vmatprep.subr.bf16.mxu0 0
    %1864 = vmatpush1.bf16.msra.mxu0 0
    %1865 = vmatprep.subr.bf16.mxu0 0
    %1866 = vmatpush1.bf16.msra.mxu0 0
    %1867 = vmatprep.subr.bf16.mxu0 0
    %1868 = vmatpush1.bf16.msra.mxu0 0
    %1869 = vmatprep.subr.bf16.mxu0 0
    %1870 = vmatpush1.bf16.msra.mxu0 0
    %1871 = vmatprep.subr.bf16.mxu0 0
    %1872 = vmatpush1.bf16.msra.mxu0 0
    %1873 = vmatprep.subr.bf16.mxu0 0
    %1874 = vmatpush1.bf16.msra.mxu0 0
    %1875 = vmatprep.subr.bf16.mxu0 0
    %1876 = vmatpush1.bf16.msra.mxu0 0
    %1877 = vmatprep.subr.bf16.mxu0 0
    %1878 = vmatpush1.bf16.msra.mxu0 0
    %1879 = vmatprep.subr.bf16.mxu0 0
    %1880 = vmatpush1.bf16.msra.mxu0 0
    %1881 = vmatprep.subr.bf16.mxu0 0
    %1882 = vmatpush1.bf16.msra.mxu0 0
    %1883 = vmatprep.subr.bf16.mxu0 0
    %1884 = vmatpush1.bf16.msra.mxu0 0
    %1885 = vmatprep.subr.bf16.mxu0 0
    %1886 = vmatpush1.bf16.msra.mxu0 0
    %1887 = vmatprep.subr.bf16.mxu0 0
    %1888 = vmatpush1.bf16.msra.mxu0 0
    %1889 = vmatprep.mubr.bf16.mxu0 0
    %1890 = vmatmul.mubr.bf16.gmra.mrb[0].mxu0 %v1855
    %v1891 = vpop.f32.mrb[0].mxu0
    %v1892 = vadd.f32 0.0, %v1891
    %v1893 = vpop.f32.mrb[0].mxu0
    %v1894 = vpop.f32.mrb[0].mxu0
    %v1895 = vpop.f32.mrb[0].mxu0
    %1896 = vdwg.mxu0
    %v1897 = vadd.f32 %v1844, %v1892
    %s1898 = scalar_lea.vmem %s3, 72
    %v1899 = vld [vmem:[%s1898] sm:$0xf]
    %v1900 = vld [vmem:[%s1898 + $0x4] sm:$0xf]
    %v1902 = vrot.slane %v1406, 4
    %v1905 = vunpack.c.l.b16 %v1899
    %v1906 = vunpack.c.l.b16 %v1900
    %v1907 = vpack.c.b16 %v1906, %v1905
    %v1910 = vsel %vm1428, %v1902, 0
    %1912 = vmatprep.subr.bf16.mxu0 0
    %1913 = vmatpush1.bf16.msra.mxu0 %v1907
    %1914 = vmatprep.subr.bf16.mxu0 0
    %1915 = vmatpush1.bf16.msra.mxu0 0
    %1916 = vmatprep.subr.bf16.mxu0 0
    %1917 = vmatpush1.bf16.msra.mxu0 0
    %1918 = vmatprep.subr.bf16.mxu0 0
    %1919 = vmatpush1.bf16.msra.mxu0 0
    %1920 = vmatprep.subr.bf16.mxu0 0
    %1921 = vmatpush1.bf16.msra.mxu0 0
    %1922 = vmatprep.subr.bf16.mxu0 0
    %1923 = vmatpush1.bf16.msra.mxu0 0
    %1924 = vmatprep.subr.bf16.mxu0 0
    %1925 = vmatpush1.bf16.msra.mxu0 0
    %1926 = vmatprep.subr.bf16.mxu0 0
    %1927 = vmatpush1.bf16.msra.mxu0 0
    %1928 = vmatprep.subr.bf16.mxu0 0
    %1929 = vmatpush1.bf16.msra.mxu0 0
    %1930 = vmatprep.subr.bf16.mxu0 0
    %1931 = vmatpush1.bf16.msra.mxu0 0
    %1932 = vmatprep.subr.bf16.mxu0 0
    %1933 = vmatpush1.bf16.msra.mxu0 0
    %1934 = vmatprep.subr.bf16.mxu0 0
    %1935 = vmatpush1.bf16.msra.mxu0 0
    %1936 = vmatprep.subr.bf16.mxu0 0
    %1937 = vmatpush1.bf16.msra.mxu0 0
    %1938 = vmatprep.subr.bf16.mxu0 0
    %1939 = vmatpush1.bf16.msra.mxu0 0
    %1940 = vmatprep.subr.bf16.mxu0 0
    %1941 = vmatpush1.bf16.msra.mxu0 0
    %1942 = vmatprep.subr.bf16.mxu0 0
    %1943 = vmatpush1.bf16.msra.mxu0 0
    %1944 = vmatprep.mubr.bf16.mxu0 0
    %1945 = vmatmul.mubr.bf16.gmra.mrb[0].mxu0 %v1910
    %v1946 = vpop.f32.mrb[0].mxu0
    %v1947 = vadd.f32 0.0, %v1946
    %v1948 = vpop.f32.mrb[0].mxu0
    %v1949 = vpop.f32.mrb[0].mxu0
    %v1950 = vpop.f32.mrb[0].mxu0
    %1951 = vdwg.mxu0
    %v1952 = vadd.f32 %v1897, %v1947
    %s1953 = scalar_lea.vmem %s3, 80
    %v1954 = vld [vmem:[%s1953] sm:$0xf]
    %v1955 = vld [vmem:[%s1953 + $0x4] sm:$0xf]
    %v1958 = vunpack.c.l.b16 %v1954
    %v1959 = vunpack.c.l.b16 %v1955
    %v1960 = vpack.c.b16 %v1959, %v1958
    %v1963 = vsel %vm1428, %v1407, 0
    %1965 = vmatprep.subr.bf16.mxu0 0
    %1966 = vmatpush1.bf16.msra.mxu0 %v1960
    %1967 = vmatprep.subr.bf16.mxu0 0
    %1968 = vmatpush1.bf16.msra.mxu0 0
    %1969 = vmatprep.subr.bf16.mxu0 0
    %1970 = vmatpush1.bf16.msra.mxu0 0
    %1971 = vmatprep.subr.bf16.mxu0 0
    %1972 = vmatpush1.bf16.msra.mxu0 0
    %1973 = vmatprep.subr.bf16.mxu0 0
    %1974 = vmatpush1.bf16.msra.mxu0 0
    %1975 = vmatprep.subr.bf16.mxu0 0
    %1976 = vmatpush1.bf16.msra.mxu0 0
    %1977 = vmatprep.subr.bf16.mxu0 0
    %1978 = vmatpush1.bf16.msra.mxu0 0
    %1979 = vmatprep.subr.bf16.mxu0 0
    %1980 = vmatpush1.bf16.msra.mxu0 0
    %1981 = vmatprep.subr.bf16.mxu0 0
    %1982 = vmatpush1.bf16.msra.mxu0 0
    %1983 = vmatprep.subr.bf16.mxu0 0
    %1984 = vmatpush1.bf16.msra.mxu0 0
    %1985 = vmatprep.subr.bf16.mxu0 0
    %1986 = vmatpush1.bf16.msra.mxu0 0
    %1987 = vmatprep.subr.bf16.mxu0 0
    %1988 = vmatpush1.bf16.msra.mxu0 0
    %1989 = vmatprep.subr.bf16.mxu0 0
    %1990 = vmatpush1.bf16.msra.mxu0 0
    %1991 = vmatprep.subr.bf16.mxu0 0
    %1992 = vmatpush1.bf16.msra.mxu0 0
    %1993 = vmatprep.subr.bf16.mxu0 0
    %1994 = vmatpush1.bf16.msra.mxu0 0
    %1995 = vmatprep.subr.bf16.mxu0 0
    %1996 = vmatpush1.bf16.msra.mxu0 0
    %1997 = vmatprep.mubr.bf16.mxu0 0
    %1998 = vmatmul.mubr.bf16.gmra.mrb[0].mxu0 %v1963
    %v1999 = vpop.f32.mrb[0].mxu0
    %v2000 = vadd.f32 0.0, %v1999
    %v2001 = vpop.f32.mrb[0].mxu0
    %v2002 = vpop.f32.mrb[0].mxu0
    %v2003 = vpop.f32.mrb[0].mxu0
    %2004 = vdwg.mxu0
    %v2005 = vadd.f32 %v1952, %v2000
    %s2006 = scalar_lea.vmem %s3, 88
    %v2007 = vld [vmem:[%s2006] sm:$0xf]
    %v2008 = vld [vmem:[%s2006 + $0x4] sm:$0xf]
    %v2010 = vrot.slane %v1407, 4
    %v2013 = vunpack.c.l.b16 %v2007
    %v2014 = vunpack.c.l.b16 %v2008
    %v2015 = vpack.c.b16 %v2014, %v2013
    %v2018 = vsel %vm1428, %v2010, 0
    %2020 = vmatprep.subr.bf16.mxu0 0
    %2021 = vmatpush1.bf16.msra.mxu0 %v2015
    %2022 = vmatprep.subr.bf16.mxu0 0
    %2023 = vmatpush1.bf16.msra.mxu0 0
    %2024 = vmatprep.subr.bf16.mxu0 0
    %2025 = vmatpush1.bf16.msra.mxu0 0
    %2026 = vmatprep.subr.bf16.mxu0 0
    %2027 = vmatpush1.bf16.msra.mxu0 0
    %2028 = vmatprep.subr.bf16.mxu0 0
    %2029 = vmatpush1.bf16.msra.mxu0 0
    %2030 = vmatprep.subr.bf16.mxu0 0
    %2031 = vmatpush1.bf16.msra.mxu0 0
    %2032 = vmatprep.subr.bf16.mxu0 0
    %2033 = vmatpush1.bf16.msra.mxu0 0
    %2034 = vmatprep.subr.bf16.mxu0 0
    %2035 = vmatpush1.bf16.msra.mxu0 0
    %2036 = vmatprep.subr.bf16.mxu0 0
    %2037 = vmatpush1.bf16.msra.mxu0 0
    %2038 = vmatprep.subr.bf16.mxu0 0
    %2039 = vmatpush1.bf16.msra.mxu0 0
    %2040 = vmatprep.subr.bf16.mxu0 0
    %2041 = vmatpush1.bf16.msra.mxu0 0
    %2042 = vmatprep.subr.bf16.mxu0 0
    %2043 = vmatpush1.bf16.msra.mxu0 0
    %2044 = vmatprep.subr.bf16.mxu0 0
    %2045 = vmatpush1.bf16.msra.mxu0 0
    %2046 = vmatprep.subr.bf16.mxu0 0
    %2047 = vmatpush1.bf16.msra.mxu0 0
    %2048 = vmatprep.subr.bf16.mxu0 0
    %2049 = vmatpush1.bf16.msra.mxu0 0
    %2050 = vmatprep.subr.bf16.mxu0 0
    %2051 = vmatpush1.bf16.msra.mxu0 0
    %2052 = vmatprep.mubr.bf16.mxu0 0
    %2053 = vmatmul.mubr.bf16.gmra.mrb[0].mxu0 %v2018
    %v2054 = vpop.f32.mrb[0].mxu0
    %v2055 = vadd.f32 0.0, %v2054
    %v2056 = vpop.f32.mrb[0].mxu0
    %v2057 = vpop.f32.mrb[0].mxu0
    %v2058 = vpop.f32.mrb[0].mxu0
    %2059 = vdwg.mxu0
    %v2060 = vadd.f32 %v2005, %v2055
    %s2061 = scalar_lea.vmem %s3, 96
    %v2062 = vld [vmem:[%s2061] sm:$0xf]
    %v2063 = vld [vmem:[%s2061 + $0x4] sm:$0xf]
    %v2066 = vunpack.c.l.b16 %v2062
    %v2067 = vunpack.c.l.b16 %v2063
    %v2068 = vpack.c.b16 %v2067, %v2066
    %v2071 = vsel %vm1428, %v1408, 0
    %2073 = vmatprep.subr.bf16.mxu0 0
    %2074 = vmatpush1.bf16.msra.mxu0 %v2068
    %2075 = vmatprep.subr.bf16.mxu0 0
    %2076 = vmatpush1.bf16.msra.mxu0 0
    %2077 = vmatprep.subr.bf16.mxu0 0
    %2078 = vmatpush1.bf16.msra.mxu0 0
    %2079 = vmatprep.subr.bf16.mxu0 0
    %2080 = vmatpush1.bf16.msra.mxu0 0
    %2081 = vmatprep.subr.bf16.mxu0 0
    %2082 = vmatpush1.bf16.msra.mxu0 0
    %2083 = vmatprep.subr.bf16.mxu0 0
    %2084 = vmatpush1.bf16.msra.mxu0 0
    %2085 = vmatprep.subr.bf16.mxu0 0
    %2086 = vmatpush1.bf16.msra.mxu0 0
    %2087 = vmatprep.subr.bf16.mxu0 0
    %2088 = vmatpush1.bf16.msra.mxu0 0
    %2089 = vmatprep.subr.bf16.mxu0 0
    %2090 = vmatpush1.bf16.msra.mxu0 0
    %2091 = vmatprep.subr.bf16.mxu0 0
    %2092 = vmatpush1.bf16.msra.mxu0 0
    %2093 = vmatprep.subr.bf16.mxu0 0
    %2094 = vmatpush1.bf16.msra.mxu0 0
    %2095 = vmatprep.subr.bf16.mxu0 0
    %2096 = vmatpush1.bf16.msra.mxu0 0
    %2097 = vmatprep.subr.bf16.mxu0 0
    %2098 = vmatpush1.bf16.msra.mxu0 0
    %2099 = vmatprep.subr.bf16.mxu0 0
    %2100 = vmatpush1.bf16.msra.mxu0 0
    %2101 = vmatprep.subr.bf16.mxu0 0
    %2102 = vmatpush1.bf16.msra.mxu0 0
    %2103 = vmatprep.subr.bf16.mxu0 0
    %2104 = vmatpush1.bf16.msra.mxu0 0
    %2105 = vmatprep.mubr.bf16.mxu0 0
    %2106 = vmatmul.mubr.bf16.gmra.mrb[0].mxu0 %v2071
    %v2107 = vpop.f32.mrb[0].mxu0
    %v2108 = vadd.f32 0.0, %v2107
    %v2109 = vpop.f32.mrb[0].mxu0
    %v2110 = vpop.f32.mrb[0].mxu0
    %v2111 = vpop.f32.mrb[0].mxu0
    %2112 = vdwg.mxu0
    %v2113 = vadd.f32 %v2060, %v2108
    %s2114 = scalar_lea.vmem %s3, 104
    %v2115 = vld [vmem:[%s2114] sm:$0xf]
    %v2116 = vld [vmem:[%s2114 + $0x4] sm:$0xf]
    %v2118 = vrot.slane %v1408, 4
    %v2121 = vunpack.c.l.b16 %v2115
    %v2122 = vunpack.c.l.b16 %v2116
    %v2123 = vpack.c.b16 %v2122, %v2121
    %v2126 = vsel %vm1428, %v2118, 0
    %2128 = vmatprep.subr.bf16.mxu0 0
    %2129 = vmatpush1.bf16.msra.mxu0 %v2123
    %2130 = vmatprep.subr.bf16.mxu0 0
    %2131 = vmatpush1.bf16.msra.mxu0 0
    %2132 = vmatprep.subr.bf16.mxu0 0
    %2133 = vmatpush1.bf16.msra.mxu0 0
    %2134 = vmatprep.subr.bf16.mxu0 0
    %2135 = vmatpush1.bf16.msra.mxu0 0
    %2136 = vmatprep.subr.bf16.mxu0 0
    %2137 = vmatpush1.bf16.msra.mxu0 0
    %2138 = vmatprep.subr.bf16.mxu0 0
    %2139 = vmatpush1.bf16.msra.mxu0 0
    %2140 = vmatprep.subr.bf16.mxu0 0
    %2141 = vmatpush1.bf16.msra.mxu0 0
    %2142 = vmatprep.subr.bf16.mxu0 0
    %2143 = vmatpush1.bf16.msra.mxu0 0
    %2144 = vmatprep.subr.bf16.mxu0 0
    %2145 = vmatpush1.bf16.msra.mxu0 0
    %2146 = vmatprep.subr.bf16.mxu0 0
    %2147 = vmatpush1.bf16.msra.mxu0 0
    %2148 = vmatprep.subr.bf16.mxu0 0
    %2149 = vmatpush1.bf16.msra.mxu0 0
    %2150 = vmatprep.subr.bf16.mxu0 0
    %2151 = vmatpush1.bf16.msra.mxu0 0
    %2152 = vmatprep.subr.bf16.mxu0 0
    %2153 = vmatpush1.bf16.msra.mxu0 0
    %2154 = vmatprep.subr.bf16.mxu0 0
    %2155 = vmatpush1.bf16.msra.mxu0 0
    %2156 = vmatprep.subr.bf16.mxu0 0
    %2157 = vmatpush1.bf16.msra.mxu0 0
    %2158 = vmatprep.subr.bf16.mxu0 0
    %2159 = vmatpush1.bf16.msra.mxu0 0
    %2160 = vmatprep.mubr.bf16.mxu0 0
    %2161 = vmatmul.mubr.bf16.gmra.mrb[0].mxu0 %v2126
    %v2162 = vpop.f32.mrb[0].mxu0
    %v2163 = vadd.f32 0.0, %v2162
    %v2164 = vpop.f32.mrb[0].mxu0
    %v2165 = vpop.f32.mrb[0].mxu0
    %v2166 = vpop.f32.mrb[0].mxu0
    %2167 = vdwg.mxu0
    %v2168 = vadd.f32 %v2113, %v2163
    %s2169 = scalar_lea.vmem %s3, 112
    %v2170 = vld [vmem:[%s2169] sm:$0xf]
    %v2171 = vld [vmem:[%s2169 + $0x4] sm:$0xf]
    %v2174 = vunpack.c.l.b16 %v2170
    %v2175 = vunpack.c.l.b16 %v2171
    %v2176 = vpack.c.b16 %v2175, %v2174
    %v2179 = vsel %vm1428, %v1409, 0
    %2181 = vmatprep.subr.bf16.mxu0 0
    %2182 = vmatpush1.bf16.msra.mxu0 %v2176
    %2183 = vmatprep.subr.bf16.mxu0 0
    %2184 = vmatpush1.bf16.msra.mxu0 0
    %2185 = vmatprep.subr.bf16.mxu0 0
    %2186 = vmatpush1.bf16.msra.mxu0 0
    %2187 = vmatprep.subr.bf16.mxu0 0
    %2188 = vmatpush1.bf16.msra.mxu0 0
    %2189 = vmatprep.subr.bf16.mxu0 0
    %2190 = vmatpush1.bf16.msra.mxu0 0
    %2191 = vmatprep.subr.bf16.mxu0 0
    %2192 = vmatpush1.bf16.msra.mxu0 0
    %2193 = vmatprep.subr.bf16.mxu0 0
    %2194 = vmatpush1.bf16.msra.mxu0 0
    %2195 = vmatprep.subr.bf16.mxu0 0
    %2196 = vmatpush1.bf16.msra.mxu0 0
    %2197 = vmatprep.subr.bf16.mxu0 0
    %2198 = vmatpush1.bf16.msra.mxu0 0
    %2199 = vmatprep.subr.bf16.mxu0 0
    %2200 = vmatpush1.bf16.msra.mxu0 0
    %2201 = vmatprep.subr.bf16.mxu0 0
    %2202 = vmatpush1.bf16.msra.mxu0 0
    %2203 = vmatprep.subr.bf16.mxu0 0
    %2204 = vmatpush1.bf16.msra.mxu0 0
    %2205 = vmatprep.subr.bf16.mxu0 0
    %2206 = vmatpush1.bf16.msra.mxu0 0
    %2207 = vmatprep.subr.bf16.mxu0 0
    %2208 = vmatpush1.bf16.msra.mxu0 0
    %2209 = vmatprep.subr.bf16.mxu0 0
    %2210 = vmatpush1.bf16.msra.mxu0 0
    %2211 = vmatprep.subr.bf16.mxu0 0
    %2212 = vmatpush1.bf16.msra.mxu0 0
    %2213 = vmatprep.mubr.bf16.mxu0 0
    %2214 = vmatmul.mubr.bf16.gmra.mrb[0].mxu0 %v2179
    %v2215 = vpop.f32.mrb[0].mxu0
    %v2216 = vadd.f32 0.0, %v2215
    %v2217 = vpop.f32.mrb[0].mxu0
    %v2218 = vpop.f32.mrb[0].mxu0
    %v2219 = vpop.f32.mrb[0].mxu0
    %2220 = vdwg.mxu0
    %v2221 = vadd.f32 %v2168, %v2216
    %s2222 = scalar_lea.vmem %s3, 120
    %v2223 = vld [vmem:[%s2222] sm:$0xf]
    %v2224 = vld [vmem:[%s2222 + $0x4] sm:$0xf]
    %v2226 = vrot.slane %v1409, 4
    %v2229 = vunpack.c.l.b16 %v2223
    %v2230 = vunpack.c.l.b16 %v2224
    %v2231 = vpack.c.b16 %v2230, %v2229
    %v2234 = vsel %vm1428, %v2226, 0
    %2236 = vmatprep.subr.bf16.mxu0 0
    %2237 = vmatpush1.bf16.msra.mxu0 %v2231
    %2238 = vmatprep.subr.bf16.mxu0 0
    %2239 = vmatpush1.bf16.msra.mxu0 0
    %2240 = vmatprep.subr.bf16.mxu0 0
    %2241 = vmatpush1.bf16.msra.mxu0 0
    %2242 = vmatprep.subr.bf16.mxu0 0
    %2243 = vmatpush1.bf16.msra.mxu0 0
    %2244 = vmatprep.subr.bf16.mxu0 0
    %2245 = vmatpush1.bf16.msra.mxu0 0
    %2246 = vmatprep.subr.bf16.mxu0 0
    %2247 = vmatpush1.bf16.msra.mxu0 0
    %2248 = vmatprep.subr.bf16.mxu0 0
    %2249 = vmatpush1.bf16.msra.mxu0 0
    %2250 = vmatprep.subr.bf16.mxu0 0
    %2251 = vmatpush1.bf16.msra.mxu0 0
    %2252 = vmatprep.subr.bf16.mxu0 0
    %2253 = vmatpush1.bf16.msra.mxu0 0
    %2254 = vmatprep.subr.bf16.mxu0 0
    %2255 = vmatpush1.bf16.msra.mxu0 0
    %2256 = vmatprep.subr.bf16.mxu0 0
    %2257 = vmatpush1.bf16.msra.mxu0 0
    %2258 = vmatprep.subr.bf16.mxu0 0
    %2259 = vmatpush1.bf16.msra.mxu0 0
    %2260 = vmatprep.subr.bf16.mxu0 0
    %2261 = vmatpush1.bf16.msra.mxu0 0
    %2262 = vmatprep.subr.bf16.mxu0 0
    %2263 = vmatpush1.bf16.msra.mxu0 0
    %2264 = vmatprep.subr.bf16.mxu0 0
    %2265 = vmatpush1.bf16.msra.mxu0 0
    %2266 = vmatprep.subr.bf16.mxu0 0
    %2267 = vmatpush1.bf16.msra.mxu0 0
    %2268 = vmatprep.mubr.bf16.mxu0 0
    %2269 = vmatmul.mubr.bf16.gmra.mrb[0].mxu0 %v2234
    %v2270 = vpop.f32.mrb[0].mxu0
    %v2271 = vadd.f32 0.0, %v2270
    %v2272 = vpop.f32.mrb[0].mxu0
    %v2273 = vpop.f32.mrb[0].mxu0
    %v2274 = vpop.f32.mrb[0].mxu0
    %2275 = vdwg.mxu0
    %v2276 = vadd.f32 %v2221, %v2271
    %s2277 = scalar_lea.vmem %s3, 128
    %v2278 = vld [vmem:[%s2277] sm:$0xf]
    %v2279 = vld [vmem:[%s2277 + $0x4] sm:$0xf]
    %v2282 = vunpack.c.l.b16 %v2278
    %v2283 = vunpack.c.l.b16 %v2279
    %v2284 = vpack.c.b16 %v2283, %v2282
    %v2287 = vsel %vm1428, %v1410, 0
    %2289 = vmatprep.subr.bf16.mxu0 0
    %2290 = vmatpush1.bf16.msra.mxu0 %v2284
    %2291 = vmatprep.subr.bf16.mxu0 0
    %2292 = vmatpush1.bf16.msra.mxu0 0
    %2293 = vmatprep.subr.bf16.mxu0 0
    %2294 = vmatpush1.bf16.msra.mxu0 0
    %2295 = vmatprep.subr.bf16.mxu0 0
    %2296 = vmatpush1.bf16.msra.mxu0 0
    %2297 = vmatprep.subr.bf16.mxu0 0
    %2298 = vmatpush1.bf16.msra.mxu0 0
    %2299 = vmatprep.subr.bf16.mxu0 0
    %2300 = vmatpush1.bf16.msra.mxu0 0
    %2301 = vmatprep.subr.bf16.mxu0 0
    %2302 = vmatpush1.bf16.msra.mxu0 0
    %2303 = vmatprep.subr.bf16.mxu0 0
    %2304 = vmatpush1.bf16.msra.mxu0 0
    %2305 = vmatprep.subr.bf16.mxu0 0
    %2306 = vmatpush1.bf16.msra.mxu0 0
    %2307 = vmatprep.subr.bf16.mxu0 0
    %2308 = vmatpush1.bf16.msra.mxu0 0
    %2309 = vmatprep.subr.bf16.mxu0 0
    %2310 = vmatpush1.bf16.msra.mxu0 0
    %2311 = vmatprep.subr.bf16.mxu0 0
    %2312 = vmatpush1.bf16.msra.mxu0 0
    %2313 = vmatprep.subr.bf16.mxu0 0
    %2314 = vmatpush1.bf16.msra.mxu0 0
    %2315 = vmatprep.subr.bf16.mxu0 0
    %2316 = vmatpush1.bf16.msra.mxu0 0
    %2317 = vmatprep.subr.bf16.mxu0 0
    %2318 = vmatpush1.bf16.msra.mxu0 0
    %2319 = vmatprep.subr.bf16.mxu0 0
    %2320 = vmatpush1.bf16.msra.mxu0 0
    %2321 = vmatprep.mubr.bf16.mxu0 0
    %2322 = vmatmul.mubr.bf16.gmra.mrb[0].mxu0 %v2287
    %v2323 = vpop.f32.mrb[0].mxu0
    %v2324 = vadd.f32 0.0, %v2323
    %v2325 = vpop.f32.mrb[0].mxu0
    %v2326 = vpop.f32.mrb[0].mxu0
    %v2327 = vpop.f32.mrb[0].mxu0
    %2328 = vdwg.mxu0
    %v2329 = vadd.f32 %v2276, %v2324
    %s2330 = scalar_lea.vmem %s3, 136
    %v2331 = vld [vmem:[%s2330] sm:$0xf]
    %v2332 = vld [vmem:[%s2330 + $0x4] sm:$0xf]
    %v2334 = vrot.slane %v1410, 4
    %v2337 = vunpack.c.l.b16 %v2331
    %v2338 = vunpack.c.l.b16 %v2332
    %v2339 = vpack.c.b16 %v2338, %v2337
    %v2342 = vsel %vm1428, %v2334, 0
    %2344 = vmatprep.subr.bf16.mxu0 0
    %2345 = vmatpush1.bf16.msra.mxu0 %v2339
    %2346 = vmatprep.subr.bf16.mxu0 0
    %2347 = vmatpush1.bf16.msra.mxu0 0
    %2348 = vmatprep.subr.bf16.mxu0 0
    %2349 = vmatpush1.bf16.msra.mxu0 0
    %2350 = vmatprep.subr.bf16.mxu0 0
    %2351 = vmatpush1.bf16.msra.mxu0 0
    %2352 = vmatprep.subr.bf16.mxu0 0
    %2353 = vmatpush1.bf16.msra.mxu0 0
    %2354 = vmatprep.subr.bf16.mxu0 0
    %2355 = vmatpush1.bf16.msra.mxu0 0
    %2356 = vmatprep.subr.bf16.mxu0 0
    %2357 = vmatpush1.bf16.msra.mxu0 0
    %2358 = vmatprep.subr.bf16.mxu0 0
    %2359 = vmatpush1.bf16.msra.mxu0 0
    %2360 = vmatprep.subr.bf16.mxu0 0
    %2361 = vmatpush1.bf16.msra.mxu0 0
    %2362 = vmatprep.subr.bf16.mxu0 0
    %2363 = vmatpush1.bf16.msra.mxu0 0
    %2364 = vmatprep.subr.bf16.mxu0 0
    %2365 = vmatpush1.bf16.msra.mxu0 0
    %2366 = vmatprep.subr.bf16.mxu0 0
    %2367 = vmatpush1.bf16.msra.mxu0 0
    %2368 = vmatprep.subr.bf16.mxu0 0
    %2369 = vmatpush1.bf16.msra.mxu0 0
    %2370 = vmatprep.subr.bf16.mxu0 0
    %2371 = vmatpush1.bf16.msra.mxu0 0
    %2372 = vmatprep.subr.bf16.mxu0 0
    %2373 = vmatpush1.bf16.msra.mxu0 0
    %2374 = vmatprep.subr.bf16.mxu0 0
    %2375 = vmatpush1.bf16.msra.mxu0 0
    %2376 = vmatprep.mubr.bf16.mxu0 0
    %2377 = vmatmul.mubr.bf16.gmra.mrb[0].mxu0 %v2342
    %v2378 = vpop.f32.mrb[0].mxu0
    %v2379 = vadd.f32 0.0, %v2378
    %v2380 = vpop.f32.mrb[0].mxu0
    %v2381 = vpop.f32.mrb[0].mxu0
    %v2382 = vpop.f32.mrb[0].mxu0
    %2383 = vdwg.mxu0
    %v2384 = vadd.f32 %v2329, %v2379
    %s2385 = scalar_lea.vmem %s3, 144
    %v2386 = vld [vmem:[%s2385] sm:$0xf]
    %v2387 = vld [vmem:[%s2385 + $0x4] sm:$0xf]
    %v2390 = vunpack.c.l.b16 %v2386
    %v2391 = vunpack.c.l.b16 %v2387
    %v2392 = vpack.c.b16 %v2391, %v2390
    %v2395 = vsel %vm1428, %v1411, 0
    %2397 = vmatprep.subr.bf16.mxu0 0
    %2398 = vmatpush1.bf16.msra.mxu0 %v2392
    %2399 = vmatprep.subr.bf16.mxu0 0
    %2400 = vmatpush1.bf16.msra.mxu0 0
    %2401 = vmatprep.subr.bf16.mxu0 0
    %2402 = vmatpush1.bf16.msra.mxu0 0
    %2403 = vmatprep.subr.bf16.mxu0 0
    %2404 = vmatpush1.bf16.msra.mxu0 0
    %2405 = vmatprep.subr.bf16.mxu0 0
    %2406 = vmatpush1.bf16.msra.mxu0 0
    %2407 = vmatprep.subr.bf16.mxu0 0
    %2408 = vmatpush1.bf16.msra.mxu0 0
    %2409 = vmatprep.subr.bf16.mxu0 0
    %2410 = vmatpush1.bf16.msra.mxu0 0
    %2411 = vmatprep.subr.bf16.mxu0 0
    %2412 = vmatpush1.bf16.msra.mxu0 0
    %2413 = vmatprep.subr.bf16.mxu0 0
    %2414 = vmatpush1.bf16.msra.mxu0 0
    %2415 = vmatprep.subr.bf16.mxu0 0
    %2416 = vmatpush1.bf16.msra.mxu0 0
    %2417 = vmatprep.subr.bf16.mxu0 0
    %2418 = vmatpush1.bf16.msra.mxu0 0
    %2419 = vmatprep.subr.bf16.mxu0 0
    %2420 = vmatpush1.bf16.msra.mxu0 0
    %2421 = vmatprep.subr.bf16.mxu0 0
    %2422 = vmatpush1.bf16.msra.mxu0 0
    %2423 = vmatprep.subr.bf16.mxu0 0
    %2424 = vmatpush1.bf16.msra.mxu0 0
    %2425 = vmatprep.subr.bf16.mxu0 0
    %2426 = vmatpush1.bf16.msra.mxu0 0
    %2427 = vmatprep.subr.bf16.mxu0 0
    %2428 = vmatpush1.bf16.msra.mxu0 0
    %2429 = vmatprep.mubr.bf16.mxu0 0
    %2430 = vmatmul.mubr.bf16.gmra.mrb[0].mxu0 %v2395
    %v2431 = vpop.f32.mrb[0].mxu0
    %v2432 = vadd.f32 0.0, %v2431
    %v2433 = vpop.f32.mrb[0].mxu0
    %v2434 = vpop.f32.mrb[0].mxu0
    %v2435 = vpop.f32.mrb[0].mxu0
    %2436 = vdwg.mxu0
    %v2437 = vadd.f32 %v2384, %v2432
    %s2438 = scalar_lea.vmem %s3, 152
    %v2439 = vld [vmem:[%s2438] sm:$0xf]
    %v2440 = vld [vmem:[%s2438 + $0x4] sm:$0xf]
    %v2442 = vrot.slane %v1411, 4
    %v2445 = vunpack.c.l.b16 %v2439
    %v2446 = vunpack.c.l.b16 %v2440
    %v2447 = vpack.c.b16 %v2446, %v2445
    %v2450 = vsel %vm1428, %v2442, 0
    %2452 = vmatprep.subr.bf16.mxu0 0
    %2453 = vmatpush1.bf16.msra.mxu0 %v2447
    %2454 = vmatprep.subr.bf16.mxu0 0
    %2455 = vmatpush1.bf16.msra.mxu0 0
    %2456 = vmatprep.subr.bf16.mxu0 0
    %2457 = vmatpush1.bf16.msra.mxu0 0
    %2458 = vmatprep.subr.bf16.mxu0 0
    %2459 = vmatpush1.bf16.msra.mxu0 0
    %2460 = vmatprep.subr.bf16.mxu0 0
    %2461 = vmatpush1.bf16.msra.mxu0 0
    %2462 = vmatprep.subr.bf16.mxu0 0
    %2463 = vmatpush1.bf16.msra.mxu0 0
    %2464 = vmatprep.subr.bf16.mxu0 0
    %2465 = vmatpush1.bf16.msra.mxu0 0
    %2466 = vmatprep.subr.bf16.mxu0 0
    %2467 = vmatpush1.bf16.msra.mxu0 0
    %2468 = vmatprep.subr.bf16.mxu0 0
    %2469 = vmatpush1.bf16.msra.mxu0 0
    %2470 = vmatprep.subr.bf16.mxu0 0
    %2471 = vmatpush1.bf16.msra.mxu0 0
    %2472 = vmatprep.subr.bf16.mxu0 0
    %2473 = vmatpush1.bf16.msra.mxu0 0
    %2474 = vmatprep.subr.bf16.mxu0 0
    %2475 = vmatpush1.bf16.msra.mxu0 0
    %2476 = vmatprep.subr.bf16.mxu0 0
    %2477 = vmatpush1.bf16.msra.mxu0 0
    %2478 = vmatprep.subr.bf16.mxu0 0
    %2479 = vmatpush1.bf16.msra.mxu0 0
    %2480 = vmatprep.subr.bf16.mxu0 0
    %2481 = vmatpush1.bf16.msra.mxu0 0
    %2482 = vmatprep.subr.bf16.mxu0 0
    %2483 = vmatpush1.bf16.msra.mxu0 0
    %2484 = vmatprep.mubr.bf16.mxu0 0
    %2485 = vmatmul.mubr.bf16.gmra.mrb[0].mxu0 %v2450
    %v2486 = vpop.f32.mrb[0].mxu0
    %v2487 = vadd.f32 0.0, %v2486
    %v2488 = vpop.f32.mrb[0].mxu0
    %v2489 = vpop.f32.mrb[0].mxu0
    %v2490 = vpop.f32.mrb[0].mxu0
    %2491 = vdwg.mxu0
    %v2492 = vadd.f32 %v2437, %v2487
    %s2493 = scalar_lea.vmem %s3, 160
    %v2494 = vld [vmem:[%s2493] sm:$0xf]
    %v2495 = vld [vmem:[%s2493 + $0x4] sm:$0xf]
    %v2498 = vunpack.c.l.b16 %v2494
    %v2499 = vunpack.c.l.b16 %v2495
    %v2500 = vpack.c.b16 %v2499, %v2498
    %v2503 = vsel %vm1428, %v1412, 0
    %2505 = vmatprep.subr.bf16.mxu0 0
    %2506 = vmatpush1.bf16.msra.mxu0 %v2500
    %2507 = vmatprep.subr.bf16.mxu0 0
    %2508 = vmatpush1.bf16.msra.mxu0 0
    %2509 = vmatprep.subr.bf16.mxu0 0
    %2510 = vmatpush1.bf16.msra.mxu0 0
    %2511 = vmatprep.subr.bf16.mxu0 0
    %2512 = vmatpush1.bf16.msra.mxu0 0
    %2513 = vmatprep.subr.bf16.mxu0 0
    %2514 = vmatpush1.bf16.msra.mxu0 0
    %2515 = vmatprep.subr.bf16.mxu0 0
    %2516 = vmatpush1.bf16.msra.mxu0 0
    %2517 = vmatprep.subr.bf16.mxu0 0
    %2518 = vmatpush1.bf16.msra.mxu0 0
    %2519 = vmatprep.subr.bf16.mxu0 0
    %2520 = vmatpush1.bf16.msra.mxu0 0
    %2521 = vmatprep.subr.bf16.mxu0 0
    %2522 = vmatpush1.bf16.msra.mxu0 0
    %2523 = vmatprep.subr.bf16.mxu0 0
    %2524 = vmatpush1.bf16.msra.mxu0 0
    %2525 = vmatprep.subr.bf16.mxu0 0
    %2526 = vmatpush1.bf16.msra.mxu0 0
    %2527 = vmatprep.subr.bf16.mxu0 0
    %2528 = vmatpush1.bf16.msra.mxu0 0
    %2529 = vmatprep.subr.bf16.mxu0 0
    %2530 = vmatpush1.bf16.msra.mxu0 0
    %2531 = vmatprep.subr.bf16.mxu0 0
    %2532 = vmatpush1.bf16.msra.mxu0 0
    %2533 = vmatprep.subr.bf16.mxu0 0
    %2534 = vmatpush1.bf16.msra.mxu0 0
    %2535 = vmatprep.subr.bf16.mxu0 0
    %2536 = vmatpush1.bf16.msra.mxu0 0
    %2537 = vmatprep.mubr.bf16.mxu0 0
    %2538 = vmatmul.mubr.bf16.gmra.mrb[0].mxu0 %v2503
    %v2539 = vpop.f32.mrb[0].mxu0
    %v2540 = vadd.f32 0.0, %v2539
    %v2541 = vpop.f32.mrb[0].mxu0
    %v2542 = vpop.f32.mrb[0].mxu0
    %v2543 = vpop.f32.mrb[0].mxu0
    %2544 = vdwg.mxu0
    %v2545 = vadd.f32 %v2492, %v2540
    %s2546 = scalar_lea.vmem %s3, 168
    %v2547 = vld [vmem:[%s2546] sm:$0xf]
    %v2548 = vld [vmem:[%s2546 + $0x4] sm:$0xf]
    %v2550 = vrot.slane %v1412, 4
    %v2553 = vunpack.c.l.b16 %v2547
    %v2554 = vunpack.c.l.b16 %v2548
    %v2555 = vpack.c.b16 %v2554, %v2553
    %v2558 = vsel %vm1428, %v2550, 0
    %2560 = vmatprep.subr.bf16.mxu0 0
    %2561 = vmatpush1.bf16.msra.mxu0 %v2555
    %2562 = vmatprep.subr.bf16.mxu0 0
    %2563 = vmatpush1.bf16.msra.mxu0 0
    %2564 = vmatprep.subr.bf16.mxu0 0
    %2565 = vmatpush1.bf16.msra.mxu0 0
    %2566 = vmatprep.subr.bf16.mxu0 0
    %2567 = vmatpush1.bf16.msra.mxu0 0
    %2568 = vmatprep.subr.bf16.mxu0 0
    %2569 = vmatpush1.bf16.msra.mxu0 0
    %2570 = vmatprep.subr.bf16.mxu0 0
    %2571 = vmatpush1.bf16.msra.mxu0 0
    %2572 = vmatprep.subr.bf16.mxu0 0
    %2573 = vmatpush1.bf16.msra.mxu0 0
    %2574 = vmatprep.subr.bf16.mxu0 0
    %2575 = vmatpush1.bf16.msra.mxu0 0
    %2576 = vmatprep.subr.bf16.mxu0 0
    %2577 = vmatpush1.bf16.msra.mxu0 0
    %2578 = vmatprep.subr.bf16.mxu0 0
    %2579 = vmatpush1.bf16.msra.mxu0 0
    %2580 = vmatprep.subr.bf16.mxu0 0
    %2581 = vmatpush1.bf16.msra.mxu0 0
    %2582 = vmatprep.subr.bf16.mxu0 0
    %2583 = vmatpush1.bf16.msra.mxu0 0
    %2584 = vmatprep.subr.bf16.mxu0 0
    %2585 = vmatpush1.bf16.msra.mxu0 0
    %2586 = vmatprep.subr.bf16.mxu0 0
    %2587 = vmatpush1.bf16.msra.mxu0 0
    %2588 = vmatprep.subr.bf16.mxu0 0
    %2589 = vmatpush1.bf16.msra.mxu0 0
    %2590 = vmatprep.subr.bf16.mxu0 0
    %2591 = vmatpush1.bf16.msra.mxu0 0
    %2592 = vmatprep.mubr.bf16.mxu0 0
    %2593 = vmatmul.mubr.bf16.gmra.mrb[0].mxu0 %v2558
    %v2594 = vpop.f32.mrb[0].mxu0
    %v2595 = vadd.f32 0.0, %v2594
    %v2596 = vpop.f32.mrb[0].mxu0
    %v2597 = vpop.f32.mrb[0].mxu0
    %v2598 = vpop.f32.mrb[0].mxu0
    %2599 = vdwg.mxu0
    %v2600 = vadd.f32 %v2545, %v2595
    %s2601 = scalar_lea.vmem %s3, 176
    %v2602 = vld [vmem:[%s2601] sm:$0xf]
    %v2603 = vld [vmem:[%s2601 + $0x4] sm:$0xf]
    %v2606 = vunpack.c.l.b16 %v2602
    %v2607 = vunpack.c.l.b16 %v2603
    %v2608 = vpack.c.b16 %v2607, %v2606
    %v2611 = vsel %vm1428, %v1413, 0
    %2613 = vmatprep.subr.bf16.mxu0 0
    %2614 = vmatpush1.bf16.msra.mxu0 %v2608
    %2615 = vmatprep.subr.bf16.mxu0 0
    %2616 = vmatpush1.bf16.msra.mxu0 0
    %2617 = vmatprep.subr.bf16.mxu0 0
    %2618 = vmatpush1.bf16.msra.mxu0 0
    %2619 = vmatprep.subr.bf16.mxu0 0
    %2620 = vmatpush1.bf16.msra.mxu0 0
    %2621 = vmatprep.subr.bf16.mxu0 0
    %2622 = vmatpush1.bf16.msra.mxu0 0
    %2623 = vmatprep.subr.bf16.mxu0 0
    %2624 = vmatpush1.bf16.msra.mxu0 0
    %2625 = vmatprep.subr.bf16.mxu0 0
    %2626 = vmatpush1.bf16.msra.mxu0 0
    %2627 = vmatprep.subr.bf16.mxu0 0
    %2628 = vmatpush1.bf16.msra.mxu0 0
    %2629 = vmatprep.subr.bf16.mxu0 0
    %2630 = vmatpush1.bf16.msra.mxu0 0
    %2631 = vmatprep.subr.bf16.mxu0 0
    %2632 = vmatpush1.bf16.msra.mxu0 0
    %2633 = vmatprep.subr.bf16.mxu0 0
    %2634 = vmatpush1.bf16.msra.mxu0 0
    %2635 = vmatprep.subr.bf16.mxu0 0
    %2636 = vmatpush1.bf16.msra.mxu0 0
    %2637 = vmatprep.subr.bf16.mxu0 0
    %2638 = vmatpush1.bf16.msra.mxu0 0
    %2639 = vmatprep.subr.bf16.mxu0 0
    %2640 = vmatpush1.bf16.msra.mxu0 0
    %2641 = vmatprep.subr.bf16.mxu0 0
    %2642 = vmatpush1.bf16.msra.mxu0 0
    %2643 = vmatprep.subr.bf16.mxu0 0
    %2644 = vmatpush1.bf16.msra.mxu0 0
    %2645 = vmatprep.mubr.bf16.mxu0 0
    %2646 = vmatmul.mubr.bf16.gmra.mrb[0].mxu0 %v2611
    %v2647 = vpop.f32.mrb[0].mxu0
    %v2648 = vadd.f32 0.0, %v2647
    %v2649 = vpop.f32.mrb[0].mxu0
    %v2650 = vpop.f32.mrb[0].mxu0
    %v2651 = vpop.f32.mrb[0].mxu0
    %2652 = vdwg.mxu0
    %v2653 = vadd.f32 %v2600, %v2648
    %s2654 = scalar_lea.vmem %s3, 184
    %v2655 = vld [vmem:[%s2654] sm:$0xf]
    %v2656 = vld [vmem:[%s2654 + $0x4] sm:$0xf]
    %v2658 = vrot.slane %v1413, 4
    %v2661 = vunpack.c.l.b16 %v2655
    %v2662 = vunpack.c.l.b16 %v2656
    %v2663 = vpack.c.b16 %v2662, %v2661
    %v2666 = vsel %vm1428, %v2658, 0
    %2668 = vmatprep.subr.bf16.mxu0 0
    %2669 = vmatpush1.bf16.msra.mxu0 %v2663
    %2670 = vmatprep.subr.bf16.mxu0 0
    %2671 = vmatpush1.bf16.msra.mxu0 0
    %2672 = vmatprep.subr.bf16.mxu0 0
    %2673 = vmatpush1.bf16.msra.mxu0 0
    %2674 = vmatprep.subr.bf16.mxu0 0
    %2675 = vmatpush1.bf16.msra.mxu0 0
    %2676 = vmatprep.subr.bf16.mxu0 0
    %2677 = vmatpush1.bf16.msra.mxu0 0
    %2678 = vmatprep.subr.bf16.mxu0 0
    %2679 = vmatpush1.bf16.msra.mxu0 0
    %2680 = vmatprep.subr.bf16.mxu0 0
    %2681 = vmatpush1.bf16.msra.mxu0 0
    %2682 = vmatprep.subr.bf16.mxu0 0
    %2683 = vmatpush1.bf16.msra.mxu0 0
    %2684 = vmatprep.subr.bf16.mxu0 0
    %2685 = vmatpush1.bf16.msra.mxu0 0
    %2686 = vmatprep.subr.bf16.mxu0 0
    %2687 = vmatpush1.bf16.msra.mxu0 0
    %2688 = vmatprep.subr.bf16.mxu0 0
    %2689 = vmatpush1.bf16.msra.mxu0 0
    %2690 = vmatprep.subr.bf16.mxu0 0
    %2691 = vmatpush1.bf16.msra.mxu0 0
    %2692 = vmatprep.subr.bf16.mxu0 0
    %2693 = vmatpush1.bf16.msra.mxu0 0
    %2694 = vmatprep.subr.bf16.mxu0 0
    %2695 = vmatpush1.bf16.msra.mxu0 0
    %2696 = vmatprep.subr.bf16.mxu0 0
    %2697 = vmatpush1.bf16.msra.mxu0 0
    %2698 = vmatprep.subr.bf16.mxu0 0
    %2699 = vmatpush1.bf16.msra.mxu0 0
    %2700 = vmatprep.mubr.bf16.mxu0 0
    %2701 = vmatmul.mubr.bf16.gmra.mrb[0].mxu0 %v2666
    %v2702 = vpop.f32.mrb[0].mxu0
    %v2703 = vadd.f32 0.0, %v2702
    %v2704 = vpop.f32.mrb[0].mxu0
    %v2705 = vpop.f32.mrb[0].mxu0
    %v2706 = vpop.f32.mrb[0].mxu0
    %2707 = vdwg.mxu0
    %v2708 = vadd.f32 %v2653, %v2703
    %s2709 = scalar_lea.vmem %s3, 192
    %v2710 = vld [vmem:[%s2709] sm:$0xf]
    %v2711 = vld [vmem:[%s2709 + $0x4] sm:$0xf]
    %v2714 = vunpack.c.l.b16 %v2710
    %v2715 = vunpack.c.l.b16 %v2711
    %v2716 = vpack.c.b16 %v2715, %v2714
    %v2719 = vsel %vm1428, %v1414, 0
    %2721 = vmatprep.subr.bf16.mxu0 0
    %2722 = vmatpush1.bf16.msra.mxu0 %v2716
    %2723 = vmatprep.subr.bf16.mxu0 0
    %2724 = vmatpush1.bf16.msra.mxu0 0
    %2725 = vmatprep.subr.bf16.mxu0 0
    %2726 = vmatpush1.bf16.msra.mxu0 0
    %2727 = vmatprep.subr.bf16.mxu0 0
    %2728 = vmatpush1.bf16.msra.mxu0 0
    %2729 = vmatprep.subr.bf16.mxu0 0
    %2730 = vmatpush1.bf16.msra.mxu0 0
    %2731 = vmatprep.subr.bf16.mxu0 0
    %2732 = vmatpush1.bf16.msra.mxu0 0
    %2733 = vmatprep.subr.bf16.mxu0 0
    %2734 = vmatpush1.bf16.msra.mxu0 0
    %2735 = vmatprep.subr.bf16.mxu0 0
    %2736 = vmatpush1.bf16.msra.mxu0 0
    %2737 = vmatprep.subr.bf16.mxu0 0
    %2738 = vmatpush1.bf16.msra.mxu0 0
    %2739 = vmatprep.subr.bf16.mxu0 0
    %2740 = vmatpush1.bf16.msra.mxu0 0
    %2741 = vmatprep.subr.bf16.mxu0 0
    %2742 = vmatpush1.bf16.msra.mxu0 0
    %2743 = vmatprep.subr.bf16.mxu0 0
    %2744 = vmatpush1.bf16.msra.mxu0 0
    %2745 = vmatprep.subr.bf16.mxu0 0
    %2746 = vmatpush1.bf16.msra.mxu0 0
    %2747 = vmatprep.subr.bf16.mxu0 0
    %2748 = vmatpush1.bf16.msra.mxu0 0
    %2749 = vmatprep.subr.bf16.mxu0 0
    %2750 = vmatpush1.bf16.msra.mxu0 0
    %2751 = vmatprep.subr.bf16.mxu0 0
    %2752 = vmatpush1.bf16.msra.mxu0 0
    %2753 = vmatprep.mubr.bf16.mxu0 0
    %2754 = vmatmul.mubr.bf16.gmra.mrb[0].mxu0 %v2719
    %v2755 = vpop.f32.mrb[0].mxu0
    %v2756 = vadd.f32 0.0, %v2755
    %v2757 = vpop.f32.mrb[0].mxu0
    %v2758 = vpop.f32.mrb[0].mxu0
    %v2759 = vpop.f32.mrb[0].mxu0
    %2760 = vdwg.mxu0
    %v2761 = vadd.f32 %v2708, %v2756
    %v2762 = vld [vmem:[%s4] sm:$0x1]
    %v2764 = vlaneseq
    %v2765 = vshrl.u32 %v2764, 7
    %v2766 = vsub.s32 0, %v2765
    %v2767 = vrot.slane %v2762, %v2766
    %v2769 = vadd.f32 %v2761, %v2767
    %v2770 = vtanh.pop %v2769
    %v2771 = vpack.c.bf16 %v2770, %v2770
    %v2772 = vld [vmem:[%s5] sm:$0xf]
    %v2773 = vld [vmem:[%s5 + $0x4] sm:$0xf]
    %v2774 = vld [vmem:[%s5 + $0x8] sm:$0xf]
    %v2775 = vld [vmem:[%s5 + $0xc] sm:$0xf]
    %v2776 = vld [vmem:[%s5 + $0x10] sm:$0xf]
    %v2777 = vld [vmem:[%s5 + $0x14] sm:$0xf]
    %v2778 = vld [vmem:[%s5 + $0x18] sm:$0xf]
    %v2779 = vld [vmem:[%s5 + $0x1c] sm:$0xf]
    %v2780 = vld [vmem:[%s5 + $0x20] sm:$0xf]
    %v2781 = vld [vmem:[%s5 + $0x24] sm:$0xf]
    %v2782 = vld [vmem:[%s5 + $0x28] sm:$0xf]
    %v2783 = vld [vmem:[%s5 + $0x2c] sm:$0xf]
    %v2784 = vld [vmem:[%s5 + $0x30] sm:$0xf]
    %v2785 = vld [vmem:[%s5 + $0x34] sm:$0xf]
    %v2786 = vld [vmem:[%s5 + $0x38] sm:$0xf]
    %v2787 = vld [vmem:[%s5 + $0x3c] sm:$0xf]
    %v2788 = vld [vmem:[%s6] sm:$0x1]
    %v2790 = vlaneseq
    %v2791 = vshrl.u32 %v2790, 7
    %v2792 = vsub.s32 0, %v2791
    %v2793 = vrot.slane %v2788, %v2792
    %v2811 = vunpack.c.l.b16 %v2772
    %v2812 = vunpack.c.l.b16 %v2773
    %v2813 = vunpack.c.l.b16 %v2774
    %v2814 = vunpack.c.l.b16 %v2775
    %v2815 = vunpack.c.l.b16 %v2776
    %v2816 = vunpack.c.l.b16 %v2777
    %v2817 = vunpack.c.l.b16 %v2778
    %v2818 = vunpack.c.l.b16 %v2779
    %v2819 = vunpack.c.l.b16 %v2780
    %v2820 = vunpack.c.l.b16 %v2781
    %v2821 = vunpack.c.l.b16 %v2782
    %v2822 = vunpack.c.l.b16 %v2783
    %v2823 = vunpack.c.l.b16 %v2784
    %v2824 = vunpack.c.l.b16 %v2785
    %v2825 = vunpack.c.l.b16 %v2786
    %v2826 = vunpack.c.l.b16 %v2787
    %v2827 = vpack.c.b16 %v2812, %v2811
    %v2828 = vpack.c.b16 %v2814, %v2813
    %v2829 = vpack.c.b16 %v2816, %v2815
    %v2830 = vpack.c.b16 %v2818, %v2817
    %v2831 = vpack.c.b16 %v2820, %v2819
    %v2832 = vpack.c.b16 %v2822, %v2821
    %v2833 = vpack.c.b16 %v2824, %v2823
    %v2834 = vpack.c.b16 %v2826, %v2825
    %2843 = vmatprep.subr.bf16.mxu0 0
    %2844 = vmatpush1.bf16.msra.mxu0 %v2827
    %2845 = vmatprep.subr.bf16.mxu0 0
    %2846 = vmatpush1.bf16.msra.mxu0 %v2828
    %2847 = vmatprep.subr.bf16.mxu0 0
    %2848 = vmatpush1.bf16.msra.mxu0 %v2829
    %2849 = vmatprep.subr.bf16.mxu0 0
    %2850 = vmatpush1.bf16.msra.mxu0 %v2830
    %2851 = vmatprep.subr.bf16.mxu0 0
    %2852 = vmatpush1.bf16.msra.mxu0 %v2831
    %2853 = vmatprep.subr.bf16.mxu0 0
    %2854 = vmatpush1.bf16.msra.mxu0 %v2832
    %2855 = vmatprep.subr.bf16.mxu0 0
    %2856 = vmatpush1.bf16.msra.mxu0 %v2833
    %2857 = vmatprep.subr.bf16.mxu0 0
    %2858 = vmatpush1.bf16.msra.mxu0 %v2834
    %2859 = vmatprep.subr.bf16.mxu0 0
    %2860 = vmatpush1.bf16.msra.mxu0 0
    %2861 = vmatprep.subr.bf16.mxu0 0
    %2862 = vmatpush1.bf16.msra.mxu0 0
    %2863 = vmatprep.subr.bf16.mxu0 0
    %2864 = vmatpush1.bf16.msra.mxu0 0
    %2865 = vmatprep.subr.bf16.mxu0 0
    %2866 = vmatpush1.bf16.msra.mxu0 0
    %2867 = vmatprep.subr.bf16.mxu0 0
    %2868 = vmatpush1.bf16.msra.mxu0 0
    %2869 = vmatprep.subr.bf16.mxu0 0
    %2870 = vmatpush1.bf16.msra.mxu0 0
    %2871 = vmatprep.subr.bf16.mxu0 0
    %2872 = vmatpush1.bf16.msra.mxu0 0
    %2873 = vmatprep.subr.bf16.mxu0 0
    %2874 = vmatpush1.bf16.msra.mxu0 0
    %2875 = vmatprep.mubr.bf16.mxu0 0
    %2876 = vmatmul.mubr.bf16.gmra.mrb[0].mxu0 %v2771
    %v2877 = vpop.f32.mrb[0].mxu0
    %v2878 = vadd.f32 %v2793, %v2877
    %v2879 = vpop.f32.mrb[0].mxu0
    %v2880 = vpop.f32.mrb[0].mxu0
    %v2881 = vpop.f32.mrb[0].mxu0
    %2882 = vdwg.mxu0
    %v2883 = vtanh.pop %v2878
    %v2884 = vpack.c.bf16 %v2883, %v2883
    %v2885 = vld [vmem:[%s7] sm:$0xf]
    %v2886 = vld [vmem:[%s7 + $0x4] sm:$0xf]
    %v2887 = vld [vmem:[%s7 + $0x8] sm:$0xf]
    %v2888 = vld [vmem:[%s7 + $0xc] sm:$0xf]
    %v2889 = vld [vmem:[%s7 + $0x10] sm:$0xf]
    %v2890 = vld [vmem:[%s7 + $0x14] sm:$0xf]
    %v2891 = vld [vmem:[%s7 + $0x18] sm:$0xf]
    %v2892 = vld [vmem:[%s7 + $0x1c] sm:$0xf]
    %v2893 = vld [vmem:[%s7 + $0x20] sm:$0xf]
    %v2894 = vld [vmem:[%s7 + $0x24] sm:$0xf]
    %v2895 = vld [vmem:[%s7 + $0x28] sm:$0xf]
    %v2896 = vld [vmem:[%s7 + $0x2c] sm:$0xf]
    %v2897 = vld [vmem:[%s7 + $0x30] sm:$0xf]
    %v2898 = vld [vmem:[%s7 + $0x34] sm:$0xf]
    %v2899 = vld [vmem:[%s7 + $0x38] sm:$0xf]
    %v2900 = vld [vmem:[%s7 + $0x3c] sm:$0xf]
    %v2901 = vld [vmem:[%s8] sm:$0x1]
    %v2903 = vlaneseq
    %v2904 = vshrl.u32 %v2903, 7
    %v2905 = vsub.s32 0, %v2904
    %v2906 = vrot.slane %v2901, %v2905
    %v2924 = vunpack.c.l.b16 %v2885
    %v2925 = vunpack.c.l.b16 %v2886
    %v2926 = vunpack.c.l.b16 %v2887
    %v2927 = vunpack.c.l.b16 %v2888
    %v2928 = vunpack.c.l.b16 %v2889
    %v2929 = vunpack.c.l.b16 %v2890
    %v2930 = vunpack.c.l.b16 %v2891
    %v2931 = vunpack.c.l.b16 %v2892
    %v2932 = vunpack.c.l.b16 %v2893
    %v2933 = vunpack.c.l.b16 %v2894
    %v2934 = vunpack.c.l.b16 %v2895
    %v2935 = vunpack.c.l.b16 %v2896
    %v2936 = vunpack.c.l.b16 %v2897
    %v2937 = vunpack.c.l.b16 %v2898
    %v2938 = vunpack.c.l.b16 %v2899
    %v2939 = vunpack.c.l.b16 %v2900
    %v2940 = vpack.c.b16 %v2925, %v2924
    %v2941 = vpack.c.b16 %v2927, %v2926
    %v2942 = vpack.c.b16 %v2929, %v2928
    %v2943 = vpack.c.b16 %v2931, %v2930
    %v2944 = vpack.c.b16 %v2933, %v2932
    %v2945 = vpack.c.b16 %v2935, %v2934
    %v2946 = vpack.c.b16 %v2937, %v2936
    %v2947 = vpack.c.b16 %v2939, %v2938
    %2956 = vmatprep.subr.bf16.mxu0 0
    %2957 = vmatpush1.bf16.msra.mxu0 %v2940
    %2958 = vmatprep.subr.bf16.mxu0 0
    %2959 = vmatpush1.bf16.msra.mxu0 %v2941
    %2960 = vmatprep.subr.bf16.mxu0 0
    %2961 = vmatpush1.bf16.msra.mxu0 %v2942
    %2962 = vmatprep.subr.bf16.mxu0 0
    %2963 = vmatpush1.bf16.msra.mxu0 %v2943
    %2964 = vmatprep.subr.bf16.mxu0 0
    %2965 = vmatpush1.bf16.msra.mxu0 %v2944
    %2966 = vmatprep.subr.bf16.mxu0 0
    %2967 = vmatpush1.bf16.msra.mxu0 %v2945
    %2968 = vmatprep.subr.bf16.mxu0 0
    %2969 = vmatpush1.bf16.msra.mxu0 %v2946
    %2970 = vmatprep.subr.bf16.mxu0 0
    %2971 = vmatpush1.bf16.msra.mxu0 %v2947
    %2972 = vmatprep.subr.bf16.mxu0 0
    %2973 = vmatpush1.bf16.msra.mxu0 0
    %2974 = vmatprep.subr.bf16.mxu0 0
    %2975 = vmatpush1.bf16.msra.mxu0 0
    %2976 = vmatprep.subr.bf16.mxu0 0
    %2977 = vmatpush1.bf16.msra.mxu0 0
    %2978 = vmatprep.subr.bf16.mxu0 0
    %2979 = vmatpush1.bf16.msra.mxu0 0
    %2980 = vmatprep.subr.bf16.mxu0 0
    %2981 = vmatpush1.bf16.msra.mxu0 0
    %2982 = vmatprep.subr.bf16.mxu0 0
    %2983 = vmatpush1.bf16.msra.mxu0 0
    %2984 = vmatprep.subr.bf16.mxu0 0
    %2985 = vmatpush1.bf16.msra.mxu0 0
    %2986 = vmatprep.subr.bf16.mxu0 0
    %2987 = vmatpush1.bf16.msra.mxu0 0
    %2988 = vmatprep.mubr.bf16.mxu0 0
    %2989 = vmatmul.mubr.bf16.gmra.mrb[0].mxu0 %v2884
    %v2990 = vpop.f32.mrb[0].mxu0
    %v2991 = vadd.f32 %v2906, %v2990
    %v2992 = vpop.f32.mrb[0].mxu0
    %v2993 = vpop.f32.mrb[0].mxu0
    %v2994 = vpop.f32.mrb[0].mxu0
    %2995 = vdwg.mxu0
    %2996 = vst [vmem:[#allocation2] sm:$0x3] %v2991
    // Predicated region
    $region38: #{lenet_forward.3} parent=1 // pred_check
      _
    $region39: #{lenet_forward.3} parent=1 // pred_check_branch
      %2998 = sbr.rel (0) target = $region41
    $region40: #{lenet_forward.3} parent=1 // pred_region
      %s3000 = ssub.s32 32, 32
      %3001 = vsyncadd [#allocation3], %s3000
      %s3003 = sshll.u32 [#allocation2], 4
      %s3004 = int_to_ptr.vmem [resolvable:$true] %s3003
      %3006 = dma.vmem_to_hbm [thread:$0]  %s3004, 32, %s9, [#allocation3]
    $region41: #{lenet_forward.3} parent=1 // pred_fallthru
      _
    // Predicated region
    $region42: #{lenet_forward.3} parent=1 // pred_check
      _
    $region43: #{lenet_forward.3} parent=1 // pred_check_branch
      %3008 = sbr.rel (0) target = $region45
    $region44: #{lenet_forward.3} parent=1 // pred_region
      %3009 = dma.done [#allocation3], 32
    $region45: #{lenet_forward.3} parent=1 // pred_fallthru
      _
    %3010 = vsyncpa [#allocation3], 1

</llo_original>
